<compile_context>
chip_gen: v7x
topology: tpu7x:2x2x1
jax: 0.10.0
libtpu: 0.0.40
codegen_flags: <defaults>
</compile_context>

<pallas_src>
import functools
import math

import jax
import jax.numpy as jnp
from jax.experimental import pallas as pl
from jax.experimental.pallas import tpu as pltpu

_VMEM = pl.BlockSpec(memory_space=pltpu.MemorySpace.VMEM)

# --------------------------------------------------------------------------
# Small model config (same structure as Sequencer2d, scaled down)
# --------------------------------------------------------------------------
CFG = dict(
    num_classes=10,
    in_chans=3,
    img_size=16,
    layers=(1, 1),
    patch_sizes=(4, 2),
    embed_dims=(16, 32),
    hidden_sizes=(8, 16),
    mlp_ratios=(3.0, 3.0),
    # bidirectional=True, union='cat', with_fc=True (as in the reference)
)

_EPS = 1e-6
_BLK_NARGS = 11


# --------------------------------------------------------------------------
# In-kernel helpers
# --------------------------------------------------------------------------
def _layer_norm(v, gb_ref, eps):
    """v: (M, C) f32; gb_ref: (2, C) ref holding [gamma; beta]."""
    g = gb_ref[0:1, :].astype(jnp.float32)
    b = gb_ref[1:2, :].astype(jnp.float32)
    mu = jnp.mean(v, axis=-1, keepdims=True)
    var = jnp.mean(jnp.square(v - mu), axis=-1, keepdims=True)
    return (v - mu) * jax.lax.rsqrt(var + eps) * g + b


def _seq2d_block(x, blk, *, B, HH, WW, C, HS, eps):
    """One Sequencer2dBlock on an (M, C) f32 value; token order = (b, hh, ww)."""
    (ln1_ref, wih_ref, bih_ref, whh_ref, fcw_ref, fcb_ref,
     ln2_ref, fc1w_ref, fc1b_ref, fc2w_ref, fc2b_ref) = blk
    f32 = jnp.float32
    M = B * HH * WW
    G = 4 * HS                        # per-direction gate width, columns [i, f, o, g]

    # ---- token mixing: LN1 + hoisted LSTM input projection (4 dirs, all steps)
    y = _layer_norm(x, ln1_ref, eps)
    gproj = jnp.dot(y, wih_ref[...].astype(f32), preferred_element_type=f32)
    gproj = gproj + bih_ref[...].astype(f32)               # (M, 16*HS), b_ih+b_hh folded
    g4 = gproj.reshape(B, HH, WW, 16 * HS)

    whh_v = whh_ref[0].astype(f32)                         # (2HS, 8HS) block-diag fwd/rev
    whh_h = whh_ref[1].astype(f32)

    def bicell(gx_f, gx_r, h_cat, c_f, c_r, whh_bd):
        # Fused fwd+rev LSTM cell. One MXU matmul covers both directions.
        if h_cat is None:                                  # step 0: h == 0
            gf, gr = gx_f, gx_r
        else:
            hh_g = jnp.dot(h_cat, whh_bd, preferred_element_type=f32)   # (N, 8HS)
            gf = hh_g[:, :G] + gx_f
            gr = hh_g[:, G:] + gx_r
        sf = jax.nn.sigmoid(gf[:, :3 * HS])                # i,f,o (contiguous)
        sr = jax.nn.sigmoid(gr[:, :3 * HS])
        tf = jnp.tanh(gf[:, 3 * HS:])                      # g
        tr = jnp.tanh(gr[:, 3 * HS:])
        c_f = sf[:, HS:2 * HS] * c_f + sf[:, :HS] * tf
        c_r = sr[:, HS:2 * HS] * c_r + sr[:, :HS] * tr
        h_f = sf[:, 2 * HS:] * jnp.tanh(c_f)
        h_r = sr[:, 2 * HS:] * jnp.tanh(c_r)
        return h_f, h_r, c_f, c_r

    # ---- vertical bidirectional LSTM (seq over HH, batch Nv = B*WW), fwd+rev interleaved
    Nv = B * WW
    c_f = jnp.zeros((Nv, HS), f32)
    c_r = jnp.zeros((Nv, HS), f32)
    h_cat = None
    v_f = [None] * HH
    v_r = [None] * HH
    for t in range(HH):                                    # statically unrolled (HH small)
        tr_t = HH - 1 - t
        gx_f = g4[:, t, :, 0 * G:1 * G].reshape(Nv, G)
        gx_r = g4[:, tr_t, :, 1 * G:2 * G].reshape(Nv, G)
        h_f, h_r, c_f, c_r = bicell(gx_f, gx_r, h_cat, c_f, c_r, whh_v)
        h_cat = jnp.concatenate([h_f, h_r], axis=-1)
        v_f[t] = h_f.reshape(B, 1, WW, HS)
        v_r[tr_t] = h_r.reshape(B, 1, WW, HS)              # reverse output at source time
    v_f4 = jnp.concatenate(v_f, axis=1)                    # (B, HH, WW, HS)
    v_r4 = jnp.concatenate(v_r, axis=1)

    # ---- horizontal bidirectional LSTM (seq over WW, batch Nh = B*HH)
    Nh = B * HH
    c_f = jnp.zeros((Nh, HS), f32)
    c_r = jnp.zeros((Nh, HS), f32)
    h_cat = None
    hz_f = [None] * WW
    hz_r = [None] * WW
    for t in range(WW):                                    # statically unrolled (WW small)
        tr_t = WW - 1 - t
        gx_f = g4[:, :, t, 2 * G:3 * G].reshape(Nh, G)
        gx_r = g4[:, :, tr_t, 3 * G:4 * G].reshape(Nh, G)
        h_f, h_r, c_f, c_r = bicell(gx_f, gx_r, h_cat, c_f, c_r, whh_h)
        h_cat = jnp.concatenate([h_f, h_r], axis=-1)
        hz_f[t] = h_f.reshape(B, HH, 1, HS)
        hz_r[tr_t] = h_r.reshape(B, HH, 1, HS)
    h_f4 = jnp.concatenate(hz_f, axis=2)                   # (B, HH, WW, HS)
    h_r4 = jnp.concatenate(hz_r, axis=2)

    # ---- union='cat' fc + residual (channel order [v_f | v_r | h_f | h_r])
    u = jnp.concatenate([v_f4, v_r4, h_f4, h_r4], axis=-1).reshape(M, 4 * HS)
    tok = jnp.dot(u, fcw_ref[...].astype(f32), preferred_element_type=f32)
    x = x + (tok + fcb_ref[...].astype(f32))               # drop_path = Identity

    # ---- channel MLP + residual
    y2 = _layer_norm(x, ln2_ref, eps)
    h1 = jnp.dot(y2, fc1w_ref[...].astype(f32), preferred_element_type=f32)
    h1 = jax.nn.gelu(h1 + fc1b_ref[...].astype(f32), approximate=True)  # tanh-GELU (EUP)
    h2 = jnp.dot(h1, fc2w_ref[...].astype(f32), preferred_element_type=f32)
    return x + (h2 + fc2b_ref[...].astype(f32))


# --------------------------------------------------------------------------
# One fused kernel per stage: patch-embed + all blocks (+ optional head)
# --------------------------------------------------------------------------
def _stage_kernel(*refs, B, HH, WW, C, HS, num_blocks, num_classes, eps):
    pat_ref, ew_ref, eb_ref = refs[0], refs[1], refs[2]
    f32 = jnp.float32
    # patch-embed conv (kernel == stride) as one matmul
    x = jnp.dot(pat_ref[...].astype(f32), ew_ref[...].astype(f32),
                preferred_element_type=f32) + eb_ref[...].astype(f32)
    idx = 3
    for _ in range(num_blocks):
        x = _seq2d_block(x, refs[idx:idx + _BLK_NARGS],
                         B=B, HH=HH, WW=WW, C=C, HS=HS, eps=eps)
        idx += _BLK_NARGS
    if num_classes is None:
        o_ref = refs[idx]
        o_ref[...] = x.astype(o_ref.dtype)
    else:
        # fused epilogue: final LayerNorm + global avg pool + classifier head
        norm_ref, hw_ref, hb_ref = refs[idx], refs[idx + 1], refs[idx + 2]
        o_ref = refs[idx + 3]
        xn = _layer_norm(x, norm_ref, eps)
        pooled = jnp.mean(xn.reshape(B, HH * WW, C), axis=1)          # (B, C)
        logits = jnp.dot(pooled, hw_ref[...].astype(f32), preferred_element_type=f32)
        o_ref[...] = (logits + hb_ref[...].astype(f32)).astype(o_ref.dtype)


def _blk_args(blk):
    return (blk["ln1"], blk["wih"], blk["bih"], blk["whh"], blk["fc_w"], blk["fc_b"],
            blk["ln2"], blk["fc1_w"], blk["fc1_b"], blk["fc2_w"], blk["fc2_b"])


def stage_apply(patches, embed_w, embed_b, blocks, B, HH, WW, C, HS, head=None):
    """Patch-embed + all blocks of a stage (+ optional norm/pool/head) in ONE pallas_call."""
    args = [patches, embed_w, embed_b]
    for blk in blocks:
        args.extend(_blk_args(blk))
    if head is None:
        out_shape = jax.ShapeDtypeStruct((B * HH * WW, C), patches.dtype)
        num_classes = None
    else:
        norm, head_w, head_b, num_classes = head
        args.extend([norm, head_w, head_b])
        out_shape = jax.ShapeDtypeStruct((B, num_classes), patches.dtype)
    return pl.pallas_call(
        functools.partial(_stage_kernel, B=B, HH=HH, WW=WW, C=C, HS=HS,
                          num_blocks=len(blocks), num_classes=num_classes, eps=_EPS),
        out_shape=out_shape,
        in_specs=[_VMEM] * len(args),
        out_specs=_VMEM,
    )(*args)


# --------------------------------------------------------------------------
# Glue (plain JAX, pure data movement between the two stage kernels)
# --------------------------------------------------------------------------
def extract_patches(x_nhwc, p):
    """Non-overlapping p x p patches (equiv. to Conv2d with kernel=stride=p)."""
    b, hh, ww, c = x_nhwc.shape
    hp, wp = hh // p, ww // p
    x = x_nhwc.reshape(b, hp, p, wp, p, c)
    x = jnp.transpose(x, (0, 1, 3, 2, 4, 5))               # (B, Hp, Wp, p, p, C)
    return x.reshape(b * hp * wp, p * p * c), (b, hp, wp)


def sequencer2d_forward(x_nchw, params, cfg):
    x = jnp.transpose(x_nchw, (0, 2, 3, 1))                # NCHW -> NHWC
    nstage = len(cfg["embed_dims"])
    tokens = None
    b = hh = ww = c = None
    for i in range(nstage):
        if i == 0:
            patches, (b, hh, ww) = extract_patches(x, cfg["patch_sizes"][0])
            ew, eb = params["stem_w"], params["stem_b"]
        else:
            x4 = tokens.reshape(b, hh, ww, c)
            patches, (b, hh, ww) = extract_patches(x4, cfg["patch_sizes"][i])
            ew, eb = params["stages"][i]["down_w"], params["stages"][i]["down_b"]
        c = cfg["embed_dims"][i]
        hs = cfg["hidden_sizes"][i]
        head = None
        if i == nstage - 1:
            head = (params["norm"], params["head_w"], params["head_b"],
                    cfg["num_classes"])
        tokens = stage_apply(patches, ew, eb, params["stages"][i]["blocks"],
                             b, hh, ww, c, hs, head=head)
    return tokens                                           # logits from the last stage


# --------------------------------------------------------------------------
# Deterministic parameter init (distributions match the reference; LSTM gate
# columns re-packed [i, f, o, g] and fwd/rev W_hh stored block-diagonally for
# the fused kernels — layout-equivalent under the uniform init)
# --------------------------------------------------------------------------
def _xavier_uniform(key, fan_in, fan_out):
    limit = math.sqrt(6.0 / (fan_in + fan_out))
    return jax.random.uniform(key, (fan_in, fan_out), jnp.float32, -limit, limit)


def _ln_params(dim):
    return jnp.stack([jnp.ones((dim,), jnp.float32), jnp.zeros((dim,), jnp.float32)])


def _init_block(key, dim, hidden, mlp_ratio):
    k_lstm, k_fc, k_fc1, k_fc2 = jax.random.split(key, 4)
    stdv = 1.0 / math.sqrt(hidden)

    def lstm_dir(k):
        kk = jax.random.split(k, 4)
        u = lambda kx, s: jax.random.uniform(kx, s, jnp.float32, -stdv, stdv)
        w_ih = u(kk[0], (dim, 4 * hidden))                  # columns packed [i, f, o, g]
        w_hh = u(kk[1], (hidden, 4 * hidden))
        bias = u(kk[2], (4 * hidden,)) + u(kk[3], (4 * hidden,))   # b_ih + b_hh folded
        return w_ih, w_hh, bias

    # direction order for union='cat': [vert_fwd, vert_rev, horiz_fwd, horiz_rev]
    dirs = [lstm_dir(k) for k in jax.random.split(k_lstm, 4)]

    def blockdiag(w_f, w_r):
        z = jnp.zeros((hidden, 4 * hidden), jnp.float32)
        top = jnp.concatenate([w_f, z], axis=1)
        bot = jnp.concatenate([z, w_r], axis=1)
        return jnp.concatenate([top, bot], axis=0)          # (2*hidden, 8*hidden)

    channels_dim = int(mlp_ratio * dim)
    return dict(
        ln1=_ln_params(dim),
        wih=jnp.concatenate([d[0] for d in dirs], axis=1),           # (dim, 16*hidden)
        bih=jnp.concatenate([d[2] for d in dirs]).reshape(1, -1),    # (1, 16*hidden)
        whh=jnp.stack([blockdiag(dirs[0][1], dirs[1][1]),
                       blockdiag(dirs[2][1], dirs[3][1])], axis=0),  # (2, 2*h, 8*h)
        fc_w=_xavier_uniform(k_fc, 4 * hidden, dim),                 # union='cat' fc
        fc_b=jnp.zeros((1, dim), jnp.float32),
        ln2=_ln_params(dim),
        fc1_w=_xavier_uniform(k_fc1, dim, channels_dim),
        fc1_b=jnp.zeros((1, channels_dim), jnp.float32),
        fc2_w=_xavier_uniform(k_fc2, channels_dim, dim),
        fc2_b=jnp.zeros((1, dim), jnp.float32),
    )


def init_params(key, cfg):
    keys = jax.random.split(key, 32)
    kidx = 0
    p0 = cfg["patch_sizes"][0]
    d0 = cfg["embed_dims"][0]
    stem_fan_in = cfg["in_chans"] * p0 * p0
    params = dict(
        stem_w=jax.random.normal(keys[kidx], (stem_fan_in, d0), jnp.float32)
        * math.sqrt(1.0 / stem_fan_in),                               # lecun normal
        stem_b=jnp.zeros((1, d0), jnp.float32),
    )
    kidx += 1
    stages = []
    prev_dim = d0
    for i, dim in enumerate(cfg["embed_dims"]):
        st = {}
        if i > 0:
            ps = cfg["patch_sizes"][i]
            fan_in = prev_dim * ps * ps
            st["down_w"] = (jax.random.normal(keys[kidx], (fan_in, dim), jnp.float32)
                            * math.sqrt(1.0 / fan_in))
            st["down_b"] = jnp.zeros((1, dim), jnp.float32)
            kidx += 1
        blocks = []
        for _ in range(cfg["layers"][i]):
            blocks.append(_init_block(keys[kidx], dim, cfg["hidden_sizes"][i],
                                      cfg["mlp_ratios"][i]))
            kidx += 1
        st["blocks"] = blocks
        stages.append(st)
        prev_dim = dim
    params["stages"] = stages
    dlast = cfg["embed_dims"][-1]
    params["norm"] = _ln_params(dlast)
    # NOTE: reference init zeros the head weights (-> all-zero logits); we use a
    # random deterministic head so the full compute path is exercised.
    params["head_w"] = _xavier_uniform(keys[kidx], dlast, cfg["num_classes"])
    params["head_b"] = jnp.zeros((1, cfg["num_classes"]), jnp.float32)
    return params


# --------------------------------------------------------------------------
if __name__ == "__main__":
    key = jax.random.PRNGKey(0)
    pkey, xkey = jax.random.split(key)
    params = init_params(pkey, CFG)
    x = jax.random.normal(
        xkey, (2, CFG["in_chans"], CFG["img_size"], CFG["img_size"]), jnp.float32)

    fwd = jax.jit(lambda xx, pp: sequencer2d_forward(xx, pp, CFG))
    logits = fwd(x, params)
    jax.block_until_ready(logits)
    assert logits.shape == (2, CFG["num_classes"]), logits.shape
    assert bool(jnp.all(jnp.isfinite(logits)))
    print("KERNEL_OK")
</pallas_src>

<mosaic_0001>
module attributes {stable_mosaic.version = 11 : i64} {
  func.func @_stage_kernel(%arg0: memref<32x48xf32, #tpu.memory_space<vmem>>, %arg1: memref<48x16xf32, #tpu.memory_space<vmem>>, %arg2: memref<1x16xf32, #tpu.memory_space<vmem>>, %arg3: memref<2x16xf32, #tpu.memory_space<vmem>>, %arg4: memref<16x128xf32, #tpu.memory_space<vmem>>, %arg5: memref<1x128xf32, #tpu.memory_space<vmem>>, %arg6: memref<2x16x64xf32, #tpu.memory_space<vmem>>, %arg7: memref<32x16xf32, #tpu.memory_space<vmem>>, %arg8: memref<1x16xf32, #tpu.memory_space<vmem>>, %arg9: memref<2x16xf32, #tpu.memory_space<vmem>>, %arg10: memref<16x48xf32, #tpu.memory_space<vmem>>, %arg11: memref<1x48xf32, #tpu.memory_space<vmem>>, %arg12: memref<48x16xf32, #tpu.memory_space<vmem>>, %arg13: memref<1x16xf32, #tpu.memory_space<vmem>>, %arg14: memref<32x16xf32, #tpu.memory_space<vmem>>) attributes {dimension_semantics = [], scalar_prefetch = 0 : i64, scratch_operands = 0 : i64, tpu.core_type = #tpu.core_type<tc>} {
    %c0 = arith.constant 0 : index
    %c0_0 = arith.constant 0 : index
    %0 = vector.load %arg0[%c0, %c0_0] : memref<32x48xf32, #tpu.memory_space<vmem>>, vector<32x48xf32>
    %c0_1 = arith.constant 0 : index
    %c0_2 = arith.constant 0 : index
    %1 = vector.load %arg1[%c0_1, %c0_2] : memref<48x16xf32, #tpu.memory_space<vmem>>, vector<48x16xf32>
    %cst = arith.constant dense<0.000000e+00> : vector<32x16xf32>
    %2 = tpu.matmul %0, %1, %cst {dimension_numbers = #tpu.dot_dimension_numbers<[1], [0], [0], [1], [0, 0, 1, 1], [], []>} : vector<32x48xf32>, vector<48x16xf32>, vector<32x16xf32> -> vector<32x16xf32>
    %c0_3 = arith.constant 0 : index
    %c0_4 = arith.constant 0 : index
    %3 = vector.load %arg2[%c0_3, %c0_4] : memref<1x16xf32, #tpu.memory_space<vmem>>, vector<1x16xf32>
    %4 = vector.broadcast %3 : vector<1x16xf32> to vector<32x16xf32>
    %5 = arith.addf %2, %4 : vector<32x16xf32>
    %c0_5 = arith.constant 0 : index
    %c0_6 = arith.constant 0 : index
    %6 = vector.load %arg3[%c0_5, %c0_6] : memref<2x16xf32, #tpu.memory_space<vmem>>, vector<1x16xf32>
    %c1 = arith.constant 1 : index
    %c0_7 = arith.constant 0 : index
    %7 = vector.load %arg3[%c1, %c0_7] : memref<2x16xf32, #tpu.memory_space<vmem>>, vector<1x16xf32>
    %cst_8 = arith.constant dense<0.000000e+00> : vector<32xf32>
    %8 = vector.multi_reduction <add>, %5, %cst_8 [1] : vector<32x16xf32> to vector<32xf32>
    %9 = vector.shape_cast %8 : vector<32xf32> to vector<32x1xf32>
    %cst_9 = arith.constant 1.600000e+01 : f32
    %10 = vector.broadcast %cst_9 : f32 to vector<32x1xf32>
    %11 = arith.divf %9, %10 : vector<32x1xf32>
    %12 = vector.broadcast %11 : vector<32x1xf32> to vector<32x16xf32>
    %13 = arith.subf %5, %12 : vector<32x16xf32>
    %14 = arith.mulf %13, %13 : vector<32x16xf32>
    %cst_10 = arith.constant dense<0.000000e+00> : vector<32xf32>
    %15 = vector.multi_reduction <add>, %14, %cst_10 [1] : vector<32x16xf32> to vector<32xf32>
    %16 = vector.shape_cast %15 : vector<32xf32> to vector<32x1xf32>
    %cst_11 = arith.constant 1.600000e+01 : f32
    %17 = vector.broadcast %cst_11 : f32 to vector<32x1xf32>
    %18 = arith.divf %16, %17 : vector<32x1xf32>
    %19 = vector.broadcast %11 : vector<32x1xf32> to vector<32x16xf32>
    %20 = arith.subf %5, %19 : vector<32x16xf32>
    %cst_12 = arith.constant 9.99999997E-7 : f32
    %21 = vector.broadcast %cst_12 : f32 to vector<32x1xf32>
    %22 = arith.addf %18, %21 : vector<32x1xf32>
    %23 = math.rsqrt %22 : vector<32x1xf32>
    %24 = vector.broadcast %23 : vector<32x1xf32> to vector<32x16xf32>
    %25 = arith.mulf %20, %24 : vector<32x16xf32>
    %26 = vector.broadcast %6 : vector<1x16xf32> to vector<32x16xf32>
    %27 = arith.mulf %25, %26 : vector<32x16xf32>
    %28 = vector.broadcast %7 : vector<1x16xf32> to vector<32x16xf32>
    %29 = arith.addf %27, %28 : vector<32x16xf32>
    %c0_13 = arith.constant 0 : index
    %c0_14 = arith.constant 0 : index
    %30 = vector.load %arg4[%c0_13, %c0_14] : memref<16x128xf32, #tpu.memory_space<vmem>>, vector<16x128xf32>
    %cst_15 = arith.constant dense<0.000000e+00> : vector<32x128xf32>
    %31 = tpu.matmul %29, %30, %cst_15 {dimension_numbers = #tpu.dot_dimension_numbers<[1], [0], [0], [1], [0, 0, 1, 1], [], []>} : vector<32x16xf32>, vector<16x128xf32>, vector<32x128xf32> -> vector<32x128xf32>
    %c0_16 = arith.constant 0 : index
    %c0_17 = arith.constant 0 : index
    %32 = vector.load %arg5[%c0_16, %c0_17] : memref<1x128xf32, #tpu.memory_space<vmem>>, vector<1x128xf32>
    %33 = vector.broadcast %32 : vector<1x128xf32> to vector<32x128xf32>
    %34 = arith.addf %31, %33 : vector<32x128xf32>
    %35 = vector.shape_cast %34 : vector<32x128xf32> to vector<2x4x4x128xf32>
    %c0_18 = arith.constant 0 : index
    %c0_19 = arith.constant 0 : index
    %c0_20 = arith.constant 0 : index
    %36 = vector.load %arg6[%c0_18, %c0_19, %c0_20] : memref<2x16x64xf32, #tpu.memory_space<vmem>>, vector<1x16x64xf32>
    %37 = vector.shape_cast %36 : vector<1x16x64xf32> to vector<16x64xf32>
    %c1_21 = arith.constant 1 : index
    %c0_22 = arith.constant 0 : index
    %c0_23 = arith.constant 0 : index
    %38 = vector.load %arg6[%c1_21, %c0_22, %c0_23] : memref<2x16x64xf32, #tpu.memory_space<vmem>>, vector<1x16x64xf32>
    %39 = vector.shape_cast %38 : vector<1x16x64xf32> to vector<16x64xf32>
    %cst_24 = arith.constant 0.000000e+00 : f32
    %40 = vector.broadcast %cst_24 : f32 to vector<8x8xf32>
    %cst_25 = arith.constant 0.000000e+00 : f32
    %41 = vector.broadcast %cst_25 : f32 to vector<8x8xf32>
    %42 = vector.extract_strided_slice %35 {offsets = [0, 0, 0, 0], sizes = [2, 1, 4, 32], strides = [1, 1, 1, 1]} : vector<2x4x4x128xf32> to vector<2x1x4x32xf32>
    %43 = vector.shape_cast %42 : vector<2x1x4x32xf32> to vector<2x4x32xf32>
    %44 = vector.shape_cast %43 : vector<2x4x32xf32> to vector<8x32xf32>
    %45 = vector.extract_strided_slice %35 {offsets = [0, 3, 0, 32], sizes = [2, 1, 4, 32], strides = [1, 1, 1, 1]} : vector<2x4x4x128xf32> to vector<2x1x4x32xf32>
    %46 = vector.shape_cast %45 : vector<2x1x4x32xf32> to vector<2x4x32xf32>
    %47 = vector.shape_cast %46 : vector<2x4x32xf32> to vector<8x32xf32>
    %48 = vector.extract_strided_slice %44 {offsets = [0, 0], sizes = [8, 24], strides = [1, 1]} : vector<8x32xf32> to vector<8x24xf32>
    %49 = arith.negf %48 : vector<8x24xf32>
    %50 = math.exp %49 : vector<8x24xf32>
    %cst_26 = arith.constant 1.000000e+00 : f32
    %51 = vector.broadcast %cst_26 : f32 to vector<8x24xf32>
    %52 = arith.addf %51, %50 : vector<8x24xf32>
    %53 = arith.divf %51, %52 : vector<8x24xf32>
    %54 = vector.extract_strided_slice %47 {offsets = [0, 0], sizes = [8, 24], strides = [1, 1]} : vector<8x32xf32> to vector<8x24xf32>
    %55 = arith.negf %54 : vector<8x24xf32>
    %56 = math.exp %55 : vector<8x24xf32>
    %cst_27 = arith.constant 1.000000e+00 : f32
    %57 = vector.broadcast %cst_27 : f32 to vector<8x24xf32>
    %58 = arith.addf %57, %56 : vector<8x24xf32>
    %59 = arith.divf %57, %58 : vector<8x24xf32>
    %60 = vector.extract_strided_slice %44 {offsets = [0, 24], sizes = [8, 8], strides = [1, 1]} : vector<8x32xf32> to vector<8x8xf32>
    %61 = math.tanh %60 : vector<8x8xf32>
    %62 = vector.extract_strided_slice %47 {offsets = [0, 24], sizes = [8, 8], strides = [1, 1]} : vector<8x32xf32> to vector<8x8xf32>
    %63 = math.tanh %62 : vector<8x8xf32>
    %64 = vector.extract_strided_slice %53 {offsets = [0, 8], sizes = [8, 8], strides = [1, 1]} : vector<8x24xf32> to vector<8x8xf32>
    %65 = arith.mulf %64, %40 : vector<8x8xf32>
    %66 = vector.extract_strided_slice %53 {offsets = [0, 0], sizes = [8, 8], strides = [1, 1]} : vector<8x24xf32> to vector<8x8xf32>
    %67 = arith.mulf %66, %61 : vector<8x8xf32>
    %68 = arith.addf %65, %67 : vector<8x8xf32>
    %69 = vector.extract_strided_slice %59 {offsets = [0, 8], sizes = [8, 8], strides = [1, 1]} : vector<8x24xf32> to vector<8x8xf32>
    %70 = arith.mulf %69, %41 : vector<8x8xf32>
    %71 = vector.extract_strided_slice %59 {offsets = [0, 0], sizes = [8, 8], strides = [1, 1]} : vector<8x24xf32> to vector<8x8xf32>
    %72 = arith.mulf %71, %63 : vector<8x8xf32>
    %73 = arith.addf %70, %72 : vector<8x8xf32>
    %74 = vector.extract_strided_slice %53 {offsets = [0, 16], sizes = [8, 8], strides = [1, 1]} : vector<8x24xf32> to vector<8x8xf32>
    %75 = math.tanh %68 : vector<8x8xf32>
    %76 = arith.mulf %74, %75 : vector<8x8xf32>
    %77 = vector.extract_strided_slice %59 {offsets = [0, 16], sizes = [8, 8], strides = [1, 1]} : vector<8x24xf32> to vector<8x8xf32>
    %78 = math.tanh %73 : vector<8x8xf32>
    %79 = arith.mulf %77, %78 : vector<8x8xf32>
    %80 = tpu.concatenate %76, %79 in 1 : vector<8x8xf32>, vector<8x8xf32> -> vector<8x16xf32>
    %81 = vector.shape_cast %76 : vector<8x8xf32> to vector<2x1x4x8xf32>
    %82 = vector.shape_cast %79 : vector<8x8xf32> to vector<2x1x4x8xf32>
    %83 = vector.extract_strided_slice %35 {offsets = [0, 1, 0, 0], sizes = [2, 1, 4, 32], strides = [1, 1, 1, 1]} : vector<2x4x4x128xf32> to vector<2x1x4x32xf32>
    %84 = vector.shape_cast %83 : vector<2x1x4x32xf32> to vector<2x4x32xf32>
    %85 = vector.shape_cast %84 : vector<2x4x32xf32> to vector<8x32xf32>
    %86 = vector.extract_strided_slice %35 {offsets = [0, 2, 0, 32], sizes = [2, 1, 4, 32], strides = [1, 1, 1, 1]} : vector<2x4x4x128xf32> to vector<2x1x4x32xf32>
    %87 = vector.shape_cast %86 : vector<2x1x4x32xf32> to vector<2x4x32xf32>
    %88 = vector.shape_cast %87 : vector<2x4x32xf32> to vector<8x32xf32>
    %cst_28 = arith.constant dense<0.000000e+00> : vector<8x64xf32>
    %89 = tpu.matmul %80, %37, %cst_28 {dimension_numbers = #tpu.dot_dimension_numbers<[1], [0], [0], [1], [0, 0, 1, 1], [], []>} : vector<8x16xf32>, vector<16x64xf32>, vector<8x64xf32> -> vector<8x64xf32>
    %90 = vector.extract_strided_slice %89 {offsets = [0, 0], sizes = [8, 32], strides = [1, 1]} : vector<8x64xf32> to vector<8x32xf32>
    %91 = arith.addf %90, %85 : vector<8x32xf32>
    %92 = vector.extract_strided_slice %89 {offsets = [0, 32], sizes = [8, 32], strides = [1, 1]} : vector<8x64xf32> to vector<8x32xf32>
    %93 = arith.addf %92, %88 : vector<8x32xf32>
    %94 = vector.extract_strided_slice %91 {offsets = [0, 0], sizes = [8, 24], strides = [1, 1]} : vector<8x32xf32> to vector<8x24xf32>
    %95 = arith.negf %94 : vector<8x24xf32>
    %96 = math.exp %95 : vector<8x24xf32>
    %cst_29 = arith.constant 1.000000e+00 : f32
    %97 = vector.broadcast %cst_29 : f32 to vector<8x24xf32>
    %98 = arith.addf %97, %96 : vector<8x24xf32>
    %99 = arith.divf %97, %98 : vector<8x24xf32>
    %100 = vector.extract_strided_slice %93 {offsets = [0, 0], sizes = [8, 24], strides = [1, 1]} : vector<8x32xf32> to vector<8x24xf32>
    %101 = arith.negf %100 : vector<8x24xf32>
    %102 = math.exp %101 : vector<8x24xf32>
    %cst_30 = arith.constant 1.000000e+00 : f32
    %103 = vector.broadcast %cst_30 : f32 to vector<8x24xf32>
    %104 = arith.addf %103, %102 : vector<8x24xf32>
    %105 = arith.divf %103, %104 : vector<8x24xf32>
    %106 = vector.extract_strided_slice %91 {offsets = [0, 24], sizes = [8, 8], strides = [1, 1]} : vector<8x32xf32> to vector<8x8xf32>
    %107 = math.tanh %106 : vector<8x8xf32>
    %108 = vector.extract_strided_slice %93 {offsets = [0, 24], sizes = [8, 8], strides = [1, 1]} : vector<8x32xf32> to vector<8x8xf32>
    %109 = math.tanh %108 : vector<8x8xf32>
    %110 = vector.extract_strided_slice %99 {offsets = [0, 8], sizes = [8, 8], strides = [1, 1]} : vector<8x24xf32> to vector<8x8xf32>
    %111 = arith.mulf %110, %68 : vector<8x8xf32>
    %112 = vector.extract_strided_slice %99 {offsets = [0, 0], sizes = [8, 8], strides = [1, 1]} : vector<8x24xf32> to vector<8x8xf32>
    %113 = arith.mulf %112, %107 : vector<8x8xf32>
    %114 = arith.addf %111, %113 : vector<8x8xf32>
    %115 = vector.extract_strided_slice %105 {offsets = [0, 8], sizes = [8, 8], strides = [1, 1]} : vector<8x24xf32> to vector<8x8xf32>
    %116 = arith.mulf %115, %73 : vector<8x8xf32>
    %117 = vector.extract_strided_slice %105 {offsets = [0, 0], sizes = [8, 8], strides = [1, 1]} : vector<8x24xf32> to vector<8x8xf32>
    %118 = arith.mulf %117, %109 : vector<8x8xf32>
    %119 = arith.addf %116, %118 : vector<8x8xf32>
    %120 = vector.extract_strided_slice %99 {offsets = [0, 16], sizes = [8, 8], strides = [1, 1]} : vector<8x24xf32> to vector<8x8xf32>
    %121 = math.tanh %114 : vector<8x8xf32>
    %122 = arith.mulf %120, %121 : vector<8x8xf32>
    %123 = vector.extract_strided_slice %105 {offsets = [0, 16], sizes = [8, 8], strides = [1, 1]} : vector<8x24xf32> to vector<8x8xf32>
    %124 = math.tanh %119 : vector<8x8xf32>
    %125 = arith.mulf %123, %124 : vector<8x8xf32>
    %126 = tpu.concatenate %122, %125 in 1 : vector<8x8xf32>, vector<8x8xf32> -> vector<8x16xf32>
    %127 = vector.shape_cast %122 : vector<8x8xf32> to vector<2x1x4x8xf32>
    %128 = vector.shape_cast %125 : vector<8x8xf32> to vector<2x1x4x8xf32>
    %129 = vector.extract_strided_slice %35 {offsets = [0, 2, 0, 0], sizes = [2, 1, 4, 32], strides = [1, 1, 1, 1]} : vector<2x4x4x128xf32> to vector<2x1x4x32xf32>
    %130 = vector.shape_cast %129 : vector<2x1x4x32xf32> to vector<2x4x32xf32>
    %131 = vector.shape_cast %130 : vector<2x4x32xf32> to vector<8x32xf32>
    %132 = vector.extract_strided_slice %35 {offsets = [0, 1, 0, 32], sizes = [2, 1, 4, 32], strides = [1, 1, 1, 1]} : vector<2x4x4x128xf32> to vector<2x1x4x32xf32>
    %133 = vector.shape_cast %132 : vector<2x1x4x32xf32> to vector<2x4x32xf32>
    %134 = vector.shape_cast %133 : vector<2x4x32xf32> to vector<8x32xf32>
    %cst_31 = arith.constant dense<0.000000e+00> : vector<8x64xf32>
    %135 = tpu.matmul %126, %37, %cst_31 {dimension_numbers = #tpu.dot_dimension_numbers<[1], [0], [0], [1], [0, 0, 1, 1], [], []>} : vector<8x16xf32>, vector<16x64xf32>, vector<8x64xf32> -> vector<8x64xf32>
    %136 = vector.extract_strided_slice %135 {offsets = [0, 0], sizes = [8, 32], strides = [1, 1]} : vector<8x64xf32> to vector<8x32xf32>
    %137 = arith.addf %136, %131 : vector<8x32xf32>
    %138 = vector.extract_strided_slice %135 {offsets = [0, 32], sizes = [8, 32], strides = [1, 1]} : vector<8x64xf32> to vector<8x32xf32>
    %139 = arith.addf %138, %134 : vector<8x32xf32>
    %140 = vector.extract_strided_slice %137 {offsets = [0, 0], sizes = [8, 24], strides = [1, 1]} : vector<8x32xf32> to vector<8x24xf32>
    %141 = arith.negf %140 : vector<8x24xf32>
    %142 = math.exp %141 : vector<8x24xf32>
    %cst_32 = arith.constant 1.000000e+00 : f32
    %143 = vector.broadcast %cst_32 : f32 to vector<8x24xf32>
    %144 = arith.addf %143, %142 : vector<8x24xf32>
    %145 = arith.divf %143, %144 : vector<8x24xf32>
    %146 = vector.extract_strided_slice %139 {offsets = [0, 0], sizes = [8, 24], strides = [1, 1]} : vector<8x32xf32> to vector<8x24xf32>
    %147 = arith.negf %146 : vector<8x24xf32>
    %148 = math.exp %147 : vector<8x24xf32>
    %cst_33 = arith.constant 1.000000e+00 : f32
    %149 = vector.broadcast %cst_33 : f32 to vector<8x24xf32>
    %150 = arith.addf %149, %148 : vector<8x24xf32>
    %151 = arith.divf %149, %150 : vector<8x24xf32>
    %152 = vector.extract_strided_slice %137 {offsets = [0, 24], sizes = [8, 8], strides = [1, 1]} : vector<8x32xf32> to vector<8x8xf32>
    %153 = math.tanh %152 : vector<8x8xf32>
    %154 = vector.extract_strided_slice %139 {offsets = [0, 24], sizes = [8, 8], strides = [1, 1]} : vector<8x32xf32> to vector<8x8xf32>
    %155 = math.tanh %154 : vector<8x8xf32>
    %156 = vector.extract_strided_slice %145 {offsets = [0, 8], sizes = [8, 8], strides = [1, 1]} : vector<8x24xf32> to vector<8x8xf32>
    %157 = arith.mulf %156, %114 : vector<8x8xf32>
    %158 = vector.extract_strided_slice %145 {offsets = [0, 0], sizes = [8, 8], strides = [1, 1]} : vector<8x24xf32> to vector<8x8xf32>
    %159 = arith.mulf %158, %153 : vector<8x8xf32>
    %160 = arith.addf %157, %159 : vector<8x8xf32>
    %161 = vector.extract_strided_slice %151 {offsets = [0, 8], sizes = [8, 8], strides = [1, 1]} : vector<8x24xf32> to vector<8x8xf32>
    %162 = arith.mulf %161, %119 : vector<8x8xf32>
    %163 = vector.extract_strided_slice %151 {offsets = [0, 0], sizes = [8, 8], strides = [1, 1]} : vector<8x24xf32> to vector<8x8xf32>
    %164 = arith.mulf %163, %155 : vector<8x8xf32>
    %165 = arith.addf %162, %164 : vector<8x8xf32>
    %166 = vector.extract_strided_slice %145 {offsets = [0, 16], sizes = [8, 8], strides = [1, 1]} : vector<8x24xf32> to vector<8x8xf32>
    %167 = math.tanh %160 : vector<8x8xf32>
    %168 = arith.mulf %166, %167 : vector<8x8xf32>
    %169 = vector.extract_strided_slice %151 {offsets = [0, 16], sizes = [8, 8], strides = [1, 1]} : vector<8x24xf32> to vector<8x8xf32>
    %170 = math.tanh %165 : vector<8x8xf32>
    %171 = arith.mulf %169, %170 : vector<8x8xf32>
    %172 = tpu.concatenate %168, %171 in 1 : vector<8x8xf32>, vector<8x8xf32> -> vector<8x16xf32>
    %173 = vector.shape_cast %168 : vector<8x8xf32> to vector<2x1x4x8xf32>
    %174 = vector.shape_cast %171 : vector<8x8xf32> to vector<2x1x4x8xf32>
    %175 = vector.extract_strided_slice %35 {offsets = [0, 3, 0, 0], sizes = [2, 1, 4, 32], strides = [1, 1, 1, 1]} : vector<2x4x4x128xf32> to vector<2x1x4x32xf32>
    %176 = vector.shape_cast %175 : vector<2x1x4x32xf32> to vector<2x4x32xf32>
    %177 = vector.shape_cast %176 : vector<2x4x32xf32> to vector<8x32xf32>
    %178 = vector.extract_strided_slice %35 {offsets = [0, 0, 0, 32], sizes = [2, 1, 4, 32], strides = [1, 1, 1, 1]} : vector<2x4x4x128xf32> to vector<2x1x4x32xf32>
    %179 = vector.shape_cast %178 : vector<2x1x4x32xf32> to vector<2x4x32xf32>
    %180 = vector.shape_cast %179 : vector<2x4x32xf32> to vector<8x32xf32>
    %cst_34 = arith.constant dense<0.000000e+00> : vector<8x64xf32>
    %181 = tpu.matmul %172, %37, %cst_34 {dimension_numbers = #tpu.dot_dimension_numbers<[1], [0], [0], [1], [0, 0, 1, 1], [], []>} : vector<8x16xf32>, vector<16x64xf32>, vector<8x64xf32> -> vector<8x64xf32>
    %182 = vector.extract_strided_slice %181 {offsets = [0, 0], sizes = [8, 32], strides = [1, 1]} : vector<8x64xf32> to vector<8x32xf32>
    %183 = arith.addf %182, %177 : vector<8x32xf32>
    %184 = vector.extract_strided_slice %181 {offsets = [0, 32], sizes = [8, 32], strides = [1, 1]} : vector<8x64xf32> to vector<8x32xf32>
    %185 = arith.addf %184, %180 : vector<8x32xf32>
    %186 = vector.extract_strided_slice %183 {offsets = [0, 0], sizes = [8, 24], strides = [1, 1]} : vector<8x32xf32> to vector<8x24xf32>
    %187 = arith.negf %186 : vector<8x24xf32>
    %188 = math.exp %187 : vector<8x24xf32>
    %cst_35 = arith.constant 1.000000e+00 : f32
    %189 = vector.broadcast %cst_35 : f32 to vector<8x24xf32>
    %190 = arith.addf %189, %188 : vector<8x24xf32>
    %191 = arith.divf %189, %190 : vector<8x24xf32>
    %192 = vector.extract_strided_slice %185 {offsets = [0, 0], sizes = [8, 24], strides = [1, 1]} : vector<8x32xf32> to vector<8x24xf32>
    %193 = arith.negf %192 : vector<8x24xf32>
    %194 = math.exp %193 : vector<8x24xf32>
    %cst_36 = arith.constant 1.000000e+00 : f32
    %195 = vector.broadcast %cst_36 : f32 to vector<8x24xf32>
    %196 = arith.addf %195, %194 : vector<8x24xf32>
    %197 = arith.divf %195, %196 : vector<8x24xf32>
    %198 = vector.extract_strided_slice %183 {offsets = [0, 24], sizes = [8, 8], strides = [1, 1]} : vector<8x32xf32> to vector<8x8xf32>
    %199 = math.tanh %198 : vector<8x8xf32>
    %200 = vector.extract_strided_slice %185 {offsets = [0, 24], sizes = [8, 8], strides = [1, 1]} : vector<8x32xf32> to vector<8x8xf32>
    %201 = math.tanh %200 : vector<8x8xf32>
    %202 = vector.extract_strided_slice %191 {offsets = [0, 8], sizes = [8, 8], strides = [1, 1]} : vector<8x24xf32> to vector<8x8xf32>
    %203 = arith.mulf %202, %160 : vector<8x8xf32>
    %204 = vector.extract_strided_slice %191 {offsets = [0, 0], sizes = [8, 8], strides = [1, 1]} : vector<8x24xf32> to vector<8x8xf32>
    %205 = arith.mulf %204, %199 : vector<8x8xf32>
    %206 = arith.addf %203, %205 : vector<8x8xf32>
    %207 = vector.extract_strided_slice %197 {offsets = [0, 8], sizes = [8, 8], strides = [1, 1]} : vector<8x24xf32> to vector<8x8xf32>
    %208 = arith.mulf %207, %165 : vector<8x8xf32>
    %209 = vector.extract_strided_slice %197 {offsets = [0, 0], sizes = [8, 8], strides = [1, 1]} : vector<8x24xf32> to vector<8x8xf32>
    %210 = arith.mulf %209, %201 : vector<8x8xf32>
    %211 = arith.addf %208, %210 : vector<8x8xf32>
    %212 = vector.extract_strided_slice %191 {offsets = [0, 16], sizes = [8, 8], strides = [1, 1]} : vector<8x24xf32> to vector<8x8xf32>
    %213 = math.tanh %206 : vector<8x8xf32>
    %214 = arith.mulf %212, %213 : vector<8x8xf32>
    %215 = vector.extract_strided_slice %197 {offsets = [0, 16], sizes = [8, 8], strides = [1, 1]} : vector<8x24xf32> to vector<8x8xf32>
    %216 = math.tanh %211 : vector<8x8xf32>
    %217 = arith.mulf %215, %216 : vector<8x8xf32>
    %218 = vector.shape_cast %214 : vector<8x8xf32> to vector<2x1x4x8xf32>
    %219 = vector.shape_cast %217 : vector<8x8xf32> to vector<2x1x4x8xf32>
    %220 = tpu.concatenate %81, %127, %173, %218 in 1 : vector<2x1x4x8xf32>, vector<2x1x4x8xf32>, vector<2x1x4x8xf32>, vector<2x1x4x8xf32> -> vector<2x4x4x8xf32>
    %221 = tpu.concatenate %219, %174, %128, %82 in 1 : vector<2x1x4x8xf32>, vector<2x1x4x8xf32>, vector<2x1x4x8xf32>, vector<2x1x4x8xf32> -> vector<2x4x4x8xf32>
    %cst_37 = arith.constant 0.000000e+00 : f32
    %222 = vector.broadcast %cst_37 : f32 to vector<8x8xf32>
    %cst_38 = arith.constant 0.000000e+00 : f32
    %223 = vector.broadcast %cst_38 : f32 to vector<8x8xf32>
    %224 = vector.extract_strided_slice %35 {offsets = [0, 0, 0, 64], sizes = [2, 4, 1, 32], strides = [1, 1, 1, 1]} : vector<2x4x4x128xf32> to vector<2x4x1x32xf32>
    %225 = vector.shape_cast %224 : vector<2x4x1x32xf32> to vector<2x4x32xf32>
    %226 = vector.shape_cast %225 : vector<2x4x32xf32> to vector<8x32xf32>
    %227 = vector.extract_strided_slice %35 {offsets = [0, 0, 3, 96], sizes = [2, 4, 1, 32], strides = [1, 1, 1, 1]} : vector<2x4x4x128xf32> to vector<2x4x1x32xf32>
    %228 = vector.shape_cast %227 : vector<2x4x1x32xf32> to vector<2x4x32xf32>
    %229 = vector.shape_cast %228 : vector<2x4x32xf32> to vector<8x32xf32>
    %230 = vector.extract_strided_slice %226 {offsets = [0, 0], sizes = [8, 24], strides = [1, 1]} : vector<8x32xf32> to vector<8x24xf32>
    %231 = arith.negf %230 : vector<8x24xf32>
    %232 = math.exp %231 : vector<8x24xf32>
    %cst_39 = arith.constant 1.000000e+00 : f32
    %233 = vector.broadcast %cst_39 : f32 to vector<8x24xf32>
    %234 = arith.addf %233, %232 : vector<8x24xf32>
    %235 = arith.divf %233, %234 : vector<8x24xf32>
    %236 = vector.extract_strided_slice %229 {offsets = [0, 0], sizes = [8, 24], strides = [1, 1]} : vector<8x32xf32> to vector<8x24xf32>
    %237 = arith.negf %236 : vector<8x24xf32>
    %238 = math.exp %237 : vector<8x24xf32>
    %cst_40 = arith.constant 1.000000e+00 : f32
    %239 = vector.broadcast %cst_40 : f32 to vector<8x24xf32>
    %240 = arith.addf %239, %238 : vector<8x24xf32>
    %241 = arith.divf %239, %240 : vector<8x24xf32>
    %242 = vector.extract_strided_slice %226 {offsets = [0, 24], sizes = [8, 8], strides = [1, 1]} : vector<8x32xf32> to vector<8x8xf32>
    %243 = math.tanh %242 : vector<8x8xf32>
    %244 = vector.extract_strided_slice %229 {offsets = [0, 24], sizes = [8, 8], strides = [1, 1]} : vector<8x32xf32> to vector<8x8xf32>
    %245 = math.tanh %244 : vector<8x8xf32>
    %246 = vector.extract_strided_slice %235 {offsets = [0, 8], sizes = [8, 8], strides = [1, 1]} : vector<8x24xf32> to vector<8x8xf32>
    %247 = arith.mulf %246, %222 : vector<8x8xf32>
    %248 = vector.extract_strided_slice %235 {offsets = [0, 0], sizes = [8, 8], strides = [1, 1]} : vector<8x24xf32> to vector<8x8xf32>
    %249 = arith.mulf %248, %243 : vector<8x8xf32>
    %250 = arith.addf %247, %249 : vector<8x8xf32>
    %251 = vector.extract_strided_slice %241 {offsets = [0, 8], sizes = [8, 8], strides = [1, 1]} : vector<8x24xf32> to vector<8x8xf32>
    %252 = arith.mulf %251, %223 : vector<8x8xf32>
    %253 = vector.extract_strided_slice %241 {offsets = [0, 0], sizes = [8, 8], strides = [1, 1]} : vector<8x24xf32> to vector<8x8xf32>
    %254 = arith.mulf %253, %245 : vector<8x8xf32>
    %255 = arith.addf %252, %254 : vector<8x8xf32>
    %256 = vector.extract_strided_slice %235 {offsets = [0, 16], sizes = [8, 8], strides = [1, 1]} : vector<8x24xf32> to vector<8x8xf32>
    %257 = math.tanh %250 : vector<8x8xf32>
    %258 = arith.mulf %256, %257 : vector<8x8xf32>
    %259 = vector.extract_strided_slice %241 {offsets = [0, 16], sizes = [8, 8], strides = [1, 1]} : vector<8x24xf32> to vector<8x8xf32>
    %260 = math.tanh %255 : vector<8x8xf32>
    %261 = arith.mulf %259, %260 : vector<8x8xf32>
    %262 = tpu.concatenate %258, %261 in 1 : vector<8x8xf32>, vector<8x8xf32> -> vector<8x16xf32>
    %263 = vector.shape_cast %258 : vector<8x8xf32> to vector<2x4x1x8xf32>
    %264 = vector.shape_cast %261 : vector<8x8xf32> to vector<2x4x1x8xf32>
    %265 = vector.extract_strided_slice %35 {offsets = [0, 0, 1, 64], sizes = [2, 4, 1, 32], strides = [1, 1, 1, 1]} : vector<2x4x4x128xf32> to vector<2x4x1x32xf32>
    %266 = vector.shape_cast %265 : vector<2x4x1x32xf32> to vector<2x4x32xf32>
    %267 = vector.shape_cast %266 : vector<2x4x32xf32> to vector<8x32xf32>
    %268 = vector.extract_strided_slice %35 {offsets = [0, 0, 2, 96], sizes = [2, 4, 1, 32], strides = [1, 1, 1, 1]} : vector<2x4x4x128xf32> to vector<2x4x1x32xf32>
    %269 = vector.shape_cast %268 : vector<2x4x1x32xf32> to vector<2x4x32xf32>
    %270 = vector.shape_cast %269 : vector<2x4x32xf32> to vector<8x32xf32>
    %cst_41 = arith.constant dense<0.000000e+00> : vector<8x64xf32>
    %271 = tpu.matmul %262, %39, %cst_41 {dimension_numbers = #tpu.dot_dimension_numbers<[1], [0], [0], [1], [0, 0, 1, 1], [], []>} : vector<8x16xf32>, vector<16x64xf32>, vector<8x64xf32> -> vector<8x64xf32>
    %272 = vector.extract_strided_slice %271 {offsets = [0, 0], sizes = [8, 32], strides = [1, 1]} : vector<8x64xf32> to vector<8x32xf32>
    %273 = arith.addf %272, %267 : vector<8x32xf32>
    %274 = vector.extract_strided_slice %271 {offsets = [0, 32], sizes = [8, 32], strides = [1, 1]} : vector<8x64xf32> to vector<8x32xf32>
    %275 = arith.addf %274, %270 : vector<8x32xf32>
    %276 = vector.extract_strided_slice %273 {offsets = [0, 0], sizes = [8, 24], strides = [1, 1]} : vector<8x32xf32> to vector<8x24xf32>
    %277 = arith.negf %276 : vector<8x24xf32>
    %278 = math.exp %277 : vector<8x24xf32>
    %cst_42 = arith.constant 1.000000e+00 : f32
    %279 = vector.broadcast %cst_42 : f32 to vector<8x24xf32>
    %280 = arith.addf %279, %278 : vector<8x24xf32>
    %281 = arith.divf %279, %280 : vector<8x24xf32>
    %282 = vector.extract_strided_slice %275 {offsets = [0, 0], sizes = [8, 24], strides = [1, 1]} : vector<8x32xf32> to vector<8x24xf32>
    %283 = arith.negf %282 : vector<8x24xf32>
    %284 = math.exp %283 : vector<8x24xf32>
    %cst_43 = arith.constant 1.000000e+00 : f32
    %285 = vector.broadcast %cst_43 : f32 to vector<8x24xf32>
    %286 = arith.addf %285, %284 : vector<8x24xf32>
    %287 = arith.divf %285, %286 : vector<8x24xf32>
    %288 = vector.extract_strided_slice %273 {offsets = [0, 24], sizes = [8, 8], strides = [1, 1]} : vector<8x32xf32> to vector<8x8xf32>
    %289 = math.tanh %288 : vector<8x8xf32>
    %290 = vector.extract_strided_slice %275 {offsets = [0, 24], sizes = [8, 8], strides = [1, 1]} : vector<8x32xf32> to vector<8x8xf32>
    %291 = math.tanh %290 : vector<8x8xf32>
    %292 = vector.extract_strided_slice %281 {offsets = [0, 8], sizes = [8, 8], strides = [1, 1]} : vector<8x24xf32> to vector<8x8xf32>
    %293 = arith.mulf %292, %250 : vector<8x8xf32>
    %294 = vector.extract_strided_slice %281 {offsets = [0, 0], sizes = [8, 8], strides = [1, 1]} : vector<8x24xf32> to vector<8x8xf32>
    %295 = arith.mulf %294, %289 : vector<8x8xf32>
    %296 = arith.addf %293, %295 : vector<8x8xf32>
    %297 = vector.extract_strided_slice %287 {offsets = [0, 8], sizes = [8, 8], strides = [1, 1]} : vector<8x24xf32> to vector<8x8xf32>
    %298 = arith.mulf %297, %255 : vector<8x8xf32>
    %299 = vector.extract_strided_slice %287 {offsets = [0, 0], sizes = [8, 8], strides = [1, 1]} : vector<8x24xf32> to vector<8x8xf32>
    %300 = arith.mulf %299, %291 : vector<8x8xf32>
    %301 = arith.addf %298, %300 : vector<8x8xf32>
    %302 = vector.extract_strided_slice %281 {offsets = [0, 16], sizes = [8, 8], strides = [1, 1]} : vector<8x24xf32> to vector<8x8xf32>
    %303 = math.tanh %296 : vector<8x8xf32>
    %304 = arith.mulf %302, %303 : vector<8x8xf32>
    %305 = vector.extract_strided_slice %287 {offsets = [0, 16], sizes = [8, 8], strides = [1, 1]} : vector<8x24xf32> to vector<8x8xf32>
    %306 = math.tanh %301 : vector<8x8xf32>
    %307 = arith.mulf %305, %306 : vector<8x8xf32>
    %308 = tpu.concatenate %304, %307 in 1 : vector<8x8xf32>, vector<8x8xf32> -> vector<8x16xf32>
    %309 = vector.shape_cast %304 : vector<8x8xf32> to vector<2x4x1x8xf32>
    %310 = vector.shape_cast %307 : vector<8x8xf32> to vector<2x4x1x8xf32>
    %311 = vector.extract_strided_slice %35 {offsets = [0, 0, 2, 64], sizes = [2, 4, 1, 32], strides = [1, 1, 1, 1]} : vector<2x4x4x128xf32> to vector<2x4x1x32xf32>
    %312 = vector.shape_cast %311 : vector<2x4x1x32xf32> to vector<2x4x32xf32>
    %313 = vector.shape_cast %312 : vector<2x4x32xf32> to vector<8x32xf32>
    %314 = vector.extract_strided_slice %35 {offsets = [0, 0, 1, 96], sizes = [2, 4, 1, 32], strides = [1, 1, 1, 1]} : vector<2x4x4x128xf32> to vector<2x4x1x32xf32>
    %315 = vector.shape_cast %314 : vector<2x4x1x32xf32> to vector<2x4x32xf32>
    %316 = vector.shape_cast %315 : vector<2x4x32xf32> to vector<8x32xf32>
    %cst_44 = arith.constant dense<0.000000e+00> : vector<8x64xf32>
    %317 = tpu.matmul %308, %39, %cst_44 {dimension_numbers = #tpu.dot_dimension_numbers<[1], [0], [0], [1], [0, 0, 1, 1], [], []>} : vector<8x16xf32>, vector<16x64xf32>, vector<8x64xf32> -> vector<8x64xf32>
    %318 = vector.extract_strided_slice %317 {offsets = [0, 0], sizes = [8, 32], strides = [1, 1]} : vector<8x64xf32> to vector<8x32xf32>
    %319 = arith.addf %318, %313 : vector<8x32xf32>
    %320 = vector.extract_strided_slice %317 {offsets = [0, 32], sizes = [8, 32], strides = [1, 1]} : vector<8x64xf32> to vector<8x32xf32>
    %321 = arith.addf %320, %316 : vector<8x32xf32>
    %322 = vector.extract_strided_slice %319 {offsets = [0, 0], sizes = [8, 24], strides = [1, 1]} : vector<8x32xf32> to vector<8x24xf32>
    %323 = arith.negf %322 : vector<8x24xf32>
    %324 = math.exp %323 : vector<8x24xf32>
    %cst_45 = arith.constant 1.000000e+00 : f32
    %325 = vector.broadcast %cst_45 : f32 to vector<8x24xf32>
    %326 = arith.addf %325, %324 : vector<8x24xf32>
    %327 = arith.divf %325, %326 : vector<8x24xf32>
    %328 = vector.extract_strided_slice %321 {offsets = [0, 0], sizes = [8, 24], strides = [1, 1]} : vector<8x32xf32> to vector<8x24xf32>
    %329 = arith.negf %328 : vector<8x24xf32>
    %330 = math.exp %329 : vector<8x24xf32>
    %cst_46 = arith.constant 1.000000e+00 : f32
    %331 = vector.broadcast %cst_46 : f32 to vector<8x24xf32>
    %332 = arith.addf %331, %330 : vector<8x24xf32>
    %333 = arith.divf %331, %332 : vector<8x24xf32>
    %334 = vector.extract_strided_slice %319 {offsets = [0, 24], sizes = [8, 8], strides = [1, 1]} : vector<8x32xf32> to vector<8x8xf32>
    %335 = math.tanh %334 : vector<8x8xf32>
    %336 = vector.extract_strided_slice %321 {offsets = [0, 24], sizes = [8, 8], strides = [1, 1]} : vector<8x32xf32> to vector<8x8xf32>
    %337 = math.tanh %336 : vector<8x8xf32>
    %338 = vector.extract_strided_slice %327 {offsets = [0, 8], sizes = [8, 8], strides = [1, 1]} : vector<8x24xf32> to vector<8x8xf32>
    %339 = arith.mulf %338, %296 : vector<8x8xf32>
    %340 = vector.extract_strided_slice %327 {offsets = [0, 0], sizes = [8, 8], strides = [1, 1]} : vector<8x24xf32> to vector<8x8xf32>
    %341 = arith.mulf %340, %335 : vector<8x8xf32>
    %342 = arith.addf %339, %341 : vector<8x8xf32>
    %343 = vector.extract_strided_slice %333 {offsets = [0, 8], sizes = [8, 8], strides = [1, 1]} : vector<8x24xf32> to vector<8x8xf32>
    %344 = arith.mulf %343, %301 : vector<8x8xf32>
    %345 = vector.extract_strided_slice %333 {offsets = [0, 0], sizes = [8, 8], strides = [1, 1]} : vector<8x24xf32> to vector<8x8xf32>
    %346 = arith.mulf %345, %337 : vector<8x8xf32>
    %347 = arith.addf %344, %346 : vector<8x8xf32>
    %348 = vector.extract_strided_slice %327 {offsets = [0, 16], sizes = [8, 8], strides = [1, 1]} : vector<8x24xf32> to vector<8x8xf32>
    %349 = math.tanh %342 : vector<8x8xf32>
    %350 = arith.mulf %348, %349 : vector<8x8xf32>
    %351 = vector.extract_strided_slice %333 {offsets = [0, 16], sizes = [8, 8], strides = [1, 1]} : vector<8x24xf32> to vector<8x8xf32>
    %352 = math.tanh %347 : vector<8x8xf32>
    %353 = arith.mulf %351, %352 : vector<8x8xf32>
    %354 = tpu.concatenate %350, %353 in 1 : vector<8x8xf32>, vector<8x8xf32> -> vector<8x16xf32>
    %355 = vector.shape_cast %350 : vector<8x8xf32> to vector<2x4x1x8xf32>
    %356 = vector.shape_cast %353 : vector<8x8xf32> to vector<2x4x1x8xf32>
    %357 = vector.extract_strided_slice %35 {offsets = [0, 0, 3, 64], sizes = [2, 4, 1, 32], strides = [1, 1, 1, 1]} : vector<2x4x4x128xf32> to vector<2x4x1x32xf32>
    %358 = vector.shape_cast %357 : vector<2x4x1x32xf32> to vector<2x4x32xf32>
    %359 = vector.shape_cast %358 : vector<2x4x32xf32> to vector<8x32xf32>
    %360 = vector.extract_strided_slice %35 {offsets = [0, 0, 0, 96], sizes = [2, 4, 1, 32], strides = [1, 1, 1, 1]} : vector<2x4x4x128xf32> to vector<2x4x1x32xf32>
    %361 = vector.shape_cast %360 : vector<2x4x1x32xf32> to vector<2x4x32xf32>
    %362 = vector.shape_cast %361 : vector<2x4x32xf32> to vector<8x32xf32>
    %cst_47 = arith.constant dense<0.000000e+00> : vector<8x64xf32>
    %363 = tpu.matmul %354, %39, %cst_47 {dimension_numbers = #tpu.dot_dimension_numbers<[1], [0], [0], [1], [0, 0, 1, 1], [], []>} : vector<8x16xf32>, vector<16x64xf32>, vector<8x64xf32> -> vector<8x64xf32>
    %364 = vector.extract_strided_slice %363 {offsets = [0, 0], sizes = [8, 32], strides = [1, 1]} : vector<8x64xf32> to vector<8x32xf32>
    %365 = arith.addf %364, %359 : vector<8x32xf32>
    %366 = vector.extract_strided_slice %363 {offsets = [0, 32], sizes = [8, 32], strides = [1, 1]} : vector<8x64xf32> to vector<8x32xf32>
    %367 = arith.addf %366, %362 : vector<8x32xf32>
    %368 = vector.extract_strided_slice %365 {offsets = [0, 0], sizes = [8, 24], strides = [1, 1]} : vector<8x32xf32> to vector<8x24xf32>
    %369 = arith.negf %368 : vector<8x24xf32>
    %370 = math.exp %369 : vector<8x24xf32>
    %cst_48 = arith.constant 1.000000e+00 : f32
    %371 = vector.broadcast %cst_48 : f32 to vector<8x24xf32>
    %372 = arith.addf %371, %370 : vector<8x24xf32>
    %373 = arith.divf %371, %372 : vector<8x24xf32>
    %374 = vector.extract_strided_slice %367 {offsets = [0, 0], sizes = [8, 24], strides = [1, 1]} : vector<8x32xf32> to vector<8x24xf32>
    %375 = arith.negf %374 : vector<8x24xf32>
    %376 = math.exp %375 : vector<8x24xf32>
    %cst_49 = arith.constant 1.000000e+00 : f32
    %377 = vector.broadcast %cst_49 : f32 to vector<8x24xf32>
    %378 = arith.addf %377, %376 : vector<8x24xf32>
    %379 = arith.divf %377, %378 : vector<8x24xf32>
    %380 = vector.extract_strided_slice %365 {offsets = [0, 24], sizes = [8, 8], strides = [1, 1]} : vector<8x32xf32> to vector<8x8xf32>
    %381 = math.tanh %380 : vector<8x8xf32>
    %382 = vector.extract_strided_slice %367 {offsets = [0, 24], sizes = [8, 8], strides = [1, 1]} : vector<8x32xf32> to vector<8x8xf32>
    %383 = math.tanh %382 : vector<8x8xf32>
    %384 = vector.extract_strided_slice %373 {offsets = [0, 8], sizes = [8, 8], strides = [1, 1]} : vector<8x24xf32> to vector<8x8xf32>
    %385 = arith.mulf %384, %342 : vector<8x8xf32>
    %386 = vector.extract_strided_slice %373 {offsets = [0, 0], sizes = [8, 8], strides = [1, 1]} : vector<8x24xf32> to vector<8x8xf32>
    %387 = arith.mulf %386, %381 : vector<8x8xf32>
    %388 = arith.addf %385, %387 : vector<8x8xf32>
    %389 = vector.extract_strided_slice %379 {offsets = [0, 8], sizes = [8, 8], strides = [1, 1]} : vector<8x24xf32> to vector<8x8xf32>
    %390 = arith.mulf %389, %347 : vector<8x8xf32>
    %391 = vector.extract_strided_slice %379 {offsets = [0, 0], sizes = [8, 8], strides = [1, 1]} : vector<8x24xf32> to vector<8x8xf32>
    %392 = arith.mulf %391, %383 : vector<8x8xf32>
    %393 = arith.addf %390, %392 : vector<8x8xf32>
    %394 = vector.extract_strided_slice %373 {offsets = [0, 16], sizes = [8, 8], strides = [1, 1]} : vector<8x24xf32> to vector<8x8xf32>
    %395 = math.tanh %388 : vector<8x8xf32>
    %396 = arith.mulf %394, %395 : vector<8x8xf32>
    %397 = vector.extract_strided_slice %379 {offsets = [0, 16], sizes = [8, 8], strides = [1, 1]} : vector<8x24xf32> to vector<8x8xf32>
    %398 = math.tanh %393 : vector<8x8xf32>
    %399 = arith.mulf %397, %398 : vector<8x8xf32>
    %400 = vector.shape_cast %396 : vector<8x8xf32> to vector<2x4x1x8xf32>
    %401 = vector.shape_cast %399 : vector<8x8xf32> to vector<2x4x1x8xf32>
    %402 = tpu.concatenate %263, %309, %355, %400 in 2 : vector<2x4x1x8xf32>, vector<2x4x1x8xf32>, vector<2x4x1x8xf32>, vector<2x4x1x8xf32> -> vector<2x4x4x8xf32>
    %403 = tpu.concatenate %401, %356, %310, %264 in 2 : vector<2x4x1x8xf32>, vector<2x4x1x8xf32>, vector<2x4x1x8xf32>, vector<2x4x1x8xf32> -> vector<2x4x4x8xf32>
    %404 = tpu.concatenate %220, %221, %402, %403 in 3 : vector<2x4x4x8xf32>, vector<2x4x4x8xf32>, vector<2x4x4x8xf32>, vector<2x4x4x8xf32> -> vector<2x4x4x32xf32>
    %405 = vector.shape_cast %404 : vector<2x4x4x32xf32> to vector<32x32xf32>
    %c0_50 = arith.constant 0 : index
    %c0_51 = arith.constant 0 : index
    %406 = vector.load %arg7[%c0_50, %c0_51] : memref<32x16xf32, #tpu.memory_space<vmem>>, vector<32x16xf32>
    %cst_52 = arith.constant dense<0.000000e+00> : vector<32x16xf32>
    %407 = tpu.matmul %405, %406, %cst_52 {dimension_numbers = #tpu.dot_dimension_numbers<[1], [0], [0], [1], [0, 0, 1, 1], [], []>} : vector<32x32xf32>, vector<32x16xf32>, vector<32x16xf32> -> vector<32x16xf32>
    %c0_53 = arith.constant 0 : index
    %c0_54 = arith.constant 0 : index
    %408 = vector.load %arg8[%c0_53, %c0_54] : memref<1x16xf32, #tpu.memory_space<vmem>>, vector<1x16xf32>
    %409 = vector.broadcast %408 : vector<1x16xf32> to vector<32x16xf32>
    %410 = arith.addf %407, %409 : vector<32x16xf32>
    %411 = arith.addf %5, %410 : vector<32x16xf32>
    %c0_55 = arith.constant 0 : index
    %c0_56 = arith.constant 0 : index
    %412 = vector.load %arg9[%c0_55, %c0_56] : memref<2x16xf32, #tpu.memory_space<vmem>>, vector<1x16xf32>
    %c1_57 = arith.constant 1 : index
    %c0_58 = arith.constant 0 : index
    %413 = vector.load %arg9[%c1_57, %c0_58] : memref<2x16xf32, #tpu.memory_space<vmem>>, vector<1x16xf32>
    %cst_59 = arith.constant dense<0.000000e+00> : vector<32xf32>
    %414 = vector.multi_reduction <add>, %411, %cst_59 [1] : vector<32x16xf32> to vector<32xf32>
    %415 = vector.shape_cast %414 : vector<32xf32> to vector<32x1xf32>
    %cst_60 = arith.constant 1.600000e+01 : f32
    %416 = vector.broadcast %cst_60 : f32 to vector<32x1xf32>
    %417 = arith.divf %415, %416 : vector<32x1xf32>
    %418 = vector.broadcast %417 : vector<32x1xf32> to vector<32x16xf32>
    %419 = arith.subf %411, %418 : vector<32x16xf32>
    %420 = arith.mulf %419, %419 : vector<32x16xf32>
    %cst_61 = arith.constant dense<0.000000e+00> : vector<32xf32>
    %421 = vector.multi_reduction <add>, %420, %cst_61 [1] : vector<32x16xf32> to vector<32xf32>
    %422 = vector.shape_cast %421 : vector<32xf32> to vector<32x1xf32>
    %cst_62 = arith.constant 1.600000e+01 : f32
    %423 = vector.broadcast %cst_62 : f32 to vector<32x1xf32>
    %424 = arith.divf %422, %423 : vector<32x1xf32>
    %425 = vector.broadcast %417 : vector<32x1xf32> to vector<32x16xf32>
    %426 = arith.subf %411, %425 : vector<32x16xf32>
    %cst_63 = arith.constant 9.99999997E-7 : f32
    %427 = vector.broadcast %cst_63 : f32 to vector<32x1xf32>
    %428 = arith.addf %424, %427 : vector<32x1xf32>
    %429 = math.rsqrt %428 : vector<32x1xf32>
    %430 = vector.broadcast %429 : vector<32x1xf32> to vector<32x16xf32>
    %431 = arith.mulf %426, %430 : vector<32x16xf32>
    %432 = vector.broadcast %412 : vector<1x16xf32> to vector<32x16xf32>
    %433 = arith.mulf %431, %432 : vector<32x16xf32>
    %434 = vector.broadcast %413 : vector<1x16xf32> to vector<32x16xf32>
    %435 = arith.addf %433, %434 : vector<32x16xf32>
    %c0_64 = arith.constant 0 : index
    %c0_65 = arith.constant 0 : index
    %436 = vector.load %arg10[%c0_64, %c0_65] : memref<16x48xf32, #tpu.memory_space<vmem>>, vector<16x48xf32>
    %cst_66 = arith.constant dense<0.000000e+00> : vector<32x48xf32>
    %437 = tpu.matmul %435, %436, %cst_66 {dimension_numbers = #tpu.dot_dimension_numbers<[1], [0], [0], [1], [0, 0, 1, 1], [], []>} : vector<32x16xf32>, vector<16x48xf32>, vector<32x48xf32> -> vector<32x48xf32>
    %c0_67 = arith.constant 0 : index
    %c0_68 = arith.constant 0 : index
    %438 = vector.load %arg11[%c0_67, %c0_68] : memref<1x48xf32, #tpu.memory_space<vmem>>, vector<1x48xf32>
    %439 = vector.broadcast %438 : vector<1x48xf32> to vector<32x48xf32>
    %440 = arith.addf %437, %439 : vector<32x48xf32>
    %441 = arith.mulf %440, %440 : vector<32x48xf32>
    %442 = arith.mulf %440, %441 : vector<32x48xf32>
    %cst_69 = arith.constant 4.471500e-02 : f32
    %443 = vector.broadcast %cst_69 : f32 to vector<32x48xf32>
    %444 = arith.mulf %443, %442 : vector<32x48xf32>
    %445 = arith.addf %440, %444 : vector<32x48xf32>
    %cst_70 = arith.constant 0.797884583 : f32
    %446 = vector.broadcast %cst_70 : f32 to vector<32x48xf32>
    %447 = arith.mulf %446, %445 : vector<32x48xf32>
    %448 = math.tanh %447 : vector<32x48xf32>
    %cst_71 = arith.constant 1.000000e+00 : f32
    %449 = vector.broadcast %cst_71 : f32 to vector<32x48xf32>
    %450 = arith.addf %449, %448 : vector<32x48xf32>
    %cst_72 = arith.constant 5.000000e-01 : f32
    %451 = vector.broadcast %cst_72 : f32 to vector<32x48xf32>
    %452 = arith.mulf %451, %450 : vector<32x48xf32>
    %453 = arith.mulf %440, %452 : vector<32x48xf32>
    %c0_73 = arith.constant 0 : index
    %c0_74 = arith.constant 0 : index
    %454 = vector.load %arg12[%c0_73, %c0_74] : memref<48x16xf32, #tpu.memory_space<vmem>>, vector<48x16xf32>
    %cst_75 = arith.constant dense<0.000000e+00> : vector<32x16xf32>
    %455 = tpu.matmul %453, %454, %cst_75 {dimension_numbers = #tpu.dot_dimension_numbers<[1], [0], [0], [1], [0, 0, 1, 1], [], []>} : vector<32x48xf32>, vector<48x16xf32>, vector<32x16xf32> -> vector<32x16xf32>
    %c0_76 = arith.constant 0 : index
    %c0_77 = arith.constant 0 : index
    %456 = vector.load %arg13[%c0_76, %c0_77] : memref<1x16xf32, #tpu.memory_space<vmem>>, vector<1x16xf32>
    %457 = vector.broadcast %456 : vector<1x16xf32> to vector<32x16xf32>
    %458 = arith.addf %455, %457 : vector<32x16xf32>
    %459 = arith.addf %411, %458 : vector<32x16xf32>
    %c0_78 = arith.constant 0 : index
    %c0_79 = arith.constant 0 : index
    %460 = vector.load %arg14[%c0_78, %c0_79] : memref<32x16xf32, #tpu.memory_space<vmem>>, vector<32x16xf32>
    tpu.vector_store %arg14[%c0_78, %c0_79], %459 {strides = array<i32>} : memref<32x16xf32, #tpu.memory_space<vmem>>, vector<32x16xf32>,
    return
  }
}

module attributes {stable_mosaic.version = 11 : i64} {
  func.func @_stage_kernel(%arg0: memref<8x64xf32, #tpu.memory_space<vmem>>, %arg1: memref<64x32xf32, #tpu.memory_space<vmem>>, %arg2: memref<1x32xf32, #tpu.memory_space<vmem>>, %arg3: memref<2x32xf32, #tpu.memory_space<vmem>>, %arg4: memref<32x256xf32, #tpu.memory_space<vmem>>, %arg5: memref<1x256xf32, #tpu.memory_space<vmem>>, %arg6: memref<2x32x128xf32, #tpu.memory_space<vmem>>, %arg7: memref<64x32xf32, #tpu.memory_space<vmem>>, %arg8: memref<1x32xf32, #tpu.memory_space<vmem>>, %arg9: memref<2x32xf32, #tpu.memory_space<vmem>>, %arg10: memref<32x96xf32, #tpu.memory_space<vmem>>, %arg11: memref<1x96xf32, #tpu.memory_space<vmem>>, %arg12: memref<96x32xf32, #tpu.memory_space<vmem>>, %arg13: memref<1x32xf32, #tpu.memory_space<vmem>>, %arg14: memref<2x32xf32, #tpu.memory_space<vmem>>, %arg15: memref<32x10xf32, #tpu.memory_space<vmem>>, %arg16: memref<1x10xf32, #tpu.memory_space<vmem>>, %arg17: memref<2x10xf32, #tpu.memory_space<vmem>>) attributes {dimension_semantics = [], scalar_prefetch = 0 : i64, scratch_operands = 0 : i64, tpu.core_type = #tpu.core_type<tc>} {
    %c0 = arith.constant 0 : index
    %c0_0 = arith.constant 0 : index
    %0 = vector.load %arg0[%c0, %c0_0] : memref<8x64xf32, #tpu.memory_space<vmem>>, vector<8x64xf32>
    %c0_1 = arith.constant 0 : index
    %c0_2 = arith.constant 0 : index
    %1 = vector.load %arg1[%c0_1, %c0_2] : memref<64x32xf32, #tpu.memory_space<vmem>>, vector<64x32xf32>
    %cst = arith.constant dense<0.000000e+00> : vector<8x32xf32>
    %2 = tpu.matmul %0, %1, %cst {dimension_numbers = #tpu.dot_dimension_numbers<[1], [0], [0], [1], [0, 0, 1, 1], [], []>} : vector<8x64xf32>, vector<64x32xf32>, vector<8x32xf32> -> vector<8x32xf32>
    %c0_3 = arith.constant 0 : index
    %c0_4 = arith.constant 0 : index
    %3 = vector.load %arg2[%c0_3, %c0_4] : memref<1x32xf32, #tpu.memory_space<vmem>>, vector<1x32xf32>
    %4 = vector.broadcast %3 : vector<1x32xf32> to vector<8x32xf32>
    %5 = arith.addf %2, %4 : vector<8x32xf32>
    %c0_5 = arith.constant 0 : index
    %c0_6 = arith.constant 0 : index
    %6 = vector.load %arg3[%c0_5, %c0_6] : memref<2x32xf32, #tpu.memory_space<vmem>>, vector<1x32xf32>
    %c1 = arith.constant 1 : index
    %c0_7 = arith.constant 0 : index
    %7 = vector.load %arg3[%c1, %c0_7] : memref<2x32xf32, #tpu.memory_space<vmem>>, vector<1x32xf32>
    %cst_8 = arith.constant dense<0.000000e+00> : vector<8xf32>
    %8 = vector.multi_reduction <add>, %5, %cst_8 [1] : vector<8x32xf32> to vector<8xf32>
    %9 = vector.shape_cast %8 : vector<8xf32> to vector<8x1xf32>
    %cst_9 = arith.constant 3.200000e+01 : f32
    %10 = vector.broadcast %cst_9 : f32 to vector<8x1xf32>
    %11 = arith.divf %9, %10 : vector<8x1xf32>
    %12 = vector.broadcast %11 : vector<8x1xf32> to vector<8x32xf32>
    %13 = arith.subf %5, %12 : vector<8x32xf32>
    %14 = arith.mulf %13, %13 : vector<8x32xf32>
    %cst_10 = arith.constant dense<0.000000e+00> : vector<8xf32>
    %15 = vector.multi_reduction <add>, %14, %cst_10 [1] : vector<8x32xf32> to vector<8xf32>
    %16 = vector.shape_cast %15 : vector<8xf32> to vector<8x1xf32>
    %cst_11 = arith.constant 3.200000e+01 : f32
    %17 = vector.broadcast %cst_11 : f32 to vector<8x1xf32>
    %18 = arith.divf %16, %17 : vector<8x1xf32>
    %19 = vector.broadcast %11 : vector<8x1xf32> to vector<8x32xf32>
    %20 = arith.subf %5, %19 : vector<8x32xf32>
    %cst_12 = arith.constant 9.99999997E-7 : f32
    %21 = vector.broadcast %cst_12 : f32 to vector<8x1xf32>
    %22 = arith.addf %18, %21 : vector<8x1xf32>
    %23 = math.rsqrt %22 : vector<8x1xf32>
    %24 = vector.broadcast %23 : vector<8x1xf32> to vector<8x32xf32>
    %25 = arith.mulf %20, %24 : vector<8x32xf32>
    %26 = vector.broadcast %6 : vector<1x32xf32> to vector<8x32xf32>
    %27 = arith.mulf %25, %26 : vector<8x32xf32>
    %28 = vector.broadcast %7 : vector<1x32xf32> to vector<8x32xf32>
    %29 = arith.addf %27, %28 : vector<8x32xf32>
    %c0_13 = arith.constant 0 : index
    %c0_14 = arith.constant 0 : index
    %30 = vector.load %arg4[%c0_13, %c0_14] : memref<32x256xf32, #tpu.memory_space<vmem>>, vector<32x256xf32>
    %cst_15 = arith.constant dense<0.000000e+00> : vector<8x256xf32>
    %31 = tpu.matmul %29, %30, %cst_15 {dimension_numbers = #tpu.dot_dimension_numbers<[1], [0], [0], [1], [0, 0, 1, 1], [], []>} : vector<8x32xf32>, vector<32x256xf32>, vector<8x256xf32> -> vector<8x256xf32>
    %c0_16 = arith.constant 0 : index
    %c0_17 = arith.constant 0 : index
    %32 = vector.load %arg5[%c0_16, %c0_17] : memref<1x256xf32, #tpu.memory_space<vmem>>, vector<1x256xf32>
    %33 = vector.broadcast %32 : vector<1x256xf32> to vector<8x256xf32>
    %34 = arith.addf %31, %33 : vector<8x256xf32>
    %35 = vector.shape_cast %34 : vector<8x256xf32> to vector<2x2x2x256xf32>
    %c0_18 = arith.constant 0 : index
    %c0_19 = arith.constant 0 : index
    %c0_20 = arith.constant 0 : index
    %36 = vector.load %arg6[%c0_18, %c0_19, %c0_20] : memref<2x32x128xf32, #tpu.memory_space<vmem>>, vector<1x32x128xf32>
    %37 = vector.shape_cast %36 : vector<1x32x128xf32> to vector<32x128xf32>
    %c1_21 = arith.constant 1 : index
    %c0_22 = arith.constant 0 : index
    %c0_23 = arith.constant 0 : index
    %38 = vector.load %arg6[%c1_21, %c0_22, %c0_23] : memref<2x32x128xf32, #tpu.memory_space<vmem>>, vector<1x32x128xf32>
    %39 = vector.shape_cast %38 : vector<1x32x128xf32> to vector<32x128xf32>
    %cst_24 = arith.constant 0.000000e+00 : f32
    %40 = vector.broadcast %cst_24 : f32 to vector<4x16xf32>
    %cst_25 = arith.constant 0.000000e+00 : f32
    %41 = vector.broadcast %cst_25 : f32 to vector<4x16xf32>
    %42 = vector.extract_strided_slice %35 {offsets = [0, 0, 0, 0], sizes = [2, 1, 2, 64], strides = [1, 1, 1, 1]} : vector<2x2x2x256xf32> to vector<2x1x2x64xf32>
    %43 = vector.shape_cast %42 : vector<2x1x2x64xf32> to vector<2x2x64xf32>
    %44 = vector.shape_cast %43 : vector<2x2x64xf32> to vector<4x64xf32>
    %45 = vector.extract_strided_slice %35 {offsets = [0, 1, 0, 64], sizes = [2, 1, 2, 64], strides = [1, 1, 1, 1]} : vector<2x2x2x256xf32> to vector<2x1x2x64xf32>
    %46 = vector.shape_cast %45 : vector<2x1x2x64xf32> to vector<2x2x64xf32>
    %47 = vector.shape_cast %46 : vector<2x2x64xf32> to vector<4x64xf32>
    %48 = vector.extract_strided_slice %44 {offsets = [0, 0], sizes = [4, 48], strides = [1, 1]} : vector<4x64xf32> to vector<4x48xf32>
    %49 = arith.negf %48 : vector<4x48xf32>
    %50 = math.exp %49 : vector<4x48xf32>
    %cst_26 = arith.constant 1.000000e+00 : f32
    %51 = vector.broadcast %cst_26 : f32 to vector<4x48xf32>
    %52 = arith.addf %51, %50 : vector<4x48xf32>
    %53 = arith.divf %51, %52 : vector<4x48xf32>
    %54 = vector.extract_strided_slice %47 {offsets = [0, 0], sizes = [4, 48], strides = [1, 1]} : vector<4x64xf32> to vector<4x48xf32>
    %55 = arith.negf %54 : vector<4x48xf32>
    %56 = math.exp %55 : vector<4x48xf32>
    %cst_27 = arith.constant 1.000000e+00 : f32
    %57 = vector.broadcast %cst_27 : f32 to vector<4x48xf32>
    %58 = arith.addf %57, %56 : vector<4x48xf32>
    %59 = arith.divf %57, %58 : vector<4x48xf32>
    %60 = vector.extract_strided_slice %44 {offsets = [0, 48], sizes = [4, 16], strides = [1, 1]} : vector<4x64xf32> to vector<4x16xf32>
    %61 = math.tanh %60 : vector<4x16xf32>
    %62 = vector.extract_strided_slice %47 {offsets = [0, 48], sizes = [4, 16], strides = [1, 1]} : vector<4x64xf32> to vector<4x16xf32>
    %63 = math.tanh %62 : vector<4x16xf32>
    %64 = vector.extract_strided_slice %53 {offsets = [0, 16], sizes = [4, 16], strides = [1, 1]} : vector<4x48xf32> to vector<4x16xf32>
    %65 = arith.mulf %64, %40 : vector<4x16xf32>
    %66 = vector.extract_strided_slice %53 {offsets = [0, 0], sizes = [4, 16], strides = [1, 1]} : vector<4x48xf32> to vector<4x16xf32>
    %67 = arith.mulf %66, %61 : vector<4x16xf32>
    %68 = arith.addf %65, %67 : vector<4x16xf32>
    %69 = vector.extract_strided_slice %59 {offsets = [0, 16], sizes = [4, 16], strides = [1, 1]} : vector<4x48xf32> to vector<4x16xf32>
    %70 = arith.mulf %69, %41 : vector<4x16xf32>
    %71 = vector.extract_strided_slice %59 {offsets = [0, 0], sizes = [4, 16], strides = [1, 1]} : vector<4x48xf32> to vector<4x16xf32>
    %72 = arith.mulf %71, %63 : vector<4x16xf32>
    %73 = arith.addf %70, %72 : vector<4x16xf32>
    %74 = vector.extract_strided_slice %53 {offsets = [0, 32], sizes = [4, 16], strides = [1, 1]} : vector<4x48xf32> to vector<4x16xf32>
    %75 = math.tanh %68 : vector<4x16xf32>
    %76 = arith.mulf %74, %75 : vector<4x16xf32>
    %77 = vector.extract_strided_slice %59 {offsets = [0, 32], sizes = [4, 16], strides = [1, 1]} : vector<4x48xf32> to vector<4x16xf32>
    %78 = math.tanh %73 : vector<4x16xf32>
    %79 = arith.mulf %77, %78 : vector<4x16xf32>
    %80 = tpu.concatenate %76, %79 in 1 : vector<4x16xf32>, vector<4x16xf32> -> vector<4x32xf32>
    %81 = vector.shape_cast %76 : vector<4x16xf32> to vector<2x1x2x16xf32>
    %82 = vector.shape_cast %79 : vector<4x16xf32> to vector<2x1x2x16xf32>
    %83 = vector.extract_strided_slice %35 {offsets = [0, 1, 0, 0], sizes = [2, 1, 2, 64], strides = [1, 1, 1, 1]} : vector<2x2x2x256xf32> to vector<2x1x2x64xf32>
    %84 = vector.shape_cast %83 : vector<2x1x2x64xf32> to vector<2x2x64xf32>
    %85 = vector.shape_cast %84 : vector<2x2x64xf32> to vector<4x64xf32>
    %86 = vector.extract_strided_slice %35 {offsets = [0, 0, 0, 64], sizes = [2, 1, 2, 64], strides = [1, 1, 1, 1]} : vector<2x2x2x256xf32> to vector<2x1x2x64xf32>
    %87 = vector.shape_cast %86 : vector<2x1x2x64xf32> to vector<2x2x64xf32>
    %88 = vector.shape_cast %87 : vector<2x2x64xf32> to vector<4x64xf32>
    %cst_28 = arith.constant dense<0.000000e+00> : vector<4x128xf32>
    %89 = tpu.matmul %80, %37, %cst_28 {dimension_numbers = #tpu.dot_dimension_numbers<[1], [0], [0], [1], [0, 0, 1, 1], [], []>} : vector<4x32xf32>, vector<32x128xf32>, vector<4x128xf32> -> vector<4x128xf32>
    %90 = vector.extract_strided_slice %89 {offsets = [0, 0], sizes = [4, 64], strides = [1, 1]} : vector<4x128xf32> to vector<4x64xf32>
    %91 = arith.addf %90, %85 : vector<4x64xf32>
    %92 = vector.extract_strided_slice %89 {offsets = [0, 64], sizes = [4, 64], strides = [1, 1]} : vector<4x128xf32> to vector<4x64xf32>
    %93 = arith.addf %92, %88 : vector<4x64xf32>
    %94 = vector.extract_strided_slice %91 {offsets = [0, 0], sizes = [4, 48], strides = [1, 1]} : vector<4x64xf32> to vector<4x48xf32>
    %95 = arith.negf %94 : vector<4x48xf32>
    %96 = math.exp %95 : vector<4x48xf32>
    %cst_29 = arith.constant 1.000000e+00 : f32
    %97 = vector.broadcast %cst_29 : f32 to vector<4x48xf32>
    %98 = arith.addf %97, %96 : vector<4x48xf32>
    %99 = arith.divf %97, %98 : vector<4x48xf32>
    %100 = vector.extract_strided_slice %93 {offsets = [0, 0], sizes = [4, 48], strides = [1, 1]} : vector<4x64xf32> to vector<4x48xf32>
    %101 = arith.negf %100 : vector<4x48xf32>
    %102 = math.exp %101 : vector<4x48xf32>
    %cst_30 = arith.constant 1.000000e+00 : f32
    %103 = vector.broadcast %cst_30 : f32 to vector<4x48xf32>
    %104 = arith.addf %103, %102 : vector<4x48xf32>
    %105 = arith.divf %103, %104 : vector<4x48xf32>
    %106 = vector.extract_strided_slice %91 {offsets = [0, 48], sizes = [4, 16], strides = [1, 1]} : vector<4x64xf32> to vector<4x16xf32>
    %107 = math.tanh %106 : vector<4x16xf32>
    %108 = vector.extract_strided_slice %93 {offsets = [0, 48], sizes = [4, 16], strides = [1, 1]} : vector<4x64xf32> to vector<4x16xf32>
    %109 = math.tanh %108 : vector<4x16xf32>
    %110 = vector.extract_strided_slice %99 {offsets = [0, 16], sizes = [4, 16], strides = [1, 1]} : vector<4x48xf32> to vector<4x16xf32>
    %111 = arith.mulf %110, %68 : vector<4x16xf32>
    %112 = vector.extract_strided_slice %99 {offsets = [0, 0], sizes = [4, 16], strides = [1, 1]} : vector<4x48xf32> to vector<4x16xf32>
    %113 = arith.mulf %112, %107 : vector<4x16xf32>
    %114 = arith.addf %111, %113 : vector<4x16xf32>
    %115 = vector.extract_strided_slice %105 {offsets = [0, 16], sizes = [4, 16], strides = [1, 1]} : vector<4x48xf32> to vector<4x16xf32>
    %116 = arith.mulf %115, %73 : vector<4x16xf32>
    %117 = vector.extract_strided_slice %105 {offsets = [0, 0], sizes = [4, 16], strides = [1, 1]} : vector<4x48xf32> to vector<4x16xf32>
    %118 = arith.mulf %117, %109 : vector<4x16xf32>
    %119 = arith.addf %116, %118 : vector<4x16xf32>
    %120 = vector.extract_strided_slice %99 {offsets = [0, 32], sizes = [4, 16], strides = [1, 1]} : vector<4x48xf32> to vector<4x16xf32>
    %121 = math.tanh %114 : vector<4x16xf32>
    %122 = arith.mulf %120, %121 : vector<4x16xf32>
    %123 = vector.extract_strided_slice %105 {offsets = [0, 32], sizes = [4, 16], strides = [1, 1]} : vector<4x48xf32> to vector<4x16xf32>
    %124 = math.tanh %119 : vector<4x16xf32>
    %125 = arith.mulf %123, %124 : vector<4x16xf32>
    %126 = vector.shape_cast %122 : vector<4x16xf32> to vector<2x1x2x16xf32>
    %127 = vector.shape_cast %125 : vector<4x16xf32> to vector<2x1x2x16xf32>
    %128 = tpu.concatenate %81, %126 in 1 : vector<2x1x2x16xf32>, vector<2x1x2x16xf32> -> vector<2x2x2x16xf32>
    %129 = tpu.concatenate %127, %82 in 1 : vector<2x1x2x16xf32>, vector<2x1x2x16xf32> -> vector<2x2x2x16xf32>
    %cst_31 = arith.constant 0.000000e+00 : f32
    %130 = vector.broadcast %cst_31 : f32 to vector<4x16xf32>
    %cst_32 = arith.constant 0.000000e+00 : f32
    %131 = vector.broadcast %cst_32 : f32 to vector<4x16xf32>
    %132 = vector.extract_strided_slice %35 {offsets = [0, 0, 0, 128], sizes = [2, 2, 1, 64], strides = [1, 1, 1, 1]} : vector<2x2x2x256xf32> to vector<2x2x1x64xf32>
    %133 = vector.shape_cast %132 : vector<2x2x1x64xf32> to vector<2x2x64xf32>
    %134 = vector.shape_cast %133 : vector<2x2x64xf32> to vector<4x64xf32>
    %135 = vector.extract_strided_slice %35 {offsets = [0, 0, 1, 192], sizes = [2, 2, 1, 64], strides = [1, 1, 1, 1]} : vector<2x2x2x256xf32> to vector<2x2x1x64xf32>
    %136 = vector.shape_cast %135 : vector<2x2x1x64xf32> to vector<2x2x64xf32>
    %137 = vector.shape_cast %136 : vector<2x2x64xf32> to vector<4x64xf32>
    %138 = vector.extract_strided_slice %134 {offsets = [0, 0], sizes = [4, 48], strides = [1, 1]} : vector<4x64xf32> to vector<4x48xf32>
    %139 = arith.negf %138 : vector<4x48xf32>
    %140 = math.exp %139 : vector<4x48xf32>
    %cst_33 = arith.constant 1.000000e+00 : f32
    %141 = vector.broadcast %cst_33 : f32 to vector<4x48xf32>
    %142 = arith.addf %141, %140 : vector<4x48xf32>
    %143 = arith.divf %141, %142 : vector<4x48xf32>
    %144 = vector.extract_strided_slice %137 {offsets = [0, 0], sizes = [4, 48], strides = [1, 1]} : vector<4x64xf32> to vector<4x48xf32>
    %145 = arith.negf %144 : vector<4x48xf32>
    %146 = math.exp %145 : vector<4x48xf32>
    %cst_34 = arith.constant 1.000000e+00 : f32
    %147 = vector.broadcast %cst_34 : f32 to vector<4x48xf32>
    %148 = arith.addf %147, %146 : vector<4x48xf32>
    %149 = arith.divf %147, %148 : vector<4x48xf32>
    %150 = vector.extract_strided_slice %134 {offsets = [0, 48], sizes = [4, 16], strides = [1, 1]} : vector<4x64xf32> to vector<4x16xf32>
    %151 = math.tanh %150 : vector<4x16xf32>
    %152 = vector.extract_strided_slice %137 {offsets = [0, 48], sizes = [4, 16], strides = [1, 1]} : vector<4x64xf32> to vector<4x16xf32>
    %153 = math.tanh %152 : vector<4x16xf32>
    %154 = vector.extract_strided_slice %143 {offsets = [0, 16], sizes = [4, 16], strides = [1, 1]} : vector<4x48xf32> to vector<4x16xf32>
    %155 = arith.mulf %154, %130 : vector<4x16xf32>
    %156 = vector.extract_strided_slice %143 {offsets = [0, 0], sizes = [4, 16], strides = [1, 1]} : vector<4x48xf32> to vector<4x16xf32>
    %157 = arith.mulf %156, %151 : vector<4x16xf32>
    %158 = arith.addf %155, %157 : vector<4x16xf32>
    %159 = vector.extract_strided_slice %149 {offsets = [0, 16], sizes = [4, 16], strides = [1, 1]} : vector<4x48xf32> to vector<4x16xf32>
    %160 = arith.mulf %159, %131 : vector<4x16xf32>
    %161 = vector.extract_strided_slice %149 {offsets = [0, 0], sizes = [4, 16], strides = [1, 1]} : vector<4x48xf32> to vector<4x16xf32>
    %162 = arith.mulf %161, %153 : vector<4x16xf32>
    %163 = arith.addf %160, %162 : vector<4x16xf32>
    %164 = vector.extract_strided_slice %143 {offsets = [0, 32], sizes = [4, 16], strides = [1, 1]} : vector<4x48xf32> to vector<4x16xf32>
    %165 = math.tanh %158 : vector<4x16xf32>
    %166 = arith.mulf %164, %165 : vector<4x16xf32>
    %167 = vector.extract_strided_slice %149 {offsets = [0, 32], sizes = [4, 16], strides = [1, 1]} : vector<4x48xf32> to vector<4x16xf32>
    %168 = math.tanh %163 : vector<4x16xf32>
    %169 = arith.mulf %167, %168 : vector<4x16xf32>
    %170 = tpu.concatenate %166, %169 in 1 : vector<4x16xf32>, vector<4x16xf32> -> vector<4x32xf32>
    %171 = vector.shape_cast %166 : vector<4x16xf32> to vector<2x2x1x16xf32>
    %172 = vector.shape_cast %169 : vector<4x16xf32> to vector<2x2x1x16xf32>
    %173 = vector.extract_strided_slice %35 {offsets = [0, 0, 1, 128], sizes = [2, 2, 1, 64], strides = [1, 1, 1, 1]} : vector<2x2x2x256xf32> to vector<2x2x1x64xf32>
    %174 = vector.shape_cast %173 : vector<2x2x1x64xf32> to vector<2x2x64xf32>
    %175 = vector.shape_cast %174 : vector<2x2x64xf32> to vector<4x64xf32>
    %176 = vector.extract_strided_slice %35 {offsets = [0, 0, 0, 192], sizes = [2, 2, 1, 64], strides = [1, 1, 1, 1]} : vector<2x2x2x256xf32> to vector<2x2x1x64xf32>
    %177 = vector.shape_cast %176 : vector<2x2x1x64xf32> to vector<2x2x64xf32>
    %178 = vector.shape_cast %177 : vector<2x2x64xf32> to vector<4x64xf32>
    %cst_35 = arith.constant dense<0.000000e+00> : vector<4x128xf32>
    %179 = tpu.matmul %170, %39, %cst_35 {dimension_numbers = #tpu.dot_dimension_numbers<[1], [0], [0], [1], [0, 0, 1, 1], [], []>} : vector<4x32xf32>, vector<32x128xf32>, vector<4x128xf32> -> vector<4x128xf32>
    %180 = vector.extract_strided_slice %179 {offsets = [0, 0], sizes = [4, 64], strides = [1, 1]} : vector<4x128xf32> to vector<4x64xf32>
    %181 = arith.addf %180, %175 : vector<4x64xf32>
    %182 = vector.extract_strided_slice %179 {offsets = [0, 64], sizes = [4, 64], strides = [1, 1]} : vector<4x128xf32> to vector<4x64xf32>
    %183 = arith.addf %182, %178 : vector<4x64xf32>
    %184 = vector.extract_strided_slice %181 {offsets = [0, 0], sizes = [4, 48], strides = [1, 1]} : vector<4x64xf32> to vector<4x48xf32>
    %185 = arith.negf %184 : vector<4x48xf32>
    %186 = math.exp %185 : vector<4x48xf32>
    %cst_36 = arith.constant 1.000000e+00 : f32
    %187 = vector.broadcast %cst_36 : f32 to vector<4x48xf32>
    %188 = arith.addf %187, %186 : vector<4x48xf32>
    %189 = arith.divf %187, %188 : vector<4x48xf32>
    %190 = vector.extract_strided_slice %183 {offsets = [0, 0], sizes = [4, 48], strides = [1, 1]} : vector<4x64xf32> to vector<4x48xf32>
    %191 = arith.negf %190 : vector<4x48xf32>
    %192 = math.exp %191 : vector<4x48xf32>
    %cst_37 = arith.constant 1.000000e+00 : f32
    %193 = vector.broadcast %cst_37 : f32 to vector<4x48xf32>
    %194 = arith.addf %193, %192 : vector<4x48xf32>
    %195 = arith.divf %193, %194 : vector<4x48xf32>
    %196 = vector.extract_strided_slice %181 {offsets = [0, 48], sizes = [4, 16], strides = [1, 1]} : vector<4x64xf32> to vector<4x16xf32>
    %197 = math.tanh %196 : vector<4x16xf32>
    %198 = vector.extract_strided_slice %183 {offsets = [0, 48], sizes = [4, 16], strides = [1, 1]} : vector<4x64xf32> to vector<4x16xf32>
    %199 = math.tanh %198 : vector<4x16xf32>
    %200 = vector.extract_strided_slice %189 {offsets = [0, 16], sizes = [4, 16], strides = [1, 1]} : vector<4x48xf32> to vector<4x16xf32>
    %201 = arith.mulf %200, %158 : vector<4x16xf32>
    %202 = vector.extract_strided_slice %189 {offsets = [0, 0], sizes = [4, 16], strides = [1, 1]} : vector<4x48xf32> to vector<4x16xf32>
    %203 = arith.mulf %202, %197 : vector<4x16xf32>
    %204 = arith.addf %201, %203 : vector<4x16xf32>
    %205 = vector.extract_strided_slice %195 {offsets = [0, 16], sizes = [4, 16], strides = [1, 1]} : vector<4x48xf32> to vector<4x16xf32>
    %206 = arith.mulf %205, %163 : vector<4x16xf32>
    %207 = vector.extract_strided_slice %195 {offsets = [0, 0], sizes = [4, 16], strides = [1, 1]} : vector<4x48xf32> to vector<4x16xf32>
    %208 = arith.mulf %207, %199 : vector<4x16xf32>
    %209 = arith.addf %206, %208 : vector<4x16xf32>
    %210 = vector.extract_strided_slice %189 {offsets = [0, 32], sizes = [4, 16], strides = [1, 1]} : vector<4x48xf32> to vector<4x16xf32>
    %211 = math.tanh %204 : vector<4x16xf32>
    %212 = arith.mulf %210, %211 : vector<4x16xf32>
    %213 = vector.extract_strided_slice %195 {offsets = [0, 32], sizes = [4, 16], strides = [1, 1]} : vector<4x48xf32> to vector<4x16xf32>
    %214 = math.tanh %209 : vector<4x16xf32>
    %215 = arith.mulf %213, %214 : vector<4x16xf32>
    %216 = vector.shape_cast %212 : vector<4x16xf32> to vector<2x2x1x16xf32>
    %217 = vector.shape_cast %215 : vector<4x16xf32> to vector<2x2x1x16xf32>
    %218 = tpu.concatenate %171, %216 in 2 : vector<2x2x1x16xf32>, vector<2x2x1x16xf32> -> vector<2x2x2x16xf32>
    %219 = tpu.concatenate %217, %172 in 2 : vector<2x2x1x16xf32>, vector<2x2x1x16xf32> -> vector<2x2x2x16xf32>
    %220 = tpu.concatenate %128, %129, %218, %219 in 3 : vector<2x2x2x16xf32>, vector<2x2x2x16xf32>, vector<2x2x2x16xf32>, vector<2x2x2x16xf32> -> vector<2x2x2x64xf32>
    %221 = vector.shape_cast %220 : vector<2x2x2x64xf32> to vector<8x64xf32>
    %c0_38 = arith.constant 0 : index
    %c0_39 = arith.constant 0 : index
    %222 = vector.load %arg7[%c0_38, %c0_39] : memref<64x32xf32, #tpu.memory_space<vmem>>, vector<64x32xf32>
    %cst_40 = arith.constant dense<0.000000e+00> : vector<8x32xf32>
    %223 = tpu.matmul %221, %222, %cst_40 {dimension_numbers = #tpu.dot_dimension_numbers<[1], [0], [0], [1], [0, 0, 1, 1], [], []>} : vector<8x64xf32>, vector<64x32xf32>, vector<8x32xf32> -> vector<8x32xf32>
    %c0_41 = arith.constant 0 : index
    %c0_42 = arith.constant 0 : index
    %224 = vector.load %arg8[%c0_41, %c0_42] : memref<1x32xf32, #tpu.memory_space<vmem>>, vector<1x32xf32>
    %225 = vector.broadcast %224 : vector<1x32xf32> to vector<8x32xf32>
    %226 = arith.addf %223, %225 : vector<8x32xf32>
    %227 = arith.addf %5, %226 : vector<8x32xf32>
    %c0_43 = arith.constant 0 : index
    %c0_44 = arith.constant 0 : index
    %228 = vector.load %arg9[%c0_43, %c0_44] : memref<2x32xf32, #tpu.memory_space<vmem>>, vector<1x32xf32>
    %c1_45 = arith.constant 1 : index
    %c0_46 = arith.constant 0 : index
    %229 = vector.load %arg9[%c1_45, %c0_46] : memref<2x32xf32, #tpu.memory_space<vmem>>, vector<1x32xf32>
    %cst_47 = arith.constant dense<0.000000e+00> : vector<8xf32>
    %230 = vector.multi_reduction <add>, %227, %cst_47 [1] : vector<8x32xf32> to vector<8xf32>
    %231 = vector.shape_cast %230 : vector<8xf32> to vector<8x1xf32>
    %cst_48 = arith.constant 3.200000e+01 : f32
    %232 = vector.broadcast %cst_48 : f32 to vector<8x1xf32>
    %233 = arith.divf %231, %232 : vector<8x1xf32>
    %234 = vector.broadcast %233 : vector<8x1xf32> to vector<8x32xf32>
    %235 = arith.subf %227, %234 : vector<8x32xf32>
    %236 = arith.mulf %235, %235 : vector<8x32xf32>
    %cst_49 = arith.constant dense<0.000000e+00> : vector<8xf32>
    %237 = vector.multi_reduction <add>, %236, %cst_49 [1] : vector<8x32xf32> to vector<8xf32>
    %238 = vector.shape_cast %237 : vector<8xf32> to vector<8x1xf32>
    %cst_50 = arith.constant 3.200000e+01 : f32
    %239 = vector.broadcast %cst_50 : f32 to vector<8x1xf32>
    %240 = arith.divf %238, %239 : vector<8x1xf32>
    %241 = vector.broadcast %233 : vector<8x1xf32> to vector<8x32xf32>
    %242 = arith.subf %227, %241 : vector<8x32xf32>
    %cst_51 = arith.constant 9.99999997E-7 : f32
    %243 = vector.broadcast %cst_51 : f32 to vector<8x1xf32>
    %244 = arith.addf %240, %243 : vector<8x1xf32>
    %245 = math.rsqrt %244 : vector<8x1xf32>
    %246 = vector.broadcast %245 : vector<8x1xf32> to vector<8x32xf32>
    %247 = arith.mulf %242, %246 : vector<8x32xf32>
    %248 = vector.broadcast %228 : vector<1x32xf32> to vector<8x32xf32>
    %249 = arith.mulf %247, %248 : vector<8x32xf32>
    %250 = vector.broadcast %229 : vector<1x32xf32> to vector<8x32xf32>
    %251 = arith.addf %249, %250 : vector<8x32xf32>
    %c0_52 = arith.constant 0 : index
    %c0_53 = arith.constant 0 : index
    %252 = vector.load %arg10[%c0_52, %c0_53] : memref<32x96xf32, #tpu.memory_space<vmem>>, vector<32x96xf32>
    %cst_54 = arith.constant dense<0.000000e+00> : vector<8x96xf32>
    %253 = tpu.matmul %251, %252, %cst_54 {dimension_numbers = #tpu.dot_dimension_numbers<[1], [0], [0], [1], [0, 0, 1, 1], [], []>} : vector<8x32xf32>, vector<32x96xf32>, vector<8x96xf32> -> vector<8x96xf32>
    %c0_55 = arith.constant 0 : index
    %c0_56 = arith.constant 0 : index
    %254 = vector.load %arg11[%c0_55, %c0_56] : memref<1x96xf32, #tpu.memory_space<vmem>>, vector<1x96xf32>
    %255 = vector.broadcast %254 : vector<1x96xf32> to vector<8x96xf32>
    %256 = arith.addf %253, %255 : vector<8x96xf32>
    %257 = arith.mulf %256, %256 : vector<8x96xf32>
    %258 = arith.mulf %256, %257 : vector<8x96xf32>
    %cst_57 = arith.constant 4.471500e-02 : f32
    %259 = vector.broadcast %cst_57 : f32 to vector<8x96xf32>
    %260 = arith.mulf %259, %258 : vector<8x96xf32>
    %261 = arith.addf %256, %260 : vector<8x96xf32>
    %cst_58 = arith.constant 0.797884583 : f32
    %262 = vector.broadcast %cst_58 : f32 to vector<8x96xf32>
    %263 = arith.mulf %262, %261 : vector<8x96xf32>
    %264 = math.tanh %263 : vector<8x96xf32>
    %cst_59 = arith.constant 1.000000e+00 : f32
    %265 = vector.broadcast %cst_59 : f32 to vector<8x96xf32>
    %266 = arith.addf %265, %264 : vector<8x96xf32>
    %cst_60 = arith.constant 5.000000e-01 : f32
    %267 = vector.broadcast %cst_60 : f32 to vector<8x96xf32>
    %268 = arith.mulf %267, %266 : vector<8x96xf32>
    %269 = arith.mulf %256, %268 : vector<8x96xf32>
    %c0_61 = arith.constant 0 : index
    %c0_62 = arith.constant 0 : index
    %270 = vector.load %arg12[%c0_61, %c0_62] : memref<96x32xf32, #tpu.memory_space<vmem>>, vector<96x32xf32>
    %cst_63 = arith.constant dense<0.000000e+00> : vector<8x32xf32>
    %271 = tpu.matmul %269, %270, %cst_63 {dimension_numbers = #tpu.dot_dimension_numbers<[1], [0], [0], [1], [0, 0, 1, 1], [], []>} : vector<8x96xf32>, vector<96x32xf32>, vector<8x32xf32> -> vector<8x32xf32>
    %c0_64 = arith.constant 0 : index
    %c0_65 = arith.constant 0 : index
    %272 = vector.load %arg13[%c0_64, %c0_65] : memref<1x32xf32, #tpu.memory_space<vmem>>, vector<1x32xf32>
    %273 = vector.broadcast %272 : vector<1x32xf32> to vector<8x32xf32>
    %274 = arith.addf %271, %273 : vector<8x32xf32>
    %275 = arith.addf %227, %274 : vector<8x32xf32>
    %c0_66 = arith.constant 0 : index
    %c0_67 = arith.constant 0 : index
    %276 = vector.load %arg14[%c0_66, %c0_67] : memref<2x32xf32, #tpu.memory_space<vmem>>, vector<1x32xf32>
    %c1_68 = arith.constant 1 : index
    %c0_69 = arith.constant 0 : index
    %277 = vector.load %arg14[%c1_68, %c0_69] : memref<2x32xf32, #tpu.memory_space<vmem>>, vector<1x32xf32>
    %cst_70 = arith.constant dense<0.000000e+00> : vector<8xf32>
    %278 = vector.multi_reduction <add>, %275, %cst_70 [1] : vector<8x32xf32> to vector<8xf32>
    %279 = vector.shape_cast %278 : vector<8xf32> to vector<8x1xf32>
    %cst_71 = arith.constant 3.200000e+01 : f32
    %280 = vector.broadcast %cst_71 : f32 to vector<8x1xf32>
    %281 = arith.divf %279, %280 : vector<8x1xf32>
    %282 = vector.broadcast %281 : vector<8x1xf32> to vector<8x32xf32>
    %283 = arith.subf %275, %282 : vector<8x32xf32>
    %284 = arith.mulf %283, %283 : vector<8x32xf32>
    %cst_72 = arith.constant dense<0.000000e+00> : vector<8xf32>
    %285 = vector.multi_reduction <add>, %284, %cst_72 [1] : vector<8x32xf32> to vector<8xf32>
    %286 = vector.shape_cast %285 : vector<8xf32> to vector<8x1xf32>
    %cst_73 = arith.constant 3.200000e+01 : f32
    %287 = vector.broadcast %cst_73 : f32 to vector<8x1xf32>
    %288 = arith.divf %286, %287 : vector<8x1xf32>
    %289 = vector.broadcast %281 : vector<8x1xf32> to vector<8x32xf32>
    %290 = arith.subf %275, %289 : vector<8x32xf32>
    %cst_74 = arith.constant 9.99999997E-7 : f32
    %291 = vector.broadcast %cst_74 : f32 to vector<8x1xf32>
    %292 = arith.addf %288, %291 : vector<8x1xf32>
    %293 = math.rsqrt %292 : vector<8x1xf32>
    %294 = vector.broadcast %293 : vector<8x1xf32> to vector<8x32xf32>
    %295 = arith.mulf %290, %294 : vector<8x32xf32>
    %296 = vector.broadcast %276 : vector<1x32xf32> to vector<8x32xf32>
    %297 = arith.mulf %295, %296 : vector<8x32xf32>
    %298 = vector.broadcast %277 : vector<1x32xf32> to vector<8x32xf32>
    %299 = arith.addf %297, %298 : vector<8x32xf32>
    %300 = vector.shape_cast %299 : vector<8x32xf32> to vector<2x4x32xf32>
    %cst_75 = arith.constant dense<0.000000e+00> : vector<2x32xf32>
    %301 = vector.multi_reduction <add>, %300, %cst_75 [1] : vector<2x4x32xf32> to vector<2x32xf32>
    %cst_76 = arith.constant 4.000000e+00 : f32
    %302 = vector.broadcast %cst_76 : f32 to vector<2x32xf32>
    %303 = arith.divf %301, %302 : vector<2x32xf32>
    %c0_77 = arith.constant 0 : index
    %c0_78 = arith.constant 0 : index
    %304 = vector.load %arg15[%c0_77, %c0_78] : memref<32x10xf32, #tpu.memory_space<vmem>>, vector<32x10xf32>
    %cst_79 = arith.constant dense<0.000000e+00> : vector<2x10xf32>
    %305 = tpu.matmul %303, %304, %cst_79 {dimension_numbers = #tpu.dot_dimension_numbers<[1], [0], [0], [1], [0, 0, 1, 1], [], []>} : vector<2x32xf32>, vector<32x10xf32>, vector<2x10xf32> -> vector<2x10xf32>
    %c0_80 = arith.constant 0 : index
    %c0_81 = arith.constant 0 : index
    %306 = vector.load %arg16[%c0_80, %c0_81] : memref<1x10xf32, #tpu.memory_space<vmem>>, vector<1x10xf32>
    %307 = vector.broadcast %306 : vector<1x10xf32> to vector<2x10xf32>
    %308 = arith.addf %305, %307 : vector<2x10xf32>
    %c0_82 = arith.constant 0 : index
    %c0_83 = arith.constant 0 : index
    %309 = vector.load %arg17[%c0_82, %c0_83] : memref<2x10xf32, #tpu.memory_space<vmem>>, vector<2x10xf32>
    tpu.vector_store %arg17[%c0_82, %c0_83], %308 {strides = array<i32>} : memref<2x10xf32, #tpu.memory_space<vmem>>, vector<2x10xf32>,
    return
  }
}

</mosaic_0001>

<llo_original>
// kernel: _lambda_.3
$region0: #{_lambda_.3}
  #allocation0 [shape = 'u32[]', space=smem, size = 0x4, offset = 0x4, fixed_abs, tag = 'smem constant byte address 0x4 - core index']
  #allocation1 [shape = 'u32[144,128]{1,0:T(1,128)}', space=vmem, size = 0x12000, scoped, tag = 'internal scratch']
  %s0 = inlined_call_operand.vmem [shape: f32[8,64], index: 0, kind: input, shape index: {}]
  %s1 = inlined_call_operand.vmem [shape: f32[64,32], index: 1, kind: input, shape index: {}]
  %s2 = inlined_call_operand.vmem [shape: f32[1,32], index: 2, kind: input, shape index: {}]
  %s3 = inlined_call_operand.vmem [shape: f32[2,32], index: 3, kind: input, shape index: {}]
  %s4 = inlined_call_operand.vmem [shape: f32[32,256], index: 4, kind: input, shape index: {}]
  %s5 = inlined_call_operand.vmem [shape: f32[1,256], index: 5, kind: input, shape index: {}]
  %s6 = inlined_call_operand.vmem [shape: f32[2,32,128], index: 6, kind: input, shape index: {}]
  %s7 = inlined_call_operand.vmem [shape: f32[64,32], index: 7, kind: input, shape index: {}]
  %s8 = inlined_call_operand.vmem [shape: f32[1,32], index: 8, kind: input, shape index: {}]
  %s9 = inlined_call_operand.vmem [shape: f32[2,32], index: 9, kind: input, shape index: {}]
  %s10 = inlined_call_operand.vmem [shape: f32[32,96], index: 10, kind: input, shape index: {}]
  %s11 = inlined_call_operand.vmem [shape: f32[1,96], index: 11, kind: input, shape index: {}]
  %s12 = inlined_call_operand.vmem [shape: f32[96,32], index: 12, kind: input, shape index: {}]
  %s13 = inlined_call_operand.vmem [shape: f32[1,32], index: 13, kind: input, shape index: {}]
  %s14 = inlined_call_operand.vmem [shape: f32[2,32], index: 14, kind: input, shape index: {}]
  %s15 = inlined_call_operand.vmem [shape: f32[32,10], index: 15, kind: input, shape index: {}]
  %s16 = inlined_call_operand.vmem [shape: f32[1,10], index: 16, kind: input, shape index: {}]
  %s17 = inlined_call_operand.hbm [shape: f32[2,10], index: 17, kind: output, shape index: {}]
  %s18 = sld [smem:[#allocation0]]
  $region78: #{_lambda_.3} parent=0
    _
  %s20 = ssub.s32 1, %s18
  %s21 = scalar_select 0, %s20, %s18
  $region1: #{_lambda_.3} parent=0
    #allocation2 [shape = 'u8[1024]{0}', space=vmem, size = 0x400, scoped, tag = 'output window, operand 0, single buffered']
    #allocation3 [shape = 's32[1]{0}', space=sflag, size = 0x4, scoped, tag = 'scoped memory for _lambda_.3']
    %22 = vsyncpa [#allocation3], 0
    // Predicated region
    $region2: #{_lambda_.3} parent=1 // pred_check
      _
    $region3: #{_lambda_.3} parent=1 // pred_check_branch
      %24 = sbr.rel (0) target = $region5
    $region4: #{_lambda_.3} parent=1 // pred_region
      _
    $region5: #{_lambda_.3} parent=1 // pred_fallthru
      _
    // Predicated region
    $region6: #{_lambda_.3} parent=1 // pred_check
      _
    $region7: #{_lambda_.3} parent=1 // pred_check_branch
      %26 = sbr.rel (0) target = $region9
    $region8: #{_lambda_.3} parent=1 // pred_region
      _
    $region9: #{_lambda_.3} parent=1 // pred_fallthru
      _
    // Predicated region
    $region10: #{_lambda_.3} parent=1 // pred_check
      _
    $region11: #{_lambda_.3} parent=1 // pred_check_branch
      %28 = sbr.rel (0) target = $region13
    $region12: #{_lambda_.3} parent=1 // pred_region
      _
    $region13: #{_lambda_.3} parent=1 // pred_fallthru
      _
    // Predicated region
    $region14: #{_lambda_.3} parent=1 // pred_check
      _
    $region15: #{_lambda_.3} parent=1 // pred_check_branch
      %30 = sbr.rel (0) target = $region17
    $region16: #{_lambda_.3} parent=1 // pred_region
      _
    $region17: #{_lambda_.3} parent=1 // pred_fallthru
      _
    // Predicated region
    $region18: #{_lambda_.3} parent=1 // pred_check
      _
    $region19: #{_lambda_.3} parent=1 // pred_check_branch
      %32 = sbr.rel (0) target = $region21
    $region20: #{_lambda_.3} parent=1 // pred_region
      _
    $region21: #{_lambda_.3} parent=1 // pred_fallthru
      _
    // Predicated region
    $region22: #{_lambda_.3} parent=1 // pred_check
      _
    $region23: #{_lambda_.3} parent=1 // pred_check_branch
      %34 = sbr.rel (0) target = $region25
    $region24: #{_lambda_.3} parent=1 // pred_region
      _
    $region25: #{_lambda_.3} parent=1 // pred_fallthru
      _
    // Predicated region
    $region26: #{_lambda_.3} parent=1 // pred_check
      _
    $region27: #{_lambda_.3} parent=1 // pred_check_branch
      %36 = sbr.rel (0) target = $region29
    $region28: #{_lambda_.3} parent=1 // pred_region
      _
    $region29: #{_lambda_.3} parent=1 // pred_fallthru
      _
    // Predicated region
    $region30: #{_lambda_.3} parent=1 // pred_check
      _
    $region31: #{_lambda_.3} parent=1 // pred_check_branch
      %38 = sbr.rel (0) target = $region33
    $region32: #{_lambda_.3} parent=1 // pred_region
      _
    $region33: #{_lambda_.3} parent=1 // pred_fallthru
      _
    // Predicated region
    $region34: #{_lambda_.3} parent=1 // pred_check
      _
    $region35: #{_lambda_.3} parent=1 // pred_check_branch
      %40 = sbr.rel (0) target = $region37
    $region36: #{_lambda_.3} parent=1 // pred_region
      _
    $region37: #{_lambda_.3} parent=1 // pred_fallthru
      _
    // Predicated region
    $region38: #{_lambda_.3} parent=1 // pred_check
      _
    $region39: #{_lambda_.3} parent=1 // pred_check_branch
      %42 = sbr.rel (0) target = $region41
    $region40: #{_lambda_.3} parent=1 // pred_region
      _
    $region41: #{_lambda_.3} parent=1 // pred_fallthru
      _
    // Predicated region
    $region42: #{_lambda_.3} parent=1 // pred_check
      _
    $region43: #{_lambda_.3} parent=1 // pred_check_branch
      %44 = sbr.rel (0) target = $region45
    $region44: #{_lambda_.3} parent=1 // pred_region
      _
    $region45: #{_lambda_.3} parent=1 // pred_fallthru
      _
    // Predicated region
    $region46: #{_lambda_.3} parent=1 // pred_check
      _
    $region47: #{_lambda_.3} parent=1 // pred_check_branch
      %46 = sbr.rel (0) target = $region49
    $region48: #{_lambda_.3} parent=1 // pred_region
      _
    $region49: #{_lambda_.3} parent=1 // pred_fallthru
      _
    // Predicated region
    $region50: #{_lambda_.3} parent=1 // pred_check
      _
    $region51: #{_lambda_.3} parent=1 // pred_check_branch
      %48 = sbr.rel (0) target = $region53
    $region52: #{_lambda_.3} parent=1 // pred_region
      _
    $region53: #{_lambda_.3} parent=1 // pred_fallthru
      _
    // Predicated region
    $region54: #{_lambda_.3} parent=1 // pred_check
      _
    $region55: #{_lambda_.3} parent=1 // pred_check_branch
      %50 = sbr.rel (0) target = $region57
    $region56: #{_lambda_.3} parent=1 // pred_region
      _
    $region57: #{_lambda_.3} parent=1 // pred_fallthru
      _
    // Predicated region
    $region58: #{_lambda_.3} parent=1 // pred_check
      _
    $region59: #{_lambda_.3} parent=1 // pred_check_branch
      %52 = sbr.rel (0) target = $region61
    $region60: #{_lambda_.3} parent=1 // pred_region
      _
    $region61: #{_lambda_.3} parent=1 // pred_fallthru
      _
    // Predicated region
    $region62: #{_lambda_.3} parent=1 // pred_check
      _
    $region63: #{_lambda_.3} parent=1 // pred_check_branch
      %54 = sbr.rel (0) target = $region65
    $region64: #{_lambda_.3} parent=1 // pred_region
      _
    $region65: #{_lambda_.3} parent=1 // pred_fallthru
      _
    // Predicated region
    $region66: #{_lambda_.3} parent=1 // pred_check
      _
    $region67: #{_lambda_.3} parent=1 // pred_check_branch
      %56 = sbr.rel (0) target = $region69
    $region68: #{_lambda_.3} parent=1 // pred_region
      _
    $region69: #{_lambda_.3} parent=1 // pred_fallthru
      _
    %v57 = vld [vmem:[%s0] sm:$0xff]
    %v58 = vld [vmem:[%s1] sm:$0xff]
    %v59 = vld [vmem:[%s1 + $0x8] sm:$0xff]
    %v60 = vld [vmem:[%s1 + $0x10] sm:$0xff]
    %v61 = vld [vmem:[%s1 + $0x18] sm:$0xff]
    %v62 = vld [vmem:[%s1 + $0x20] sm:$0xff]
    %v63 = vld [vmem:[%s1 + $0x28] sm:$0xff]
    %v64 = vld [vmem:[%s1 + $0x30] sm:$0xff]
    %v65 = vld [vmem:[%s1 + $0x38] sm:$0xff]
    %v66 = vld [vmem:[%s2] sm:$0x1]
    %v68 = vlaneseq
    %v69 = vshrl.u32 %v68, 7
    %v70 = vsub.s32 0, %v69
    %v71 = vrot.slane %v66, %v70
    %vm73 = vcmask 523264
    %v75 = vsel %vm73, %v57, 0
    %77 = vmatprep.subr.mxu0 0.0
    %78 = vmatpush1.msra.mxu0 %v58
    %79 = vmatprep.subr.mxu0 0.0
    %80 = vmatpush1.msra.mxu0 %v59
    %81 = vmatprep.subr.mxu0 0.0
    %82 = vmatpush1.msra.mxu0 %v60
    %83 = vmatprep.subr.mxu0 0.0
    %84 = vmatpush1.msra.mxu0 %v61
    %85 = vmatprep.subr.mxu0 0.0
    %86 = vmatpush1.msra.mxu0 %v62
    %87 = vmatprep.subr.mxu0 0.0
    %88 = vmatpush1.msra.mxu0 %v63
    %89 = vmatprep.subr.mxu0 0.0
    %90 = vmatpush1.msra.mxu0 %v64
    %91 = vmatprep.subr.mxu0 0.0
    %92 = vmatpush1.msra.mxu0 %v65
    %93 = vmatprep.subr.mxu0 0.0
    %94 = vmatpush1.msra.mxu0 0.0
    %95 = vmatprep.subr.mxu0 0.0
    %96 = vmatpush1.msra.mxu0 0.0
    %97 = vmatprep.subr.mxu0 0.0
    %98 = vmatpush1.msra.mxu0 0.0
    %99 = vmatprep.subr.mxu0 0.0
    %100 = vmatpush1.msra.mxu0 0.0
    %101 = vmatprep.subr.mxu0 0.0
    %102 = vmatpush1.msra.mxu0 0.0
    %103 = vmatprep.subr.mxu0 0.0
    %104 = vmatpush1.msra.mxu0 0.0
    %105 = vmatprep.subr.mxu0 0.0
    %106 = vmatpush1.msra.mxu0 0.0
    %107 = vmatprep.subr.mxu0 0.0
    %108 = vmatpush1.msra.mxu0 0.0
    %109 = vmatprep.subr.mxu0 0.0
    %110 = vmatpush1.msra.mxu0 0.0
    %111 = vmatprep.subr.mxu0 0.0
    %112 = vmatpush1.msra.mxu0 0.0
    %113 = vmatprep.subr.mxu0 0.0
    %114 = vmatpush1.msra.mxu0 0.0
    %115 = vmatprep.subr.mxu0 0.0
    %116 = vmatpush1.msra.mxu0 0.0
    %117 = vmatprep.subr.mxu0 0.0
    %118 = vmatpush1.msra.mxu0 0.0
    %119 = vmatprep.subr.mxu0 0.0
    %120 = vmatpush1.msra.mxu0 0.0
    %121 = vmatprep.subr.mxu0 0.0
    %122 = vmatpush1.msra.mxu0 0.0
    %123 = vmatprep.subr.mxu0 0.0
    %124 = vmatpush1.msra.mxu0 0.0
    %125 = vmatprep.subr.mxu0 0.0
    %126 = vmatpush1.msra.mxu0 0.0
    %127 = vmatprep.subr.mxu0 0.0
    %128 = vmatpush1.msra.mxu0 0.0
    %129 = vmatprep.subr.mxu0 0.0
    %130 = vmatpush1.msra.mxu0 0.0
    %131 = vmatprep.subr.mxu0 0.0
    %132 = vmatpush1.msra.mxu0 0.0
    %133 = vmatprep.subr.mxu0 0.0
    %134 = vmatpush1.msra.mxu0 0.0
    %135 = vmatprep.subr.mxu0 0.0
    %136 = vmatpush1.msra.mxu0 0.0
    %137 = vmatprep.subr.mxu0 0.0
    %138 = vmatpush1.msra.mxu0 0.0
    %139 = vmatprep.subr.mxu0 0.0
    %140 = vmatpush1.msra.mxu0 0.0
    %141 = vmatprep.mubr.f32.mxu0 0.0
    %142 = vmatmul.mubr.f32.gmra.mrb[0].mxu0 %v75
    %v143 = vpop.f32.mrb[0].mxu0
    %v144 = vadd.f32 %v71, %v143
    %v145 = vpop.f32.mrb[0].mxu0
    %146 = vdwg.mxu0
    %v147 = vld [vmem:[%s3] sm:$0x1]
    %v148 = vld [vmem:[%s3 + $0x1] sm:$0x1]
    %vm149 = vcmask 261120
    %v150 = vsel %vm149, %v144, 0.0
    %151 = vadd.xlane.f32.xlu0 %v150
    %v152 = vpop.xlane.xlu0 %151
    %v153 = vrcp.pop 32.0
    %v154 = vmul.f32 %v152, %v153
    %v155 = vsub.f32 %v144, %v154
    %v156 = vmul.f32 %v155, %v155
    %v157 = vsel %vm149, %v156, 0.0
    %158 = vadd.xlane.f32.xlu0 %v157
    %v159 = vpop.xlane.xlu0 %158
    %v160 = vmul.f32 %v159, %v153
    %v161 = vadd.f32 %v160, 1e-06
    %v162 = vrsqrt.pop %v161
    %v163 = vmul.f32 %v155, %v162
    %v164 = vlaneseq
    %v165 = vshrl.u32 %v164, 7
    %v166 = vsub.s32 0, %v165
    %v167 = vrot.slane %v147, %v166
    %v168 = vmul.f32 %v163, %v167
    %v169 = vlaneseq
    %v170 = vshrl.u32 %v169, 7
    %v171 = vsub.s32 0, %v170
    %v172 = vrot.slane %v148, %v171
    %v173 = vadd.f32 %v168, %v172
    %v174 = vld [vmem:[%s4] sm:$0xff]
    %v175 = vld [vmem:[%s4 + $0x8] sm:$0xff]
    %v176 = vld [vmem:[%s4 + $0x10] sm:$0xff]
    %v177 = vld [vmem:[%s4 + $0x18] sm:$0xff]
    %v178 = vld [vmem:[%s4 + $0x20] sm:$0xff]
    %v179 = vld [vmem:[%s4 + $0x28] sm:$0xff]
    %v180 = vld [vmem:[%s4 + $0x30] sm:$0xff]
    %v181 = vld [vmem:[%s4 + $0x38] sm:$0xff]
    %v182 = vld [vmem:[%s5] sm:$0x3]
    %v184 = vlaneseq
    %v185 = vshrl.u32 %v184, 7
    %v186 = vsub.s32 0, %v185
    %v187 = vrot.slane %v182, %v186
    %v188 = vlaneseq
    %v189 = vshrl.u32 %v188, 7
    %v190 = vsub.s32 1, %v189
    %v191 = vrot.slane %v182, %v190
    %v195 = vsel %vm149, %v173, 0
    %197 = vmatprep.subr.mxu0 %v175
    %198 = vmatpush1.msra.mxu0 %v174
    %199 = vmatprep.subr.mxu0 %v177
    %200 = vmatpush1.msra.mxu0 %v176
    %201 = vmatprep.subr.mxu0 %v179
    %202 = vmatpush1.msra.mxu0 %v178
    %203 = vmatprep.subr.mxu0 %v181
    %204 = vmatpush1.msra.mxu0 %v180
    %205 = vmatprep.subr.mxu0 0.0
    %206 = vmatpush1.msra.mxu0 0.0
    %207 = vmatprep.subr.mxu0 0.0
    %208 = vmatpush1.msra.mxu0 0.0
    %209 = vmatprep.subr.mxu0 0.0
    %210 = vmatpush1.msra.mxu0 0.0
    %211 = vmatprep.subr.mxu0 0.0
    %212 = vmatpush1.msra.mxu0 0.0
    %213 = vmatprep.subr.mxu0 0.0
    %214 = vmatpush1.msra.mxu0 0.0
    %215 = vmatprep.subr.mxu0 0.0
    %216 = vmatpush1.msra.mxu0 0.0
    %217 = vmatprep.subr.mxu0 0.0
    %218 = vmatpush1.msra.mxu0 0.0
    %219 = vmatprep.subr.mxu0 0.0
    %220 = vmatpush1.msra.mxu0 0.0
    %221 = vmatprep.subr.mxu0 0.0
    %222 = vmatpush1.msra.mxu0 0.0
    %223 = vmatprep.subr.mxu0 0.0
    %224 = vmatpush1.msra.mxu0 0.0
    %225 = vmatprep.subr.mxu0 0.0
    %226 = vmatpush1.msra.mxu0 0.0
    %227 = vmatprep.subr.mxu0 0.0
    %228 = vmatpush1.msra.mxu0 0.0
    %229 = vmatprep.subr.mxu0 0.0
    %230 = vmatpush1.msra.mxu0 0.0
    %231 = vmatprep.subr.mxu0 0.0
    %232 = vmatpush1.msra.mxu0 0.0
    %233 = vmatprep.subr.mxu0 0.0
    %234 = vmatpush1.msra.mxu0 0.0
    %235 = vmatprep.subr.mxu0 0.0
    %236 = vmatpush1.msra.mxu0 0.0
    %237 = vmatprep.subr.mxu0 0.0
    %238 = vmatpush1.msra.mxu0 0.0
    %239 = vmatprep.subr.mxu0 0.0
    %240 = vmatpush1.msra.mxu0 0.0
    %241 = vmatprep.subr.mxu0 0.0
    %242 = vmatpush1.msra.mxu0 0.0
    %243 = vmatprep.subr.mxu0 0.0
    %244 = vmatpush1.msra.mxu0 0.0
    %245 = vmatprep.subr.mxu0 0.0
    %246 = vmatpush1.msra.mxu0 0.0
    %247 = vmatprep.subr.mxu0 0.0
    %248 = vmatpush1.msra.mxu0 0.0
    %249 = vmatprep.subr.mxu0 0.0
    %250 = vmatpush1.msra.mxu0 0.0
    %251 = vmatprep.subr.mxu0 0.0
    %252 = vmatpush1.msra.mxu0 0.0
    %253 = vmatprep.subr.mxu0 0.0
    %254 = vmatpush1.msra.mxu0 0.0
    %255 = vmatprep.subr.mxu0 0.0
    %256 = vmatpush1.msra.mxu0 0.0
    %257 = vmatprep.subr.mxu0 0.0
    %258 = vmatpush1.msra.mxu0 0.0
    %259 = vmatprep.subr.mxu0 0.0
    %260 = vmatpush1.msra.mxu0 0.0
    %261 = vmatprep.mubr.f32.mxu0 0.0
    %262 = vmatmul.mubr.f32.gmra.mrb[0].mxu0 %v195
    %v263 = vpop.f32.mrb[0].mxu0
    %v264 = vadd.f32 %v187, %v263
    %v265 = vpop.f32.mrb[0].mxu0
    %v266 = vadd.f32 %v191, %v265
    %267 = vdwg.mxu0
    %v270 = vcombine.low %v264, %v266
    %v271 = vcombine.high %v264, %v266
    %v273 = vunpack.c.l.s4 1983009808
    %v274 = vunpack.c.0.s8 %v273
    %v275 = vlaneseq
    %v276 = vshrl.u32 %v275, 7
    %v277 = vsub.s32 %v274, %v276
    %v278 = vrot.slane %v270, %v277
    %v280 = vunpack.c.l.s4 1983009808
    %v281 = vunpack.c.0.s8 %v280
    %v282 = vlaneseq
    %v283 = vshrl.u32 %v282, 7
    %v284 = vsub.s32 %v281, %v283
    %v285 = vrot.slane %v271, %v284
    %v286 = vcombine.high %v278, %v278
    %v287 = vcombine.high %v285, %v285
    %v292 = vld [vmem:[%s6] sm:$0xff]
    %v293 = vld [vmem:[%s6 + $0x8] sm:$0xff]
    %v294 = vld [vmem:[%s6 + $0x10] sm:$0xff]
    %v295 = vld [vmem:[%s6 + $0x18] sm:$0xff]
    %s296 = scalar_lea.vmem %s6, 32
    %v297 = vld [vmem:[%s296] sm:$0xff]
    %v298 = vld [vmem:[%s296 + $0x8] sm:$0xff]
    %v299 = vld [vmem:[%s296 + $0x10] sm:$0xff]
    %v300 = vld [vmem:[%s296 + $0x18] sm:$0xff]
    %v301 = vxor.u32 %v278, 2147483648
    %v302 = vxor.u32 %v285, 2147483648
    %v303 = vmul.f32 %v301, 1.442695
    %v304 = vpow.pop %v303
    %v305 = vmul.f32 %v302, 1.442695
    %v306 = vpow.pop %v305
    %v307 = vadd.f32 %v304, 1.0
    %v308 = vadd.f32 %v306, 1.0
    %v309 = vrcp.pop %v307
    %v310 = vmul.f32 1.0, %v309
    %v311 = vrcp.pop %v308
    %v312 = vmul.f32 1.0, %v311
    %v313 = vxor.u32 %v286, 2147483648
    %v314 = vxor.u32 %v287, 2147483648
    %v315 = vmul.f32 %v313, 1.442695
    %v316 = vpow.pop %v315
    %v317 = vmul.f32 %v314, 1.442695
    %v318 = vpow.pop %v317
    %v319 = vadd.f32 %v316, 1.0
    %v320 = vadd.f32 %v318, 1.0
    %v321 = vrcp.pop %v319
    %v322 = vmul.f32 1.0, %v321
    %v323 = vrcp.pop %v320
    %v324 = vmul.f32 1.0, %v323
    %v325 = vtanh.pop %v278
    %v326 = vtanh.pop %v285
    %v327 = vtanh.pop %v286
    %v328 = vtanh.pop %v287
    %v329 = vmul.f32 %v310, 0.0
    %v330 = vmul.f32 %v312, 0.0
    %333 = vrot.lane.b32.xlu0 %v325, 80
    %v334 = vpop.permute.xlu0 %333
    %335 = vrot.lane.b32.xlu0 %v326, 80
    %v336 = vpop.permute.xlu0 %335
    %v339 = vmul.f32 %v310, %v334
    %v340 = vmul.f32 %v312, %v336
    %343 = vrot.lane.b32.xlu0 %v339, 16
    %v344 = vpop.permute.xlu0 %343
    %345 = vrot.lane.b32.xlu0 %v340, 16
    %v346 = vpop.permute.xlu0 %345
    %v349 = vadd.f32 %v329, %v344
    %v350 = vadd.f32 %v330, %v346
    %v351 = vmul.f32 %v322, 0.0
    %v352 = vmul.f32 %v324, 0.0
    %355 = vrot.lane.b32.xlu0 %v327, 80
    %v356 = vpop.permute.xlu0 %355
    %357 = vrot.lane.b32.xlu0 %v328, 80
    %v358 = vpop.permute.xlu0 %357
    %v361 = vmul.f32 %v322, %v356
    %v362 = vmul.f32 %v324, %v358
    %365 = vrot.lane.b32.xlu0 %v361, 16
    %v366 = vpop.permute.xlu0 %365
    %367 = vrot.lane.b32.xlu0 %v362, 16
    %v368 = vpop.permute.xlu0 %367
    %v371 = vadd.f32 %v351, %v366
    %v372 = vadd.f32 %v352, %v368
    %v373 = vtanh.pop %v349
    %v374 = vtanh.pop %v350
    %377 = vrot.lane.b32.xlu0 %v373, 16
    %v378 = vpop.permute.xlu0 %377
    %379 = vrot.lane.b32.xlu0 %v374, 16
    %v380 = vpop.permute.xlu0 %379
    %v383 = vmul.f32 %v310, %v378
    %v384 = vmul.f32 %v312, %v380
    %v385 = vtanh.pop %v371
    %v386 = vtanh.pop %v372
    %389 = vrot.lane.b32.xlu0 %v385, 16
    %v390 = vpop.permute.xlu0 %389
    %391 = vrot.lane.b32.xlu0 %v386, 16
    %v392 = vpop.permute.xlu0 %391
    %v395 = vmul.f32 %v322, %v390
    %v396 = vmul.f32 %v324, %v392
    %v399 = vcombine.low %v383, %v384
    %v401 = vunpack.c.l.s4 1983009808
    %v402 = vunpack.c.0.s8 %v401
    %v403 = vlaneseq
    %v404 = vshrl.u32 %v403, 7
    %v405 = vsub.s32 %v402, %v404
    %v406 = vrot.slane %v399, %v405
    %407 = vrot.lane.b32.xlu0 %v406, 96
    %v408 = vpop.permute.xlu0 %407
    %v412 = vcombine.low %v395, %v396
    %v414 = vunpack.c.l.s4 1983009808
    %v415 = vunpack.c.0.s8 %v414
    %v416 = vlaneseq
    %v417 = vshrl.u32 %v416, 7
    %v418 = vsub.s32 %v415, %v417
    %v419 = vrot.slane %v412, %v418
    %420 = vrot.lane.b32.xlu0 %v419, 48
    %v421 = vpop.permute.xlu0 %420
    %vm423 = vcmask 130048
    %v424 = vsel %vm423, %v408, %v421
    %v426 = vsel %vm149, %v424, 0
    %428 = vmatprep.subr.mxu0 0.0
    %429 = vmatpush1.msra.mxu0 %v292
    %430 = vmatprep.subr.mxu0 0.0
    %431 = vmatpush1.msra.mxu0 %v293
    %432 = vmatprep.subr.mxu0 0.0
    %433 = vmatpush1.msra.mxu0 %v294
    %434 = vmatprep.subr.mxu0 0.0
    %435 = vmatpush1.msra.mxu0 %v295
    %436 = vmatprep.subr.mxu0 0.0
    %437 = vmatpush1.msra.mxu0 0.0
    %438 = vmatprep.subr.mxu0 0.0
    %439 = vmatpush1.msra.mxu0 0.0
    %440 = vmatprep.subr.mxu0 0.0
    %441 = vmatpush1.msra.mxu0 0.0
    %442 = vmatprep.subr.mxu0 0.0
    %443 = vmatpush1.msra.mxu0 0.0
    %444 = vmatprep.subr.mxu0 0.0
    %445 = vmatpush1.msra.mxu0 0.0
    %446 = vmatprep.subr.mxu0 0.0
    %447 = vmatpush1.msra.mxu0 0.0
    %448 = vmatprep.subr.mxu0 0.0
    %449 = vmatpush1.msra.mxu0 0.0
    %450 = vmatprep.subr.mxu0 0.0
    %451 = vmatpush1.msra.mxu0 0.0
    %452 = vmatprep.subr.mxu0 0.0
    %453 = vmatpush1.msra.mxu0 0.0
    %454 = vmatprep.subr.mxu0 0.0
    %455 = vmatpush1.msra.mxu0 0.0
    %456 = vmatprep.subr.mxu0 0.0
    %457 = vmatpush1.msra.mxu0 0.0
    %458 = vmatprep.subr.mxu0 0.0
    %459 = vmatpush1.msra.mxu0 0.0
    %460 = vmatprep.subr.mxu0 0.0
    %461 = vmatpush1.msra.mxu0 0.0
    %462 = vmatprep.subr.mxu0 0.0
    %463 = vmatpush1.msra.mxu0 0.0
    %464 = vmatprep.subr.mxu0 0.0
    %465 = vmatpush1.msra.mxu0 0.0
    %466 = vmatprep.subr.mxu0 0.0
    %467 = vmatpush1.msra.mxu0 0.0
    %468 = vmatprep.subr.mxu0 0.0
    %469 = vmatpush1.msra.mxu0 0.0
    %470 = vmatprep.subr.mxu0 0.0
    %471 = vmatpush1.msra.mxu0 0.0
    %472 = vmatprep.subr.mxu0 0.0
    %473 = vmatpush1.msra.mxu0 0.0
    %474 = vmatprep.subr.mxu0 0.0
    %475 = vmatpush1.msra.mxu0 0.0
    %476 = vmatprep.subr.mxu0 0.0
    %477 = vmatpush1.msra.mxu0 0.0
    %478 = vmatprep.subr.mxu0 0.0
    %479 = vmatpush1.msra.mxu0 0.0
    %480 = vmatprep.subr.mxu0 0.0
    %481 = vmatpush1.msra.mxu0 0.0
    %482 = vmatprep.subr.mxu0 0.0
    %483 = vmatpush1.msra.mxu0 0.0
    %484 = vmatprep.subr.mxu0 0.0
    %485 = vmatpush1.msra.mxu0 0.0
    %486 = vmatprep.subr.mxu0 0.0
    %487 = vmatpush1.msra.mxu0 0.0
    %488 = vmatprep.subr.mxu0 0.0
    %489 = vmatpush1.msra.mxu0 0.0
    %490 = vmatprep.subr.mxu0 0.0
    %491 = vmatpush1.msra.mxu0 0.0
    %492 = vmatprep.mubr.f32.mxu0 0.0
    %493 = vmatmul.mubr.f32.gmra.mrb[0].mxu0 %v426
    %v494 = vpop.f32.mrb[0].mxu0
    %v495 = vadd.f32 0.0, %v494
    %v496 = vpop.f32.mrb[0].mxu0
    %497 = vdwg.mxu0
    %v498 = vcombine.low %v286, %v287
    %v500 = vunpack.c.l.s4 1983009808
    %v501 = vunpack.c.0.s8 %v500
    %v502 = vlaneseq
    %v503 = vshrl.u32 %v502, 7
    %v504 = vsub.s32 %v501, %v503
    %v505 = vrot.slane %v498, %v504
    %v507 = vadd.f32 %v495, %v505
    %v508 = vcombine.low %v278, %v285
    %v510 = vunpack.c.l.s4 1983009808
    %v511 = vunpack.c.0.s8 %v510
    %v512 = vlaneseq
    %v513 = vshrl.u32 %v512, 7
    %v514 = vsub.s32 %v511, %v513
    %v515 = vrot.slane %v508, %v514
    %v517 = vadd.f32 %v495, %v515
    %v518 = vxor.u32 %v507, 2147483648
    %v519 = vmul.f32 %v518, 1.442695
    %v520 = vpow.pop %v519
    %v521 = vadd.f32 %v520, 1.0
    %v522 = vrcp.pop %v521
    %v523 = vmul.f32 1.0, %v522
    %v524 = vxor.u32 %v517, 2147483648
    %v525 = vmul.f32 %v524, 1.442695
    %v526 = vpow.pop %v525
    %v527 = vadd.f32 %v526, 1.0
    %v528 = vrcp.pop %v527
    %v529 = vmul.f32 1.0, %v528
    %v530 = vtanh.pop %v507
    %v531 = vtanh.pop %v517
    %v534 = vcombine.low %v349, %v350
    %v536 = vunpack.c.l.s4 1983009808
    %v537 = vunpack.c.0.s8 %v536
    %v538 = vlaneseq
    %v539 = vshrl.u32 %v538, 7
    %v540 = vsub.s32 %v537, %v539
    %v541 = vrot.slane %v534, %v540
    %v543 = vmul.f32 %v523, %v541
    %545 = vrot.lane.b32.xlu0 %v530, 80
    %v546 = vpop.permute.xlu0 %545
    %v548 = vmul.f32 %v523, %v546
    %550 = vrot.lane.b32.xlu0 %v548, 16
    %v551 = vpop.permute.xlu0 %550
    %v553 = vadd.f32 %v543, %v551
    %v556 = vcombine.low %v371, %v372
    %v558 = vunpack.c.l.s4 1983009808
    %v559 = vunpack.c.0.s8 %v558
    %v560 = vlaneseq
    %v561 = vshrl.u32 %v560, 7
    %v562 = vsub.s32 %v559, %v561
    %v563 = vrot.slane %v556, %v562
    %v565 = vmul.f32 %v529, %v563
    %567 = vrot.lane.b32.xlu0 %v531, 80
    %v568 = vpop.permute.xlu0 %567
    %v570 = vmul.f32 %v529, %v568
    %572 = vrot.lane.b32.xlu0 %v570, 16
    %v573 = vpop.permute.xlu0 %572
    %v575 = vadd.f32 %v565, %v573
    %v576 = vtanh.pop %v553
    %578 = vrot.lane.b32.xlu0 %v576, 16
    %v579 = vpop.permute.xlu0 %578
    %v581 = vmul.f32 %v523, %v579
    %v582 = vtanh.pop %v575
    %584 = vrot.lane.b32.xlu0 %v582, 16
    %v585 = vpop.permute.xlu0 %584
    %v587 = vmul.f32 %v529, %v585
    %v590 = vunpack.c.l.s4 1983009808
    %v591 = vunpack.c.0.s8 %v590
    %v592 = vlaneseq
    %v593 = vshrl.u32 %v592, 7
    %v594 = vsub.s32 %v591, %v593
    %v595 = vrot.slane %v581, %v594
    %v596 = vcombine.high %v595, %v595
    %v599 = vunpack.c.l.s4 1983009808
    %v600 = vunpack.c.0.s8 %v599
    %v601 = vlaneseq
    %v602 = vshrl.u32 %v601, 7
    %v603 = vsub.s32 %v600, %v602
    %v604 = vrot.slane %v587, %v603
    %v605 = vcombine.high %v604, %v604
    %v606 = vrot.slane %v278, 2
    %v607 = vrot.slane %v286, 2
    %v608 = vrot.slane %v285, 2
    %v609 = vrot.slane %v287, 2
    %614 = vrot.lane.b32.xlu0 %v278, 64
    %v615 = vpop.permute.xlu0 %614
    %616 = vrot.lane.b32.xlu0 %v286, 64
    %v617 = vpop.permute.xlu0 %616
    %618 = vrot.lane.b32.xlu0 %v285, 64
    %v619 = vpop.permute.xlu0 %618
    %620 = vrot.lane.b32.xlu0 %v287, 64
    %v621 = vpop.permute.xlu0 %620
    %v622 = vrot.slane %v615, 2
    %v623 = vrot.slane %v617, 2
    %v624 = vrot.slane %v619, 2
    %v625 = vrot.slane %v621, 2
    %v630 = vxor.u32 %v606, 2147483648
    %v631 = vxor.u32 %v607, 2147483648
    %v632 = vxor.u32 %v608, 2147483648
    %v633 = vxor.u32 %v609, 2147483648
    %v634 = vmul.f32 %v630, 1.442695
    %v635 = vpow.pop %v634
    %v636 = vmul.f32 %v631, 1.442695
    %v637 = vpow.pop %v636
    %v638 = vmul.f32 %v632, 1.442695
    %v639 = vpow.pop %v638
    %v640 = vmul.f32 %v633, 1.442695
    %v641 = vpow.pop %v640
    %v642 = vadd.f32 %v635, 1.0
    %v643 = vadd.f32 %v637, 1.0
    %v644 = vadd.f32 %v639, 1.0
    %v645 = vadd.f32 %v641, 1.0
    %v646 = vrcp.pop %v642
    %v647 = vmul.f32 1.0, %v646
    %v648 = vrcp.pop %v643
    %v649 = vmul.f32 1.0, %v648
    %v650 = vrcp.pop %v644
    %v651 = vmul.f32 1.0, %v650
    %v652 = vrcp.pop %v645
    %v653 = vmul.f32 1.0, %v652
    %v654 = vxor.u32 %v622, 2147483648
    %v655 = vxor.u32 %v623, 2147483648
    %v656 = vxor.u32 %v624, 2147483648
    %v657 = vxor.u32 %v625, 2147483648
    %v658 = vmul.f32 %v654, 1.442695
    %v659 = vpow.pop %v658
    %v660 = vmul.f32 %v655, 1.442695
    %v661 = vpow.pop %v660
    %v662 = vmul.f32 %v656, 1.442695
    %v663 = vpow.pop %v662
    %v664 = vmul.f32 %v657, 1.442695
    %v665 = vpow.pop %v664
    %v666 = vadd.f32 %v659, 1.0
    %v667 = vadd.f32 %v661, 1.0
    %v668 = vadd.f32 %v663, 1.0
    %v669 = vadd.f32 %v665, 1.0
    %v670 = vrcp.pop %v666
    %v671 = vmul.f32 1.0, %v670
    %v672 = vrcp.pop %v667
    %v673 = vmul.f32 1.0, %v672
    %v674 = vrcp.pop %v668
    %v675 = vmul.f32 1.0, %v674
    %v676 = vrcp.pop %v669
    %v677 = vmul.f32 1.0, %v676
    %v678 = vtanh.pop %v606
    %v679 = vtanh.pop %v607
    %v680 = vtanh.pop %v608
    %v681 = vtanh.pop %v609
    %v682 = vtanh.pop %v622
    %v683 = vtanh.pop %v623
    %v684 = vtanh.pop %v624
    %v685 = vtanh.pop %v625
    %v686 = vmul.f32 %v647, 0.0
    %v687 = vmul.f32 %v649, 0.0
    %v688 = vmul.f32 %v651, 0.0
    %v689 = vmul.f32 %v653, 0.0
    %694 = vrot.lane.b32.xlu0 %v678, 80
    %v695 = vpop.permute.xlu0 %694
    %696 = vrot.lane.b32.xlu0 %v679, 80
    %v697 = vpop.permute.xlu0 %696
    %698 = vrot.lane.b32.xlu0 %v680, 80
    %v699 = vpop.permute.xlu0 %698
    %700 = vrot.lane.b32.xlu0 %v681, 80
    %v701 = vpop.permute.xlu0 %700
    %v706 = vmul.f32 %v647, %v695
    %v707 = vmul.f32 %v649, %v697
    %v708 = vmul.f32 %v651, %v699
    %v709 = vmul.f32 %v653, %v701
    %714 = vrot.lane.b32.xlu0 %v706, 16
    %v715 = vpop.permute.xlu0 %714
    %716 = vrot.lane.b32.xlu0 %v707, 16
    %v717 = vpop.permute.xlu0 %716
    %718 = vrot.lane.b32.xlu0 %v708, 16
    %v719 = vpop.permute.xlu0 %718
    %720 = vrot.lane.b32.xlu0 %v709, 16
    %v721 = vpop.permute.xlu0 %720
    %v726 = vadd.f32 %v686, %v715
    %v727 = vadd.f32 %v687, %v717
    %v728 = vadd.f32 %v688, %v719
    %v729 = vadd.f32 %v689, %v721
    %v730 = vmul.f32 %v671, 0.0
    %v731 = vmul.f32 %v673, 0.0
    %v732 = vmul.f32 %v675, 0.0
    %v733 = vmul.f32 %v677, 0.0
    %738 = vrot.lane.b32.xlu0 %v682, 80
    %v739 = vpop.permute.xlu0 %738
    %740 = vrot.lane.b32.xlu0 %v683, 80
    %v741 = vpop.permute.xlu0 %740
    %742 = vrot.lane.b32.xlu0 %v684, 80
    %v743 = vpop.permute.xlu0 %742
    %744 = vrot.lane.b32.xlu0 %v685, 80
    %v745 = vpop.permute.xlu0 %744
    %v750 = vmul.f32 %v671, %v739
    %v751 = vmul.f32 %v673, %v741
    %v752 = vmul.f32 %v675, %v743
    %v753 = vmul.f32 %v677, %v745
    %758 = vrot.lane.b32.xlu0 %v750, 16
    %v759 = vpop.permute.xlu0 %758
    %760 = vrot.lane.b32.xlu0 %v751, 16
    %v761 = vpop.permute.xlu0 %760
    %762 = vrot.lane.b32.xlu0 %v752, 16
    %v763 = vpop.permute.xlu0 %762
    %764 = vrot.lane.b32.xlu0 %v753, 16
    %v765 = vpop.permute.xlu0 %764
    %v770 = vadd.f32 %v730, %v759
    %v771 = vadd.f32 %v731, %v761
    %v772 = vadd.f32 %v732, %v763
    %v773 = vadd.f32 %v733, %v765
    %v774 = vtanh.pop %v726
    %v775 = vtanh.pop %v727
    %v776 = vtanh.pop %v728
    %v777 = vtanh.pop %v729
    %782 = vrot.lane.b32.xlu0 %v774, 16
    %v783 = vpop.permute.xlu0 %782
    %784 = vrot.lane.b32.xlu0 %v775, 16
    %v785 = vpop.permute.xlu0 %784
    %786 = vrot.lane.b32.xlu0 %v776, 16
    %v787 = vpop.permute.xlu0 %786
    %788 = vrot.lane.b32.xlu0 %v777, 16
    %v789 = vpop.permute.xlu0 %788
    %v794 = vmul.f32 %v647, %v783
    %v795 = vmul.f32 %v649, %v785
    %v796 = vmul.f32 %v651, %v787
    %v797 = vmul.f32 %v653, %v789
    %v798 = vtanh.pop %v770
    %v799 = vtanh.pop %v771
    %v800 = vtanh.pop %v772
    %v801 = vtanh.pop %v773
    %806 = vrot.lane.b32.xlu0 %v798, 16
    %v807 = vpop.permute.xlu0 %806
    %808 = vrot.lane.b32.xlu0 %v799, 16
    %v809 = vpop.permute.xlu0 %808
    %810 = vrot.lane.b32.xlu0 %v800, 16
    %v811 = vpop.permute.xlu0 %810
    %812 = vrot.lane.b32.xlu0 %v801, 16
    %v813 = vpop.permute.xlu0 %812
    %v818 = vmul.f32 %v671, %v807
    %v819 = vmul.f32 %v673, %v809
    %v820 = vmul.f32 %v675, %v811
    %v821 = vmul.f32 %v677, %v813
    %v826 = vlaneseq
    %v827 = vshrl.u32 %v826, 7
    %v828 = vsub.s32 0, %v827
    %v829 = vrot.slane %v794, %v828
    %v830 = vlaneseq
    %v831 = vshrl.u32 %v830, 7
    %v832 = vsub.s32 0, %v831
    %v833 = vrot.slane %v795, %v832
    %v834 = vlaneseq
    %v835 = vshrl.u32 %v834, 7
    %v836 = vsub.s32 0, %v835
    %v837 = vrot.slane %v796, %v836
    %v838 = vlaneseq
    %v839 = vshrl.u32 %v838, 7
    %v840 = vsub.s32 0, %v839
    %v841 = vrot.slane %v797, %v840
    %vm842 = vcmask 1041409
    %v843 = vsel %vm842, %v833, %v829
    %vm844 = vcmask 1042434
    %v845 = vsel %vm844, %v837, %v843
    %vm846 = vcmask 1043459
    %v847 = vsel %vm846, %v841, %v845
    %848 = vrot.lane.b32.xlu0 %v847, 96
    %v849 = vpop.permute.xlu0 %848
    %v855 = vlaneseq
    %v856 = vshrl.u32 %v855, 7
    %v857 = vsub.s32 1, %v856
    %v858 = vrot.slane %v818, %v857
    %v859 = vlaneseq
    %v860 = vshrl.u32 %v859, 7
    %v861 = vsub.s32 1, %v860
    %v862 = vrot.slane %v819, %v861
    %v863 = vlaneseq
    %v864 = vshrl.u32 %v863, 7
    %v865 = vsub.s32 1, %v864
    %v866 = vrot.slane %v820, %v865
    %v867 = vlaneseq
    %v868 = vshrl.u32 %v867, 7
    %v869 = vsub.s32 1, %v868
    %v870 = vrot.slane %v821, %v869
    %v871 = vsel %vm842, %v862, %v858
    %v872 = vsel %vm844, %v866, %v871
    %v873 = vsel %vm846, %v870, %v872
    %874 = vrot.lane.b32.xlu0 %v873, 112
    %v875 = vpop.permute.xlu0 %874
    %v877 = vsel %vm423, %v849, %v875
    %v879 = vsel %vm149, %v877, 0
    %881 = vmatprep.subr.mxu0 0.0
    %882 = vmatpush1.msra.mxu0 %v297
    %883 = vmatprep.subr.mxu0 0.0
    %884 = vmatpush1.msra.mxu0 %v298
    %885 = vmatprep.subr.mxu0 0.0
    %886 = vmatpush1.msra.mxu0 %v299
    %887 = vmatprep.subr.mxu0 0.0
    %888 = vmatpush1.msra.mxu0 %v300
    %889 = vmatprep.subr.mxu0 0.0
    %890 = vmatpush1.msra.mxu0 0.0
    %891 = vmatprep.subr.mxu0 0.0
    %892 = vmatpush1.msra.mxu0 0.0
    %893 = vmatprep.subr.mxu0 0.0
    %894 = vmatpush1.msra.mxu0 0.0
    %895 = vmatprep.subr.mxu0 0.0
    %896 = vmatpush1.msra.mxu0 0.0
    %897 = vmatprep.subr.mxu0 0.0
    %898 = vmatpush1.msra.mxu0 0.0
    %899 = vmatprep.subr.mxu0 0.0
    %900 = vmatpush1.msra.mxu0 0.0
    %901 = vmatprep.subr.mxu0 0.0
    %902 = vmatpush1.msra.mxu0 0.0
    %903 = vmatprep.subr.mxu0 0.0
    %904 = vmatpush1.msra.mxu0 0.0
    %905 = vmatprep.subr.mxu0 0.0
    %906 = vmatpush1.msra.mxu0 0.0
    %907 = vmatprep.subr.mxu0 0.0
    %908 = vmatpush1.msra.mxu0 0.0
    %909 = vmatprep.subr.mxu0 0.0
    %910 = vmatpush1.msra.mxu0 0.0
    %911 = vmatprep.subr.mxu0 0.0
    %912 = vmatpush1.msra.mxu0 0.0
    %913 = vmatprep.subr.mxu0 0.0
    %914 = vmatpush1.msra.mxu0 0.0
    %915 = vmatprep.subr.mxu0 0.0
    %916 = vmatpush1.msra.mxu0 0.0
    %917 = vmatprep.subr.mxu0 0.0
    %918 = vmatpush1.msra.mxu0 0.0
    %919 = vmatprep.subr.mxu0 0.0
    %920 = vmatpush1.msra.mxu0 0.0
    %921 = vmatprep.subr.mxu0 0.0
    %922 = vmatpush1.msra.mxu0 0.0
    %923 = vmatprep.subr.mxu0 0.0
    %924 = vmatpush1.msra.mxu0 0.0
    %925 = vmatprep.subr.mxu0 0.0
    %926 = vmatpush1.msra.mxu0 0.0
    %927 = vmatprep.subr.mxu0 0.0
    %928 = vmatpush1.msra.mxu0 0.0
    %929 = vmatprep.subr.mxu0 0.0
    %930 = vmatpush1.msra.mxu0 0.0
    %931 = vmatprep.subr.mxu0 0.0
    %932 = vmatpush1.msra.mxu0 0.0
    %933 = vmatprep.subr.mxu0 0.0
    %934 = vmatpush1.msra.mxu0 0.0
    %935 = vmatprep.subr.mxu0 0.0
    %936 = vmatpush1.msra.mxu0 0.0
    %937 = vmatprep.subr.mxu0 0.0
    %938 = vmatpush1.msra.mxu0 0.0
    %939 = vmatprep.subr.mxu0 0.0
    %940 = vmatpush1.msra.mxu0 0.0
    %941 = vmatprep.subr.mxu0 0.0
    %942 = vmatpush1.msra.mxu0 0.0
    %943 = vmatprep.subr.mxu0 0.0
    %944 = vmatpush1.msra.mxu0 0.0
    %945 = vmatprep.mubr.f32.mxu0 0.0
    %946 = vmatmul.mubr.f32.gmra.mrb[0].mxu0 %v879
    %v947 = vpop.f32.mrb[0].mxu0
    %v948 = vadd.f32 0.0, %v947
    %v949 = vpop.f32.mrb[0].mxu0
    %950 = vdwg.mxu0
    %v951 = vlaneseq
    %v952 = vshrl.u32 %v951, 7
    %v953 = vsub.s32 1, %v952
    %v954 = vrot.slane %v606, %v953
    %v955 = vlaneseq
    %v956 = vshrl.u32 %v955, 7
    %v957 = vsub.s32 1, %v956
    %v958 = vrot.slane %v607, %v957
    %v959 = vlaneseq
    %v960 = vshrl.u32 %v959, 7
    %v961 = vsub.s32 1, %v960
    %v962 = vrot.slane %v608, %v961
    %v963 = vlaneseq
    %v964 = vshrl.u32 %v963, 7
    %v965 = vsub.s32 1, %v964
    %v966 = vrot.slane %v609, %v965
    %v967 = vsel %vm842, %v958, %v954
    %v968 = vsel %vm844, %v962, %v967
    %v969 = vsel %vm846, %v966, %v968
    %v971 = vadd.f32 %v948, %v969
    %v972 = vlaneseq
    %v973 = vshrl.u32 %v972, 7
    %v974 = vsub.s32 0, %v973
    %v975 = vrot.slane %v622, %v974
    %v976 = vlaneseq
    %v977 = vshrl.u32 %v976, 7
    %v978 = vsub.s32 0, %v977
    %v979 = vrot.slane %v623, %v978
    %v980 = vlaneseq
    %v981 = vshrl.u32 %v980, 7
    %v982 = vsub.s32 0, %v981
    %v983 = vrot.slane %v624, %v982
    %v984 = vlaneseq
    %v985 = vshrl.u32 %v984, 7
    %v986 = vsub.s32 0, %v985
    %v987 = vrot.slane %v625, %v986
    %v988 = vsel %vm842, %v979, %v975
    %v989 = vsel %vm844, %v983, %v988
    %v990 = vsel %vm846, %v987, %v989
    %991 = vrot.lane.b32.xlu0 %v990, 64
    %v992 = vpop.permute.xlu0 %991
    %v994 = vadd.f32 %v948, %v992
    %v995 = vxor.u32 %v971, 2147483648
    %v996 = vmul.f32 %v995, 1.442695
    %v997 = vpow.pop %v996
    %v998 = vadd.f32 %v997, 1.0
    %v999 = vrcp.pop %v998
    %v1000 = vmul.f32 1.0, %v999
    %v1001 = vxor.u32 %v994, 2147483648
    %v1002 = vmul.f32 %v1001, 1.442695
    %v1003 = vpow.pop %v1002
    %v1004 = vadd.f32 %v1003, 1.0
    %v1005 = vrcp.pop %v1004
    %v1006 = vmul.f32 1.0, %v1005
    %v1007 = vtanh.pop %v971
    %v1008 = vtanh.pop %v994
    %v1013 = vlaneseq
    %v1014 = vshrl.u32 %v1013, 7
    %v1015 = vsub.s32 0, %v1014
    %v1016 = vrot.slane %v726, %v1015
    %v1017 = vlaneseq
    %v1018 = vshrl.u32 %v1017, 7
    %v1019 = vsub.s32 0, %v1018
    %v1020 = vrot.slane %v727, %v1019
    %v1021 = vlaneseq
    %v1022 = vshrl.u32 %v1021, 7
    %v1023 = vsub.s32 0, %v1022
    %v1024 = vrot.slane %v728, %v1023
    %v1025 = vlaneseq
    %v1026 = vshrl.u32 %v1025, 7
    %v1027 = vsub.s32 0, %v1026
    %v1028 = vrot.slane %v729, %v1027
    %v1029 = vsel %vm842, %v1020, %v1016
    %v1030 = vsel %vm844, %v1024, %v1029
    %v1031 = vsel %vm846, %v1028, %v1030
    %v1033 = vmul.f32 %v1000, %v1031
    %1035 = vrot.lane.b32.xlu0 %v1007, 80
    %v1036 = vpop.permute.xlu0 %1035
    %v1038 = vmul.f32 %v1000, %v1036
    %1040 = vrot.lane.b32.xlu0 %v1038, 16
    %v1041 = vpop.permute.xlu0 %1040
    %v1043 = vadd.f32 %v1033, %v1041
    %v1048 = vlaneseq
    %v1049 = vshrl.u32 %v1048, 7
    %v1050 = vsub.s32 1, %v1049
    %v1051 = vrot.slane %v770, %v1050
    %v1052 = vlaneseq
    %v1053 = vshrl.u32 %v1052, 7
    %v1054 = vsub.s32 1, %v1053
    %v1055 = vrot.slane %v771, %v1054
    %v1056 = vlaneseq
    %v1057 = vshrl.u32 %v1056, 7
    %v1058 = vsub.s32 1, %v1057
    %v1059 = vrot.slane %v772, %v1058
    %v1060 = vlaneseq
    %v1061 = vshrl.u32 %v1060, 7
    %v1062 = vsub.s32 1, %v1061
    %v1063 = vrot.slane %v773, %v1062
    %v1064 = vsel %vm842, %v1055, %v1051
    %v1065 = vsel %vm844, %v1059, %v1064
    %v1066 = vsel %vm846, %v1063, %v1065
    %1067 = vrot.lane.b32.xlu0 %v1066, 64
    %v1068 = vpop.permute.xlu0 %1067
    %v1070 = vmul.f32 %v1006, %v1068
    %1072 = vrot.lane.b32.xlu0 %v1008, 80
    %v1073 = vpop.permute.xlu0 %1072
    %v1075 = vmul.f32 %v1006, %v1073
    %1077 = vrot.lane.b32.xlu0 %v1075, 16
    %v1078 = vpop.permute.xlu0 %1077
    %v1080 = vadd.f32 %v1070, %v1078
    %v1081 = vtanh.pop %v1043
    %1083 = vrot.lane.b32.xlu0 %v1081, 16
    %v1084 = vpop.permute.xlu0 %1083
    %v1086 = vmul.f32 %v1000, %v1084
    %v1087 = vtanh.pop %v1080
    %1089 = vrot.lane.b32.xlu0 %v1087, 16
    %v1090 = vpop.permute.xlu0 %1089
    %v1092 = vmul.f32 %v1006, %v1090
    %v1095 = vunpack.c.l.s4 1966171168
    %v1096 = vunpack.c.0.s8 %v1095
    %v1097 = vlaneseq
    %v1098 = vshrl.u32 %v1097, 7
    %v1099 = vsub.s32 %v1096, %v1098
    %v1100 = vrot.slane %v1086, %v1099
    %v1101 = vcombine.high %v1100, %v1100
    %v1103 = vunpack.c.l.s4 1966171168
    %v1104 = vunpack.c.0.s8 %v1103
    %v1105 = vlaneseq
    %v1106 = vshrl.u32 %v1105, 7
    %v1107 = vsub.s32 %v1104, %v1106
    %v1108 = vrot.slane %v1100, %v1107
    %v1110 = vunpack.c.l.s4 1966171168
    %v1111 = vunpack.c.0.s8 %v1110
    %v1112 = vlaneseq
    %v1113 = vshrl.u32 %v1112, 7
    %v1114 = vsub.s32 %v1111, %v1113
    %v1115 = vrot.slane %v1101, %v1114
    %v1116 = vcombine.high %v1108, %v1108
    %v1117 = vcombine.high %v1115, %v1115
    %v1120 = vunpack.c.l.s4 1966171168
    %v1121 = vunpack.c.0.s8 %v1120
    %v1122 = vlaneseq
    %v1123 = vshrl.u32 %v1122, 7
    %v1124 = vsub.s32 %v1121, %v1123
    %v1125 = vrot.slane %v1092, %v1124
    %v1126 = vcombine.high %v1125, %v1125
    %v1128 = vunpack.c.l.s4 1966171168
    %v1129 = vunpack.c.0.s8 %v1128
    %v1130 = vlaneseq
    %v1131 = vshrl.u32 %v1130, 7
    %v1132 = vsub.s32 %v1129, %v1131
    %v1133 = vrot.slane %v1125, %v1132
    %v1135 = vunpack.c.l.s4 1966171168
    %v1136 = vunpack.c.0.s8 %v1135
    %v1137 = vlaneseq
    %v1138 = vshrl.u32 %v1137, 7
    %v1139 = vsub.s32 %v1136, %v1138
    %v1140 = vrot.slane %v1126, %v1139
    %v1141 = vcombine.high %v1133, %v1133
    %v1142 = vcombine.high %v1140, %v1140
    %v1147 = vlaneseq
    %v1148 = vshrl.u32 %v1147, 7
    %v1149 = vsub.s32 0, %v1148
    %v1150 = vrot.slane %v1108, %v1149
    %v1151 = vlaneseq
    %v1152 = vshrl.u32 %v1151, 7
    %v1153 = vsub.s32 0, %v1152
    %v1154 = vrot.slane %v1115, %v1153
    %v1155 = vlaneseq
    %v1156 = vshrl.u32 %v1155, 7
    %v1157 = vsub.s32 0, %v1156
    %v1158 = vrot.slane %v1116, %v1157
    %v1159 = vlaneseq
    %v1160 = vshrl.u32 %v1159, 7
    %v1161 = vsub.s32 0, %v1160
    %v1162 = vrot.slane %v1117, %v1161
    %vm1167 = vcmask 1040384
    %v1168 = vsel %vm1167, %v794, %v1150
    %v1169 = vsel %vm1167, %v795, %v1154
    %v1170 = vsel %vm1167, %v796, %v1158
    %v1171 = vsel %vm1167, %v797, %v1162
    %1172 = vrot.lane.b32.xlu0 %v858, 64
    %v1173 = vpop.permute.xlu0 %1172
    %1174 = vrot.lane.b32.xlu0 %v862, 64
    %v1175 = vpop.permute.xlu0 %1174
    %1176 = vrot.lane.b32.xlu0 %v866, 64
    %v1177 = vpop.permute.xlu0 %1176
    %1178 = vrot.lane.b32.xlu0 %v870, 64
    %v1179 = vpop.permute.xlu0 %1178
    %v1184 = vsel %vm1167, %v1133, %v1173
    %v1185 = vsel %vm1167, %v1140, %v1175
    %v1186 = vsel %vm1167, %v1141, %v1177
    %v1187 = vsel %vm1167, %v1142, %v1179
    %v1189 = vunpack.c.l.s4 1983009808
    %v1190 = vunpack.c.0.s8 %v1189
    %v1191 = vlaneseq
    %v1192 = vshrl.u32 %v1191, 7
    %v1193 = vsub.s32 %v1190, %v1192
    %v1194 = vrot.slane %v383, %v1193
    %v1196 = vunpack.c.l.s4 1983009808
    %v1197 = vunpack.c.0.s8 %v1196
    %v1198 = vlaneseq
    %v1199 = vshrl.u32 %v1198, 7
    %v1200 = vsub.s32 %v1197, %v1199
    %v1201 = vrot.slane %v595, %v1200
    %v1203 = vunpack.c.l.s4 1983009808
    %v1204 = vunpack.c.0.s8 %v1203
    %v1205 = vlaneseq
    %v1206 = vshrl.u32 %v1205, 7
    %v1207 = vsub.s32 %v1204, %v1206
    %v1208 = vrot.slane %v384, %v1207
    %v1210 = vunpack.c.l.s4 1983009808
    %v1211 = vunpack.c.0.s8 %v1210
    %v1212 = vlaneseq
    %v1213 = vshrl.u32 %v1212, 7
    %v1214 = vsub.s32 %v1211, %v1213
    %v1215 = vrot.slane %v596, %v1214
    %1216 = vrot.lane.b32.xlu0 %v1194, 96
    %v1217 = vpop.permute.xlu0 %1216
    %1218 = vrot.lane.b32.xlu0 %v1201, 96
    %v1219 = vpop.permute.xlu0 %1218
    %1220 = vrot.lane.b32.xlu0 %v1208, 96
    %v1221 = vpop.permute.xlu0 %1220
    %1222 = vrot.lane.b32.xlu0 %v1215, 96
    %v1223 = vpop.permute.xlu0 %1222
    %v1229 = vunpack.c.l.s4 1983009808
    %v1230 = vunpack.c.0.s8 %v1229
    %v1231 = vlaneseq
    %v1232 = vshrl.u32 %v1231, 7
    %v1233 = vsub.s32 %v1230, %v1232
    %v1234 = vrot.slane %v604, %v1233
    %v1236 = vunpack.c.l.s4 1983009808
    %v1237 = vunpack.c.0.s8 %v1236
    %v1238 = vlaneseq
    %v1239 = vshrl.u32 %v1238, 7
    %v1240 = vsub.s32 %v1237, %v1239
    %v1241 = vrot.slane %v395, %v1240
    %v1243 = vunpack.c.l.s4 1983009808
    %v1244 = vunpack.c.0.s8 %v1243
    %v1245 = vlaneseq
    %v1246 = vshrl.u32 %v1245, 7
    %v1247 = vsub.s32 %v1244, %v1246
    %v1248 = vrot.slane %v605, %v1247
    %v1250 = vunpack.c.l.s4 1983009808
    %v1251 = vunpack.c.0.s8 %v1250
    %v1252 = vlaneseq
    %v1253 = vshrl.u32 %v1252, 7
    %v1254 = vsub.s32 %v1251, %v1253
    %v1255 = vrot.slane %v396, %v1254
    %1256 = vrot.lane.b32.xlu0 %v1234, 48
    %v1257 = vpop.permute.xlu0 %1256
    %1258 = vrot.lane.b32.xlu0 %v1241, 48
    %v1259 = vpop.permute.xlu0 %1258
    %1260 = vrot.lane.b32.xlu0 %v1248, 48
    %v1261 = vpop.permute.xlu0 %1260
    %1262 = vrot.lane.b32.xlu0 %v1255, 48
    %v1263 = vpop.permute.xlu0 %1262
    %1272 = vrot.lane.b32.xlu0 %v1184, 80
    %v1273 = vpop.permute.xlu0 %1272
    %1274 = vrot.lane.b32.xlu0 %v1185, 80
    %v1275 = vpop.permute.xlu0 %1274
    %1276 = vrot.lane.b32.xlu0 %v1186, 80
    %v1277 = vpop.permute.xlu0 %1276
    %1278 = vrot.lane.b32.xlu0 %v1187, 80
    %v1279 = vpop.permute.xlu0 %1278
    %v1284 = vsel %vm423, %v1217, %v1257
    %v1285 = vsel %vm423, %v1219, %v1259
    %v1286 = vsel %vm423, %v1221, %v1261
    %v1287 = vsel %vm423, %v1223, %v1263
    %v1288 = vsel %vm149, %v1284, %v1168
    %v1289 = vsel %vm149, %v1285, %v1169
    %v1290 = vsel %vm149, %v1286, %v1170
    %v1291 = vsel %vm149, %v1287, %v1171
    %vm1292 = vcmask 392192
    %v1293 = vsel %vm1292, %v1288, %v1273
    %v1294 = vsel %vm1292, %v1289, %v1275
    %v1295 = vsel %vm1292, %v1290, %v1277
    %v1296 = vsel %vm1292, %v1291, %v1279
    %v1297 = vld [vmem:[%s7] sm:$0xff]
    %v1298 = vld [vmem:[%s7 + $0x8] sm:$0xff]
    %v1299 = vld [vmem:[%s7 + $0x10] sm:$0xff]
    %v1300 = vld [vmem:[%s7 + $0x18] sm:$0xff]
    %v1301 = vld [vmem:[%s7 + $0x20] sm:$0xff]
    %v1302 = vld [vmem:[%s7 + $0x28] sm:$0xff]
    %v1303 = vld [vmem:[%s7 + $0x30] sm:$0xff]
    %v1304 = vld [vmem:[%s7 + $0x38] sm:$0xff]
    %v1305 = vld [vmem:[%s8] sm:$0x1]
    %v1307 = vlaneseq
    %v1308 = vshrl.u32 %v1307, 7
    %v1309 = vsub.s32 0, %v1308
    %v1310 = vrot.slane %v1305, %v1309
    %v1316 = vcombine.low %v1293, %v1294
    %v1317 = vcombine.low %v1295, %v1296
    %v1319 = vunpack.c.l.s4 1983009808
    %v1320 = vunpack.c.0.s8 %v1319
    %v1321 = vlaneseq
    %v1322 = vshrl.u32 %v1321, 7
    %v1323 = vsub.s32 %v1320, %v1322
    %v1324 = vrot.slane %v1316, %v1323
    %v1326 = vunpack.c.l.s4 1983009808
    %v1327 = vunpack.c.0.s8 %v1326
    %v1328 = vlaneseq
    %v1329 = vshrl.u32 %v1328, 7
    %v1330 = vsub.s32 %v1327, %v1329
    %v1331 = vrot.slane %v1317, %v1330
    %v1332 = vcombine.low %v1324, %v1331
    %v1333 = vsel %vm73, %v1332, 0
    %1335 = vmatprep.subr.mxu0 0.0
    %1336 = vmatpush1.msra.mxu0 %v1297
    %1337 = vmatprep.subr.mxu0 0.0
    %1338 = vmatpush1.msra.mxu0 %v1298
    %1339 = vmatprep.subr.mxu0 0.0
    %1340 = vmatpush1.msra.mxu0 %v1299
    %1341 = vmatprep.subr.mxu0 0.0
    %1342 = vmatpush1.msra.mxu0 %v1300
    %1343 = vmatprep.subr.mxu0 0.0
    %1344 = vmatpush1.msra.mxu0 %v1301
    %1345 = vmatprep.subr.mxu0 0.0
    %1346 = vmatpush1.msra.mxu0 %v1302
    %1347 = vmatprep.subr.mxu0 0.0
    %1348 = vmatpush1.msra.mxu0 %v1303
    %1349 = vmatprep.subr.mxu0 0.0
    %1350 = vmatpush1.msra.mxu0 %v1304
    %1351 = vmatprep.subr.mxu0 0.0
    %1352 = vmatpush1.msra.mxu0 0.0
    %1353 = vmatprep.subr.mxu0 0.0
    %1354 = vmatpush1.msra.mxu0 0.0
    %1355 = vmatprep.subr.mxu0 0.0
    %1356 = vmatpush1.msra.mxu0 0.0
    %1357 = vmatprep.subr.mxu0 0.0
    %1358 = vmatpush1.msra.mxu0 0.0
    %1359 = vmatprep.subr.mxu0 0.0
    %1360 = vmatpush1.msra.mxu0 0.0
    %1361 = vmatprep.subr.mxu0 0.0
    %1362 = vmatpush1.msra.mxu0 0.0
    %1363 = vmatprep.subr.mxu0 0.0
    %1364 = vmatpush1.msra.mxu0 0.0
    %1365 = vmatprep.subr.mxu0 0.0
    %1366 = vmatpush1.msra.mxu0 0.0
    %1367 = vmatprep.subr.mxu0 0.0
    %1368 = vmatpush1.msra.mxu0 0.0
    %1369 = vmatprep.subr.mxu0 0.0
    %1370 = vmatpush1.msra.mxu0 0.0
    %1371 = vmatprep.subr.mxu0 0.0
    %1372 = vmatpush1.msra.mxu0 0.0
    %1373 = vmatprep.subr.mxu0 0.0
    %1374 = vmatpush1.msra.mxu0 0.0
    %1375 = vmatprep.subr.mxu0 0.0
    %1376 = vmatpush1.msra.mxu0 0.0
    %1377 = vmatprep.subr.mxu0 0.0
    %1378 = vmatpush1.msra.mxu0 0.0
    %1379 = vmatprep.subr.mxu0 0.0
    %1380 = vmatpush1.msra.mxu0 0.0
    %1381 = vmatprep.subr.mxu0 0.0
    %1382 = vmatpush1.msra.mxu0 0.0
    %1383 = vmatprep.subr.mxu0 0.0
    %1384 = vmatpush1.msra.mxu0 0.0
    %1385 = vmatprep.subr.mxu0 0.0
    %1386 = vmatpush1.msra.mxu0 0.0
    %1387 = vmatprep.subr.mxu0 0.0
    %1388 = vmatpush1.msra.mxu0 0.0
    %1389 = vmatprep.subr.mxu0 0.0
    %1390 = vmatpush1.msra.mxu0 0.0
    %1391 = vmatprep.subr.mxu0 0.0
    %1392 = vmatpush1.msra.mxu0 0.0
    %1393 = vmatprep.subr.mxu0 0.0
    %1394 = vmatpush1.msra.mxu0 0.0
    %1395 = vmatprep.subr.mxu0 0.0
    %1396 = vmatpush1.msra.mxu0 0.0
    %1397 = vmatprep.subr.mxu0 0.0
    %1398 = vmatpush1.msra.mxu0 0.0
    %1399 = vmatprep.mubr.f32.mxu0 0.0
    %1400 = vmatmul.mubr.f32.gmra.mrb[0].mxu0 %v1333
    %v1401 = vpop.f32.mrb[0].mxu0
    %v1402 = vadd.f32 %v1310, %v1401
    %v1403 = vpop.f32.mrb[0].mxu0
    %1404 = vdwg.mxu0
    %v1405 = vadd.f32 %v144, %v1402
    %v1406 = vld [vmem:[%s9] sm:$0x1]
    %v1407 = vld [vmem:[%s9 + $0x1] sm:$0x1]
    %v1408 = vsel %vm149, %v1405, 0.0
    %1409 = vadd.xlane.f32.xlu0 %v1408
    %v1410 = vpop.xlane.xlu0 %1409
    %v1411 = vmul.f32 %v1410, %v153
    %v1412 = vsub.f32 %v1405, %v1411
    %v1413 = vmul.f32 %v1412, %v1412
    %v1414 = vsel %vm149, %v1413, 0.0
    %1415 = vadd.xlane.f32.xlu0 %v1414
    %v1416 = vpop.xlane.xlu0 %1415
    %v1417 = vmul.f32 %v1416, %v153
    %v1418 = vadd.f32 %v1417, 1e-06
    %v1419 = vrsqrt.pop %v1418
    %v1420 = vmul.f32 %v1412, %v1419
    %v1421 = vlaneseq
    %v1422 = vshrl.u32 %v1421, 7
    %v1423 = vsub.s32 0, %v1422
    %v1424 = vrot.slane %v1406, %v1423
    %v1425 = vmul.f32 %v1420, %v1424
    %v1426 = vlaneseq
    %v1427 = vshrl.u32 %v1426, 7
    %v1428 = vsub.s32 0, %v1427
    %v1429 = vrot.slane %v1407, %v1428
    %v1430 = vadd.f32 %v1425, %v1429
    %v1431 = vld [vmem:[%s10] sm:$0xff]
    %v1432 = vld [vmem:[%s10 + $0x8] sm:$0xff]
    %v1433 = vld [vmem:[%s10 + $0x10] sm:$0xff]
    %v1434 = vld [vmem:[%s10 + $0x18] sm:$0xff]
    %v1435 = vld [vmem:[%s11] sm:$0x1]
    %v1437 = vlaneseq
    %v1438 = vshrl.u32 %v1437, 7
    %v1439 = vsub.s32 0, %v1438
    %v1440 = vrot.slane %v1435, %v1439
    %v1443 = vsel %vm149, %v1430, 0
    %1445 = vmatprep.subr.mxu0 0.0
    %1446 = vmatpush1.msra.mxu0 %v1431
    %1447 = vmatprep.subr.mxu0 0.0
    %1448 = vmatpush1.msra.mxu0 %v1432
    %1449 = vmatprep.subr.mxu0 0.0
    %1450 = vmatpush1.msra.mxu0 %v1433
    %1451 = vmatprep.subr.mxu0 0.0
    %1452 = vmatpush1.msra.mxu0 %v1434
    %1453 = vmatprep.subr.mxu0 0.0
    %1454 = vmatpush1.msra.mxu0 0.0
    %1455 = vmatprep.subr.mxu0 0.0
    %1456 = vmatpush1.msra.mxu0 0.0
    %1457 = vmatprep.subr.mxu0 0.0
    %1458 = vmatpush1.msra.mxu0 0.0
    %1459 = vmatprep.subr.mxu0 0.0
    %1460 = vmatpush1.msra.mxu0 0.0
    %1461 = vmatprep.subr.mxu0 0.0
    %1462 = vmatpush1.msra.mxu0 0.0
    %1463 = vmatprep.subr.mxu0 0.0
    %1464 = vmatpush1.msra.mxu0 0.0
    %1465 = vmatprep.subr.mxu0 0.0
    %1466 = vmatpush1.msra.mxu0 0.0
    %1467 = vmatprep.subr.mxu0 0.0
    %1468 = vmatpush1.msra.mxu0 0.0
    %1469 = vmatprep.subr.mxu0 0.0
    %1470 = vmatpush1.msra.mxu0 0.0
    %1471 = vmatprep.subr.mxu0 0.0
    %1472 = vmatpush1.msra.mxu0 0.0
    %1473 = vmatprep.subr.mxu0 0.0
    %1474 = vmatpush1.msra.mxu0 0.0
    %1475 = vmatprep.subr.mxu0 0.0
    %1476 = vmatpush1.msra.mxu0 0.0
    %1477 = vmatprep.subr.mxu0 0.0
    %1478 = vmatpush1.msra.mxu0 0.0
    %1479 = vmatprep.subr.mxu0 0.0
    %1480 = vmatpush1.msra.mxu0 0.0
    %1481 = vmatprep.subr.mxu0 0.0
    %1482 = vmatpush1.msra.mxu0 0.0
    %1483 = vmatprep.subr.mxu0 0.0
    %1484 = vmatpush1.msra.mxu0 0.0
    %1485 = vmatprep.subr.mxu0 0.0
    %1486 = vmatpush1.msra.mxu0 0.0
    %1487 = vmatprep.subr.mxu0 0.0
    %1488 = vmatpush1.msra.mxu0 0.0
    %1489 = vmatprep.subr.mxu0 0.0
    %1490 = vmatpush1.msra.mxu0 0.0
    %1491 = vmatprep.subr.mxu0 0.0
    %1492 = vmatpush1.msra.mxu0 0.0
    %1493 = vmatprep.subr.mxu0 0.0
    %1494 = vmatpush1.msra.mxu0 0.0
    %1495 = vmatprep.subr.mxu0 0.0
    %1496 = vmatpush1.msra.mxu0 0.0
    %1497 = vmatprep.subr.mxu0 0.0
    %1498 = vmatpush1.msra.mxu0 0.0
    %1499 = vmatprep.subr.mxu0 0.0
    %1500 = vmatpush1.msra.mxu0 0.0
    %1501 = vmatprep.subr.mxu0 0.0
    %1502 = vmatpush1.msra.mxu0 0.0
    %1503 = vmatprep.subr.mxu0 0.0
    %1504 = vmatpush1.msra.mxu0 0.0
    %1505 = vmatprep.subr.mxu0 0.0
    %1506 = vmatpush1.msra.mxu0 0.0
    %1507 = vmatprep.subr.mxu0 0.0
    %1508 = vmatpush1.msra.mxu0 0.0
    %1509 = vmatprep.mubr.f32.mxu0 0.0
    %1510 = vmatmul.mubr.f32.gmra.mrb[0].mxu0 %v1443
    %v1511 = vpop.f32.mrb[0].mxu0
    %v1512 = vadd.f32 %v1440, %v1511
    %v1513 = vpop.f32.mrb[0].mxu0
    %1514 = vdwg.mxu0
    %v1515 = vmul.f32 %v1512, %v1512
    %v1516 = vmul.f32 %v1512, %v1515
    %v1517 = vmul.f32 %v1516, 0.044715
    %v1518 = vadd.f32 %v1512, %v1517
    %v1519 = vmul.f32 %v1518, 0.7978846
    %v1520 = vtanh.pop %v1519
    %v1521 = vadd.f32 %v1520, 1.0
    %v1522 = vmul.f32 %v1521, 0.5
    %v1523 = vmul.f32 %v1512, %v1522
    %v1524 = vld [vmem:[%s12] sm:$0xff]
    %v1525 = vld [vmem:[%s12 + $0x8] sm:$0xff]
    %v1526 = vld [vmem:[%s12 + $0x10] sm:$0xff]
    %v1527 = vld [vmem:[%s12 + $0x18] sm:$0xff]
    %v1528 = vld [vmem:[%s12 + $0x20] sm:$0xff]
    %v1529 = vld [vmem:[%s12 + $0x28] sm:$0xff]
    %v1530 = vld [vmem:[%s12 + $0x30] sm:$0xff]
    %v1531 = vld [vmem:[%s12 + $0x38] sm:$0xff]
    %v1532 = vld [vmem:[%s12 + $0x40] sm:$0xff]
    %v1533 = vld [vmem:[%s12 + $0x48] sm:$0xff]
    %v1534 = vld [vmem:[%s12 + $0x50] sm:$0xff]
    %v1535 = vld [vmem:[%s12 + $0x58] sm:$0xff]
    %v1536 = vld [vmem:[%s13] sm:$0x1]
    %v1538 = vlaneseq
    %v1539 = vshrl.u32 %v1538, 7
    %v1540 = vsub.s32 0, %v1539
    %v1541 = vrot.slane %v1536, %v1540
    %vm1543 = vcmask 785408
    %v1545 = vsel %vm1543, %v1523, 0
    %1547 = vmatprep.subr.mxu0 0.0
    %1548 = vmatpush1.msra.mxu0 %v1524
    %1549 = vmatprep.subr.mxu0 0.0
    %1550 = vmatpush1.msra.mxu0 %v1525
    %1551 = vmatprep.subr.mxu0 0.0
    %1552 = vmatpush1.msra.mxu0 %v1526
    %1553 = vmatprep.subr.mxu0 0.0
    %1554 = vmatpush1.msra.mxu0 %v1527
    %1555 = vmatprep.subr.mxu0 0.0
    %1556 = vmatpush1.msra.mxu0 %v1528
    %1557 = vmatprep.subr.mxu0 0.0
    %1558 = vmatpush1.msra.mxu0 %v1529
    %1559 = vmatprep.subr.mxu0 0.0
    %1560 = vmatpush1.msra.mxu0 %v1530
    %1561 = vmatprep.subr.mxu0 0.0
    %1562 = vmatpush1.msra.mxu0 %v1531
    %1563 = vmatprep.subr.mxu0 0.0
    %1564 = vmatpush1.msra.mxu0 %v1532
    %1565 = vmatprep.subr.mxu0 0.0
    %1566 = vmatpush1.msra.mxu0 %v1533
    %1567 = vmatprep.subr.mxu0 0.0
    %1568 = vmatpush1.msra.mxu0 %v1534
    %1569 = vmatprep.subr.mxu0 0.0
    %1570 = vmatpush1.msra.mxu0 %v1535
    %1571 = vmatprep.subr.mxu0 0.0
    %1572 = vmatpush1.msra.mxu0 0.0
    %1573 = vmatprep.subr.mxu0 0.0
    %1574 = vmatpush1.msra.mxu0 0.0
    %1575 = vmatprep.subr.mxu0 0.0
    %1576 = vmatpush1.msra.mxu0 0.0
    %1577 = vmatprep.subr.mxu0 0.0
    %1578 = vmatpush1.msra.mxu0 0.0
    %1579 = vmatprep.subr.mxu0 0.0
    %1580 = vmatpush1.msra.mxu0 0.0
    %1581 = vmatprep.subr.mxu0 0.0
    %1582 = vmatpush1.msra.mxu0 0.0
    %1583 = vmatprep.subr.mxu0 0.0
    %1584 = vmatpush1.msra.mxu0 0.0
    %1585 = vmatprep.subr.mxu0 0.0
    %1586 = vmatpush1.msra.mxu0 0.0
    %1587 = vmatprep.subr.mxu0 0.0
    %1588 = vmatpush1.msra.mxu0 0.0
    %1589 = vmatprep.subr.mxu0 0.0
    %1590 = vmatpush1.msra.mxu0 0.0
    %1591 = vmatprep.subr.mxu0 0.0
    %1592 = vmatpush1.msra.mxu0 0.0
    %1593 = vmatprep.subr.mxu0 0.0
    %1594 = vmatpush1.msra.mxu0 0.0
    %1595 = vmatprep.subr.mxu0 0.0
    %1596 = vmatpush1.msra.mxu0 0.0
    %1597 = vmatprep.subr.mxu0 0.0
    %1598 = vmatpush1.msra.mxu0 0.0
    %1599 = vmatprep.subr.mxu0 0.0
    %1600 = vmatpush1.msra.mxu0 0.0
    %1601 = vmatprep.subr.mxu0 0.0
    %1602 = vmatpush1.msra.mxu0 0.0
    %1603 = vmatprep.subr.mxu0 0.0
    %1604 = vmatpush1.msra.mxu0 0.0
    %1605 = vmatprep.subr.mxu0 0.0
    %1606 = vmatpush1.msra.mxu0 0.0
    %1607 = vmatprep.subr.mxu0 0.0
    %1608 = vmatpush1.msra.mxu0 0.0
    %1609 = vmatprep.subr.mxu0 0.0
    %1610 = vmatpush1.msra.mxu0 0.0
    %1611 = vmatprep.mubr.f32.mxu0 0.0
    %1612 = vmatmul.mubr.f32.gmra.mrb[0].mxu0 %v1545
    %v1613 = vpop.f32.mrb[0].mxu0
    %v1614 = vadd.f32 %v1541, %v1613
    %v1615 = vpop.f32.mrb[0].mxu0
    %1616 = vdwg.mxu0
    %v1617 = vadd.f32 %v1405, %v1614
    %v1618 = vld [vmem:[%s14] sm:$0x1]
    %v1619 = vld [vmem:[%s14 + $0x1] sm:$0x1]
    %v1620 = vsel %vm149, %v1617, 0.0
    %1621 = vadd.xlane.f32.xlu0 %v1620
    %v1622 = vpop.xlane.xlu0 %1621
    %v1623 = vmul.f32 %v1622, %v153
    %v1624 = vsub.f32 %v1617, %v1623
    %v1625 = vmul.f32 %v1624, %v1624
    %v1626 = vsel %vm149, %v1625, 0.0
    %1627 = vadd.xlane.f32.xlu0 %v1626
    %v1628 = vpop.xlane.xlu0 %1627
    %v1629 = vmul.f32 %v1628, %v153
    %v1630 = vadd.f32 %v1629, 1e-06
    %v1631 = vrsqrt.pop %v1630
    %v1632 = vmul.f32 %v1624, %v1631
    %v1633 = vlaneseq
    %v1634 = vshrl.u32 %v1633, 7
    %v1635 = vsub.s32 0, %v1634
    %v1636 = vrot.slane %v1618, %v1635
    %v1637 = vmul.f32 %v1632, %v1636
    %v1638 = vlaneseq
    %v1639 = vshrl.u32 %v1638, 7
    %v1640 = vsub.s32 0, %v1639
    %v1641 = vrot.slane %v1619, %v1640
    %v1642 = vadd.f32 %v1637, %v1641
    %v1644 = vcombine.high %v1642, %v1642
    %vm1646 = vcmask 257024
    %v1647 = vsel %vm1646, %v1642, 0.0
    %v1648 = vrot.slane %v1647, 4
    %v1649 = vadd.f32 %v1647, %v1648
    %v1650 = vrot.slane %v1649, 2
    %v1651 = vadd.f32 %v1649, %v1650
    %v1652 = vrot.slane %v1651, 1
    %v1653 = vadd.f32 %v1651, %v1652
    %v1654 = vsel %vm1646, %v1644, 0.0
    %v1655 = vrot.slane %v1654, 4
    %v1656 = vadd.f32 %v1654, %v1655
    %v1657 = vrot.slane %v1656, 2
    %v1658 = vadd.f32 %v1656, %v1657
    %v1659 = vrot.slane %v1658, 1
    %v1660 = vadd.f32 %v1658, %v1659
    %v1661 = vrcp.pop 4.0
    %v1662 = vmul.f32 %v1653, %v1661
    %v1663 = vmul.f32 %v1660, %v1661
    %v1664 = vld [vmem:[%s15] sm:$0xff]
    %v1665 = vld [vmem:[%s15 + $0x8] sm:$0xff]
    %v1666 = vld [vmem:[%s15 + $0x10] sm:$0xff]
    %v1667 = vld [vmem:[%s15 + $0x18] sm:$0xff]
    %v1668 = vld [vmem:[%s16] sm:$0x1]
    %v1670 = vlaneseq
    %v1671 = vshrl.u32 %v1670, 7
    %v1672 = vsub.s32 0, %v1671
    %v1673 = vrot.slane %v1668, %v1672
    %v1677 = vsel %vm842, %v1663, %v1662
    %v1678 = vsel %vm149, %v1677, 0
    %1680 = vmatprep.subr.mxu0 0.0
    %1681 = vmatpush1.msra.mxu0 %v1664
    %1682 = vmatprep.subr.mxu0 0.0
    %1683 = vmatpush1.msra.mxu0 %v1665
    %1684 = vmatprep.subr.mxu0 0.0
    %1685 = vmatpush1.msra.mxu0 %v1666
    %1686 = vmatprep.subr.mxu0 0.0
    %1687 = vmatpush1.msra.mxu0 %v1667
    %1688 = vmatprep.subr.mxu0 0.0
    %1689 = vmatpush1.msra.mxu0 0.0
    %1690 = vmatprep.subr.mxu0 0.0
    %1691 = vmatpush1.msra.mxu0 0.0
    %1692 = vmatprep.subr.mxu0 0.0
    %1693 = vmatpush1.msra.mxu0 0.0
    %1694 = vmatprep.subr.mxu0 0.0
    %1695 = vmatpush1.msra.mxu0 0.0
    %1696 = vmatprep.subr.mxu0 0.0
    %1697 = vmatpush1.msra.mxu0 0.0
    %1698 = vmatprep.subr.mxu0 0.0
    %1699 = vmatpush1.msra.mxu0 0.0
    %1700 = vmatprep.subr.mxu0 0.0
    %1701 = vmatpush1.msra.mxu0 0.0
    %1702 = vmatprep.subr.mxu0 0.0
    %1703 = vmatpush1.msra.mxu0 0.0
    %1704 = vmatprep.subr.mxu0 0.0
    %1705 = vmatpush1.msra.mxu0 0.0
    %1706 = vmatprep.subr.mxu0 0.0
    %1707 = vmatpush1.msra.mxu0 0.0
    %1708 = vmatprep.subr.mxu0 0.0
    %1709 = vmatpush1.msra.mxu0 0.0
    %1710 = vmatprep.subr.mxu0 0.0
    %1711 = vmatpush1.msra.mxu0 0.0
    %1712 = vmatprep.subr.mxu0 0.0
    %1713 = vmatpush1.msra.mxu0 0.0
    %1714 = vmatprep.subr.mxu0 0.0
    %1715 = vmatpush1.msra.mxu0 0.0
    %1716 = vmatprep.subr.mxu0 0.0
    %1717 = vmatpush1.msra.mxu0 0.0
    %1718 = vmatprep.subr.mxu0 0.0
    %1719 = vmatpush1.msra.mxu0 0.0
    %1720 = vmatprep.subr.mxu0 0.0
    %1721 = vmatpush1.msra.mxu0 0.0
    %1722 = vmatprep.subr.mxu0 0.0
    %1723 = vmatpush1.msra.mxu0 0.0
    %1724 = vmatprep.subr.mxu0 0.0
    %1725 = vmatpush1.msra.mxu0 0.0
    %1726 = vmatprep.subr.mxu0 0.0
    %1727 = vmatpush1.msra.mxu0 0.0
    %1728 = vmatprep.subr.mxu0 0.0
    %1729 = vmatpush1.msra.mxu0 0.0
    %1730 = vmatprep.subr.mxu0 0.0
    %1731 = vmatpush1.msra.mxu0 0.0
    %1732 = vmatprep.subr.mxu0 0.0
    %1733 = vmatpush1.msra.mxu0 0.0
    %1734 = vmatprep.subr.mxu0 0.0
    %1735 = vmatpush1.msra.mxu0 0.0
    %1736 = vmatprep.subr.mxu0 0.0
    %1737 = vmatpush1.msra.mxu0 0.0
    %1738 = vmatprep.subr.mxu0 0.0
    %1739 = vmatpush1.msra.mxu0 0.0
    %1740 = vmatprep.subr.mxu0 0.0
    %1741 = vmatpush1.msra.mxu0 0.0
    %1742 = vmatprep.subr.mxu0 0.0
    %1743 = vmatpush1.msra.mxu0 0.0
    %1744 = vmatprep.mubr.f32.mxu0 0.0
    %1745 = vmatmul.mubr.f32.gmra.mrb[0].mxu0 %v1678
    %v1746 = vpop.f32.mrb[0].mxu0
    %v1747 = vadd.f32 %v1673, %v1746
    %v1748 = vpop.f32.mrb[0].mxu0
    %1749 = vdwg.mxu0
    %vm1750 = vcmask 74752
    %1751 = vst.msk [vmem:[#allocation2] sm:$0x3] %vm1750, %v1747
    // Predicated region
    $region70: #{_lambda_.3} parent=1 // pred_check
      _
    $region71: #{_lambda_.3} parent=1 // pred_check_branch
      %1753 = sbr.rel (0) target = $region73
    $region72: #{_lambda_.3} parent=1 // pred_region
      %s1755 = ssub.s32 32, 32
      %1756 = vsyncadd [#allocation3], %s1755
      %s1758 = sshll.u32 [#allocation2], 4
      %s1759 = int_to_ptr.vmem [resolvable:$true] %s1758
      %1761 = dma.vmem_to_hbm [thread:$0]  %s1759, 32, %s17, [#allocation3]
    $region73: #{_lambda_.3} parent=1 // pred_fallthru
      _
    // Predicated region
    $region74: #{_lambda_.3} parent=1 // pred_check
      _
    $region75: #{_lambda_.3} parent=1 // pred_check_branch
      %1763 = sbr.rel (0) target = $region77
    $region76: #{_lambda_.3} parent=1 // pred_region
      %1764 = dma.done [#allocation3], 32
    $region77: #{_lambda_.3} parent=1 // pred_fallthru
      _
    %1765 = vsyncpa [#allocation3], 1

// kernel: _lambda_.2
$region0: #{_lambda_.2}
  #allocation0 [shape = 'u32[]', space=smem, size = 0x4, offset = 0x4, fixed_abs, tag = 'smem constant byte address 0x4 - core index']
  #allocation1 [shape = 'u32[144,128]{1,0:T(1,128)}', space=vmem, size = 0x12000, scoped, tag = 'internal scratch']
  %s0 = inlined_call_operand.vmem [shape: f32[32,48], index: 0, kind: input, shape index: {}]
  %s1 = inlined_call_operand.vmem [shape: f32[48,16], index: 1, kind: input, shape index: {}]
  %s2 = inlined_call_operand.vmem [shape: f32[1,16], index: 2, kind: input, shape index: {}]
  %s3 = inlined_call_operand.vmem [shape: f32[2,16], index: 3, kind: input, shape index: {}]
  %s4 = inlined_call_operand.vmem [shape: f32[16,128], index: 4, kind: input, shape index: {}]
  %s5 = inlined_call_operand.vmem [shape: f32[1,128], index: 5, kind: input, shape index: {}]
  %s6 = inlined_call_operand.vmem [shape: f32[2,16,64], index: 6, kind: input, shape index: {}]
  %s7 = inlined_call_operand.vmem [shape: f32[32,16], index: 7, kind: input, shape index: {}]
  %s8 = inlined_call_operand.vmem [shape: f32[1,16], index: 8, kind: input, shape index: {}]
  %s9 = inlined_call_operand.vmem [shape: f32[2,16], index: 9, kind: input, shape index: {}]
  %s10 = inlined_call_operand.vmem [shape: f32[16,48], index: 10, kind: input, shape index: {}]
  %s11 = inlined_call_operand.vmem [shape: f32[1,48], index: 11, kind: input, shape index: {}]
  %s12 = inlined_call_operand.vmem [shape: f32[48,16], index: 12, kind: input, shape index: {}]
  %s13 = inlined_call_operand.vmem [shape: f32[1,16], index: 13, kind: input, shape index: {}]
  %s14 = inlined_call_operand.vmem [shape: f32[32,16], index: 14, kind: output, shape index: {}]
  %s15 = sld [smem:[#allocation0]]
  $region66: #{_lambda_.2} parent=0
    _
  %s17 = ssub.s32 1, %s15
  %s18 = scalar_select 0, %s17, %s15
  // Predicated region
  $region2: #{_lambda_.2} parent=0 // pred_check
    _
  $region3: #{_lambda_.2} parent=0 // pred_check_branch
    %20 = sbr.rel (0) target = $region5
  $region4: #{_lambda_.2} parent=0 // pred_region
    _
  $region5: #{_lambda_.2} parent=0 // pred_fallthru
    _
  // Predicated region
  $region6: #{_lambda_.2} parent=0 // pred_check
    _
  $region7: #{_lambda_.2} parent=0 // pred_check_branch
    %22 = sbr.rel (0) target = $region9
  $region8: #{_lambda_.2} parent=0 // pred_region
    _
  $region9: #{_lambda_.2} parent=0 // pred_fallthru
    _
  // Predicated region
  $region10: #{_lambda_.2} parent=0 // pred_check
    _
  $region11: #{_lambda_.2} parent=0 // pred_check_branch
    %24 = sbr.rel (0) target = $region13
  $region12: #{_lambda_.2} parent=0 // pred_region
    _
  $region13: #{_lambda_.2} parent=0 // pred_fallthru
    _
  // Predicated region
  $region14: #{_lambda_.2} parent=0 // pred_check
    _
  $region15: #{_lambda_.2} parent=0 // pred_check_branch
    %26 = sbr.rel (0) target = $region17
  $region16: #{_lambda_.2} parent=0 // pred_region
    _
  $region17: #{_lambda_.2} parent=0 // pred_fallthru
    _
  // Predicated region
  $region18: #{_lambda_.2} parent=0 // pred_check
    _
  $region19: #{_lambda_.2} parent=0 // pred_check_branch
    %28 = sbr.rel (0) target = $region21
  $region20: #{_lambda_.2} parent=0 // pred_region
    _
  $region21: #{_lambda_.2} parent=0 // pred_fallthru
    _
  // Predicated region
  $region22: #{_lambda_.2} parent=0 // pred_check
    _
  $region23: #{_lambda_.2} parent=0 // pred_check_branch
    %30 = sbr.rel (0) target = $region25
  $region24: #{_lambda_.2} parent=0 // pred_region
    _
  $region25: #{_lambda_.2} parent=0 // pred_fallthru
    _
  // Predicated region
  $region26: #{_lambda_.2} parent=0 // pred_check
    _
  $region27: #{_lambda_.2} parent=0 // pred_check_branch
    %32 = sbr.rel (0) target = $region29
  $region28: #{_lambda_.2} parent=0 // pred_region
    _
  $region29: #{_lambda_.2} parent=0 // pred_fallthru
    _
  // Predicated region
  $region30: #{_lambda_.2} parent=0 // pred_check
    _
  $region31: #{_lambda_.2} parent=0 // pred_check_branch
    %34 = sbr.rel (0) target = $region33
  $region32: #{_lambda_.2} parent=0 // pred_region
    _
  $region33: #{_lambda_.2} parent=0 // pred_fallthru
    _
  // Predicated region
  $region34: #{_lambda_.2} parent=0 // pred_check
    _
  $region35: #{_lambda_.2} parent=0 // pred_check_branch
    %36 = sbr.rel (0) target = $region37
  $region36: #{_lambda_.2} parent=0 // pred_region
    _
  $region37: #{_lambda_.2} parent=0 // pred_fallthru
    _
  // Predicated region
  $region38: #{_lambda_.2} parent=0 // pred_check
    _
  $region39: #{_lambda_.2} parent=0 // pred_check_branch
    %38 = sbr.rel (0) target = $region41
  $region40: #{_lambda_.2} parent=0 // pred_region
    _
  $region41: #{_lambda_.2} parent=0 // pred_fallthru
    _
  // Predicated region
  $region42: #{_lambda_.2} parent=0 // pred_check
    _
  $region43: #{_lambda_.2} parent=0 // pred_check_branch
    %40 = sbr.rel (0) target = $region45
  $region44: #{_lambda_.2} parent=0 // pred_region
    _
  $region45: #{_lambda_.2} parent=0 // pred_fallthru
    _
  // Predicated region
  $region46: #{_lambda_.2} parent=0 // pred_check
    _
  $region47: #{_lambda_.2} parent=0 // pred_check_branch
    %42 = sbr.rel (0) target = $region49
  $region48: #{_lambda_.2} parent=0 // pred_region
    _
  $region49: #{_lambda_.2} parent=0 // pred_fallthru
    _
  // Predicated region
  $region50: #{_lambda_.2} parent=0 // pred_check
    _
  $region51: #{_lambda_.2} parent=0 // pred_check_branch
    %44 = sbr.rel (0) target = $region53
  $region52: #{_lambda_.2} parent=0 // pred_region
    _
  $region53: #{_lambda_.2} parent=0 // pred_fallthru
    _
  // Predicated region
  $region54: #{_lambda_.2} parent=0 // pred_check
    _
  $region55: #{_lambda_.2} parent=0 // pred_check_branch
    %46 = sbr.rel (0) target = $region57
  $region56: #{_lambda_.2} parent=0 // pred_region
    _
  $region57: #{_lambda_.2} parent=0 // pred_fallthru
    _
  %v47 = vld [vmem:[%s0] sm:$0xff]
  %v48 = vld [vmem:[%s0 + $0x8] sm:$0xff]
  %v49 = vld [vmem:[%s0 + $0x10] sm:$0xff]
  %v50 = vld [vmem:[%s0 + $0x18] sm:$0xff]
  %v51 = vld [vmem:[%s1] sm:$0xff]
  %v52 = vld [vmem:[%s1 + $0x8] sm:$0xff]
  %v53 = vld [vmem:[%s1 + $0x10] sm:$0xff]
  %v54 = vld [vmem:[%s1 + $0x18] sm:$0xff]
  %v55 = vld [vmem:[%s1 + $0x20] sm:$0xff]
  %v56 = vld [vmem:[%s1 + $0x28] sm:$0xff]
  %v57 = vld [vmem:[%s2] sm:$0x1]
  %v59 = vlaneseq
  %v60 = vshrl.u32 %v59, 7
  %v61 = vsub.s32 0, %v60
  %v62 = vrot.slane %v57, %v61
  %vm64 = vcmask 392192
  %v66 = vsel %vm64, %v47, 0
  %v69 = vsel %vm64, %v48, 0
  %v72 = vsel %vm64, %v49, 0
  %v75 = vsel %vm64, %v50, 0
  %77 = vmatprep.subr.mxu0 0.0
  %78 = vmatpush1.msra.mxu0 %v51
  %79 = vmatprep.subr.mxu0 0.0
  %80 = vmatpush1.msra.mxu0 %v52
  %81 = vmatprep.subr.mxu0 0.0
  %82 = vmatpush1.msra.mxu0 %v53
  %83 = vmatprep.subr.mxu0 0.0
  %84 = vmatpush1.msra.mxu0 %v54
  %85 = vmatprep.subr.mxu0 0.0
  %86 = vmatpush1.msra.mxu0 %v55
  %87 = vmatprep.subr.mxu0 0.0
  %88 = vmatpush1.msra.mxu0 %v56
  %89 = vmatprep.subr.mxu0 0.0
  %90 = vmatpush1.msra.mxu0 0.0
  %91 = vmatprep.subr.mxu0 0.0
  %92 = vmatpush1.msra.mxu0 0.0
  %93 = vmatprep.subr.mxu0 0.0
  %94 = vmatpush1.msra.mxu0 0.0
  %95 = vmatprep.subr.mxu0 0.0
  %96 = vmatpush1.msra.mxu0 0.0
  %97 = vmatprep.subr.mxu0 0.0
  %98 = vmatpush1.msra.mxu0 0.0
  %99 = vmatprep.subr.mxu0 0.0
  %100 = vmatpush1.msra.mxu0 0.0
  %101 = vmatprep.subr.mxu0 0.0
  %102 = vmatpush1.msra.mxu0 0.0
  %103 = vmatprep.subr.mxu0 0.0
  %104 = vmatpush1.msra.mxu0 0.0
  %105 = vmatprep.subr.mxu0 0.0
  %106 = vmatpush1.msra.mxu0 0.0
  %107 = vmatprep.subr.mxu0 0.0
  %108 = vmatpush1.msra.mxu0 0.0
  %109 = vmatprep.subr.mxu0 0.0
  %110 = vmatpush1.msra.mxu0 0.0
  %111 = vmatprep.subr.mxu0 0.0
  %112 = vmatpush1.msra.mxu0 0.0
  %113 = vmatprep.subr.mxu0 0.0
  %114 = vmatpush1.msra.mxu0 0.0
  %115 = vmatprep.subr.mxu0 0.0
  %116 = vmatpush1.msra.mxu0 0.0
  %117 = vmatprep.subr.mxu0 0.0
  %118 = vmatpush1.msra.mxu0 0.0
  %119 = vmatprep.subr.mxu0 0.0
  %120 = vmatpush1.msra.mxu0 0.0
  %121 = vmatprep.subr.mxu0 0.0
  %122 = vmatpush1.msra.mxu0 0.0
  %123 = vmatprep.subr.mxu0 0.0
  %124 = vmatpush1.msra.mxu0 0.0
  %125 = vmatprep.subr.mxu0 0.0
  %126 = vmatpush1.msra.mxu0 0.0
  %127 = vmatprep.subr.mxu0 0.0
  %128 = vmatpush1.msra.mxu0 0.0
  %129 = vmatprep.subr.mxu0 0.0
  %130 = vmatpush1.msra.mxu0 0.0
  %131 = vmatprep.subr.mxu0 0.0
  %132 = vmatpush1.msra.mxu0 0.0
  %133 = vmatprep.subr.mxu0 0.0
  %134 = vmatpush1.msra.mxu0 0.0
  %135 = vmatprep.subr.mxu0 0.0
  %136 = vmatpush1.msra.mxu0 0.0
  %137 = vmatprep.subr.mxu0 0.0
  %138 = vmatpush1.msra.mxu0 0.0
  %139 = vmatprep.subr.mxu0 0.0
  %140 = vmatpush1.msra.mxu0 0.0
  %141 = vmatprep.mubr.f32.mxu0 0.0
  %142 = vmatmul.mubr.f32.gmra.mrb[0].mxu0 %v66
  %v143 = vpop.f32.mrb[0].mxu0
  %v144 = vadd.f32 %v62, %v143
  %v145 = vpop.f32.mrb[0].mxu0
  %146 = vmatprep.mubr.f32.mxu0 0.0
  %147 = vmatmul.mubr.f32.gmra.mrb[0].mxu0 %v69
  %v148 = vpop.f32.mrb[0].mxu0
  %v149 = vadd.f32 %v62, %v148
  %v150 = vpop.f32.mrb[0].mxu0
  %151 = vmatprep.mubr.f32.mxu0 0.0
  %152 = vmatmul.mubr.f32.gmra.mrb[0].mxu0 %v72
  %v153 = vpop.f32.mrb[0].mxu0
  %v154 = vadd.f32 %v62, %v153
  %v155 = vpop.f32.mrb[0].mxu0
  %156 = vmatprep.mubr.f32.mxu0 0.0
  %157 = vmatmul.mubr.f32.gmra.mrb[0].mxu0 %v75
  %v158 = vpop.f32.mrb[0].mxu0
  %v159 = vadd.f32 %v62, %v158
  %v160 = vpop.f32.mrb[0].mxu0
  %161 = vdwg.mxu0
  %v162 = vld [vmem:[%s3] sm:$0x1]
  %v163 = vld [vmem:[%s3 + $0x1] sm:$0x1]
  %vm164 = vcmask 130048
  %v165 = vsel %vm164, %v144, 0.0
  %166 = vadd.xlane.f32.xlu0 %v165
  %v167 = vpop.xlane.xlu0 %166
  %v168 = vsel %vm164, %v149, 0.0
  %169 = vadd.xlane.f32.xlu0 %v168
  %v170 = vpop.xlane.xlu0 %169
  %v171 = vsel %vm164, %v154, 0.0
  %172 = vadd.xlane.f32.xlu0 %v171
  %v173 = vpop.xlane.xlu0 %172
  %v174 = vsel %vm164, %v159, 0.0
  %175 = vadd.xlane.f32.xlu0 %v174
  %v176 = vpop.xlane.xlu0 %175
  %v177 = vrcp.pop 16.0
  %v178 = vmul.f32 %v167, %v177
  %v179 = vmul.f32 %v170, %v177
  %v180 = vmul.f32 %v173, %v177
  %v181 = vmul.f32 %v176, %v177
  %v182 = vsub.f32 %v144, %v178
  %v183 = vsub.f32 %v149, %v179
  %v184 = vsub.f32 %v154, %v180
  %v185 = vsub.f32 %v159, %v181
  %v186 = vmul.f32 %v182, %v182
  %v187 = vmul.f32 %v183, %v183
  %v188 = vmul.f32 %v184, %v184
  %v189 = vmul.f32 %v185, %v185
  %v190 = vsel %vm164, %v186, 0.0
  %191 = vadd.xlane.f32.xlu0 %v190
  %v192 = vpop.xlane.xlu0 %191
  %v193 = vsel %vm164, %v187, 0.0
  %194 = vadd.xlane.f32.xlu0 %v193
  %v195 = vpop.xlane.xlu0 %194
  %v196 = vsel %vm164, %v188, 0.0
  %197 = vadd.xlane.f32.xlu0 %v196
  %v198 = vpop.xlane.xlu0 %197
  %v199 = vsel %vm164, %v189, 0.0
  %200 = vadd.xlane.f32.xlu0 %v199
  %v201 = vpop.xlane.xlu0 %200
  %v202 = vmul.f32 %v192, %v177
  %v203 = vmul.f32 %v195, %v177
  %v204 = vmul.f32 %v198, %v177
  %v205 = vmul.f32 %v201, %v177
  %v206 = vadd.f32 %v202, 1e-06
  %v207 = vadd.f32 %v203, 1e-06
  %v208 = vadd.f32 %v204, 1e-06
  %v209 = vadd.f32 %v205, 1e-06
  %v210 = vrsqrt.pop %v206
  %v211 = vrsqrt.pop %v207
  %v212 = vrsqrt.pop %v208
  %v213 = vrsqrt.pop %v209
  %v214 = vmul.f32 %v182, %v210
  %v215 = vmul.f32 %v183, %v211
  %v216 = vmul.f32 %v184, %v212
  %v217 = vmul.f32 %v185, %v213
  %v218 = vlaneseq
  %v219 = vshrl.u32 %v218, 7
  %v220 = vsub.s32 0, %v219
  %v221 = vrot.slane %v162, %v220
  %v222 = vmul.f32 %v214, %v221
  %v223 = vmul.f32 %v215, %v221
  %v224 = vmul.f32 %v216, %v221
  %v225 = vmul.f32 %v217, %v221
  %v226 = vlaneseq
  %v227 = vshrl.u32 %v226, 7
  %v228 = vsub.s32 0, %v227
  %v229 = vrot.slane %v163, %v228
  %v230 = vadd.f32 %v222, %v229
  %v231 = vadd.f32 %v223, %v229
  %v232 = vadd.f32 %v224, %v229
  %v233 = vadd.f32 %v225, %v229
  %v234 = vld [vmem:[%s4] sm:$0xff]
  %v235 = vld [vmem:[%s4 + $0x8] sm:$0xff]
  %v236 = vld [vmem:[%s5] sm:$0x1]
  %v238 = vlaneseq
  %v239 = vshrl.u32 %v238, 7
  %v240 = vsub.s32 0, %v239
  %v241 = vrot.slane %v236, %v240
  %v244 = vsel %vm164, %v230, 0
  %v247 = vsel %vm164, %v231, 0
  %v250 = vsel %vm164, %v232, 0
  %v253 = vsel %vm164, %v233, 0
  %255 = vmatprep.subr.mxu0 0.0
  %256 = vmatpush1.msra.mxu0 %v234
  %257 = vmatprep.subr.mxu0 0.0
  %258 = vmatpush1.msra.mxu0 %v235
  %259 = vmatprep.subr.mxu0 0.0
  %260 = vmatpush1.msra.mxu0 0.0
  %261 = vmatprep.subr.mxu0 0.0
  %262 = vmatpush1.msra.mxu0 0.0
  %263 = vmatprep.subr.mxu0 0.0
  %264 = vmatpush1.msra.mxu0 0.0
  %265 = vmatprep.subr.mxu0 0.0
  %266 = vmatpush1.msra.mxu0 0.0
  %267 = vmatprep.subr.mxu0 0.0
  %268 = vmatpush1.msra.mxu0 0.0
  %269 = vmatprep.subr.mxu0 0.0
  %270 = vmatpush1.msra.mxu0 0.0
  %271 = vmatprep.subr.mxu0 0.0
  %272 = vmatpush1.msra.mxu0 0.0
  %273 = vmatprep.subr.mxu0 0.0
  %274 = vmatpush1.msra.mxu0 0.0
  %275 = vmatprep.subr.mxu0 0.0
  %276 = vmatpush1.msra.mxu0 0.0
  %277 = vmatprep.subr.mxu0 0.0
  %278 = vmatpush1.msra.mxu0 0.0
  %279 = vmatprep.subr.mxu0 0.0
  %280 = vmatpush1.msra.mxu0 0.0
  %281 = vmatprep.subr.mxu0 0.0
  %282 = vmatpush1.msra.mxu0 0.0
  %283 = vmatprep.subr.mxu0 0.0
  %284 = vmatpush1.msra.mxu0 0.0
  %285 = vmatprep.subr.mxu0 0.0
  %286 = vmatpush1.msra.mxu0 0.0
  %287 = vmatprep.subr.mxu0 0.0
  %288 = vmatpush1.msra.mxu0 0.0
  %289 = vmatprep.subr.mxu0 0.0
  %290 = vmatpush1.msra.mxu0 0.0
  %291 = vmatprep.subr.mxu0 0.0
  %292 = vmatpush1.msra.mxu0 0.0
  %293 = vmatprep.subr.mxu0 0.0
  %294 = vmatpush1.msra.mxu0 0.0
  %295 = vmatprep.subr.mxu0 0.0
  %296 = vmatpush1.msra.mxu0 0.0
  %297 = vmatprep.subr.mxu0 0.0
  %298 = vmatpush1.msra.mxu0 0.0
  %299 = vmatprep.subr.mxu0 0.0
  %300 = vmatpush1.msra.mxu0 0.0
  %301 = vmatprep.subr.mxu0 0.0
  %302 = vmatpush1.msra.mxu0 0.0
  %303 = vmatprep.subr.mxu0 0.0
  %304 = vmatpush1.msra.mxu0 0.0
  %305 = vmatprep.subr.mxu0 0.0
  %306 = vmatpush1.msra.mxu0 0.0
  %307 = vmatprep.subr.mxu0 0.0
  %308 = vmatpush1.msra.mxu0 0.0
  %309 = vmatprep.subr.mxu0 0.0
  %310 = vmatpush1.msra.mxu0 0.0
  %311 = vmatprep.subr.mxu0 0.0
  %312 = vmatpush1.msra.mxu0 0.0
  %313 = vmatprep.subr.mxu0 0.0
  %314 = vmatpush1.msra.mxu0 0.0
  %315 = vmatprep.subr.mxu0 0.0
  %316 = vmatpush1.msra.mxu0 0.0
  %317 = vmatprep.subr.mxu0 0.0
  %318 = vmatpush1.msra.mxu0 0.0
  %319 = vmatprep.mubr.f32.mxu0 0.0
  %320 = vmatmul.mubr.f32.gmra.mrb[0].mxu0 %v244
  %v321 = vpop.f32.mrb[0].mxu0
  %v322 = vadd.f32 %v241, %v321
  %v323 = vpop.f32.mrb[0].mxu0
  %324 = vmatprep.mubr.f32.mxu0 0.0
  %325 = vmatmul.mubr.f32.gmra.mrb[0].mxu0 %v247
  %v326 = vpop.f32.mrb[0].mxu0
  %v327 = vadd.f32 %v241, %v326
  %v328 = vpop.f32.mrb[0].mxu0
  %329 = vmatprep.mubr.f32.mxu0 0.0
  %330 = vmatmul.mubr.f32.gmra.mrb[0].mxu0 %v250
  %v331 = vpop.f32.mrb[0].mxu0
  %v332 = vadd.f32 %v241, %v331
  %v333 = vpop.f32.mrb[0].mxu0
  %334 = vmatprep.mubr.f32.mxu0 0.0
  %335 = vmatmul.mubr.f32.gmra.mrb[0].mxu0 %v253
  %v336 = vpop.f32.mrb[0].mxu0
  %v337 = vadd.f32 %v241, %v336
  %v338 = vpop.f32.mrb[0].mxu0
  %339 = vdwg.mxu0
  %v344 = vcombine.high %v322, %v322
  %v345 = vcombine.high %v327, %v327
  %v346 = vcombine.high %v332, %v332
  %v347 = vcombine.high %v337, %v337
  %v352 = vld [vmem:[%s6] sm:$0xff]
  %v353 = vld [vmem:[%s6 + $0x8] sm:$0xff]
  %s354 = scalar_lea.vmem %s6, 16
  %v355 = vld [vmem:[%s354] sm:$0xff]
  %v356 = vld [vmem:[%s354 + $0x8] sm:$0xff]
  %v357 = vxor.u32 %v322, 2147483648
  %v358 = vxor.u32 %v332, 2147483648
  %v359 = vmul.f32 %v357, 1.442695
  %v360 = vpow.pop %v359
  %v361 = vmul.f32 %v358, 1.442695
  %v362 = vpow.pop %v361
  %v363 = vadd.f32 %v360, 1.0
  %v364 = vadd.f32 %v362, 1.0
  %v365 = vrcp.pop %v363
  %v366 = vmul.f32 1.0, %v365
  %v367 = vrcp.pop %v364
  %v368 = vmul.f32 1.0, %v367
  %v369 = vxor.u32 %v345, 2147483648
  %v370 = vxor.u32 %v347, 2147483648
  %v371 = vmul.f32 %v369, 1.442695
  %v372 = vpow.pop %v371
  %v373 = vmul.f32 %v370, 1.442695
  %v374 = vpow.pop %v373
  %v375 = vadd.f32 %v372, 1.0
  %v376 = vadd.f32 %v374, 1.0
  %v377 = vrcp.pop %v375
  %v378 = vmul.f32 1.0, %v377
  %v379 = vrcp.pop %v376
  %v380 = vmul.f32 1.0, %v379
  %v381 = vtanh.pop %v322
  %v382 = vtanh.pop %v332
  %v383 = vtanh.pop %v345
  %v384 = vtanh.pop %v347
  %v385 = vmul.f32 %v366, 0.0
  %v386 = vmul.f32 %v368, 0.0
  %389 = vrot.lane.b32.xlu0 %v381, 104
  %v390 = vpop.permute.xlu0 %389
  %391 = vrot.lane.b32.xlu0 %v382, 104
  %v392 = vpop.permute.xlu0 %391
  %v395 = vmul.f32 %v366, %v390
  %v396 = vmul.f32 %v368, %v392
  %399 = vrot.lane.b32.xlu0 %v395, 8
  %v400 = vpop.permute.xlu0 %399
  %401 = vrot.lane.b32.xlu0 %v396, 8
  %v402 = vpop.permute.xlu0 %401
  %v405 = vadd.f32 %v385, %v400
  %v406 = vadd.f32 %v386, %v402
  %v407 = vmul.f32 %v378, 0.0
  %v408 = vmul.f32 %v380, 0.0
  %411 = vrot.lane.b32.xlu0 %v383, 104
  %v412 = vpop.permute.xlu0 %411
  %413 = vrot.lane.b32.xlu0 %v384, 104
  %v414 = vpop.permute.xlu0 %413
  %v417 = vmul.f32 %v378, %v412
  %v418 = vmul.f32 %v380, %v414
  %421 = vrot.lane.b32.xlu0 %v417, 8
  %v422 = vpop.permute.xlu0 %421
  %423 = vrot.lane.b32.xlu0 %v418, 8
  %v424 = vpop.permute.xlu0 %423
  %v427 = vadd.f32 %v407, %v422
  %v428 = vadd.f32 %v408, %v424
  %v429 = vtanh.pop %v405
  %v430 = vtanh.pop %v406
  %433 = vrot.lane.b32.xlu0 %v429, 8
  %v434 = vpop.permute.xlu0 %433
  %435 = vrot.lane.b32.xlu0 %v430, 8
  %v436 = vpop.permute.xlu0 %435
  %v439 = vmul.f32 %v366, %v434
  %v440 = vmul.f32 %v368, %v436
  %v441 = vtanh.pop %v427
  %v442 = vtanh.pop %v428
  %445 = vrot.lane.b32.xlu0 %v441, 8
  %v446 = vpop.permute.xlu0 %445
  %447 = vrot.lane.b32.xlu0 %v442, 8
  %v448 = vpop.permute.xlu0 %447
  %v451 = vmul.f32 %v378, %v446
  %v452 = vmul.f32 %v380, %v448
  %v455 = vcombine.low %v439, %v440
  %456 = vrot.lane.b32.xlu0 %v455, 112
  %v457 = vpop.permute.xlu0 %456
  %v461 = vcombine.low %v451, %v452
  %462 = vrot.lane.b32.xlu0 %v461, 88
  %v463 = vpop.permute.xlu0 %462
  %vm465 = vcmask 64512
  %v466 = vsel %vm465, %v457, %v463
  %v468 = vsel %vm164, %v466, 0
  %470 = vmatprep.subr.mxu0 0.0
  %471 = vmatpush1.msra.mxu0 %v352
  %472 = vmatprep.subr.mxu0 0.0
  %473 = vmatpush1.msra.mxu0 %v353
  %474 = vmatprep.subr.mxu0 0.0
  %475 = vmatpush1.msra.mxu0 0.0
  %476 = vmatprep.subr.mxu0 0.0
  %477 = vmatpush1.msra.mxu0 0.0
  %478 = vmatprep.subr.mxu0 0.0
  %479 = vmatpush1.msra.mxu0 0.0
  %480 = vmatprep.subr.mxu0 0.0
  %481 = vmatpush1.msra.mxu0 0.0
  %482 = vmatprep.subr.mxu0 0.0
  %483 = vmatpush1.msra.mxu0 0.0
  %484 = vmatprep.subr.mxu0 0.0
  %485 = vmatpush1.msra.mxu0 0.0
  %486 = vmatprep.subr.mxu0 0.0
  %487 = vmatpush1.msra.mxu0 0.0
  %488 = vmatprep.subr.mxu0 0.0
  %489 = vmatpush1.msra.mxu0 0.0
  %490 = vmatprep.subr.mxu0 0.0
  %491 = vmatpush1.msra.mxu0 0.0
  %492 = vmatprep.subr.mxu0 0.0
  %493 = vmatpush1.msra.mxu0 0.0
  %494 = vmatprep.subr.mxu0 0.0
  %495 = vmatpush1.msra.mxu0 0.0
  %496 = vmatprep.subr.mxu0 0.0
  %497 = vmatpush1.msra.mxu0 0.0
  %498 = vmatprep.subr.mxu0 0.0
  %499 = vmatpush1.msra.mxu0 0.0
  %500 = vmatprep.subr.mxu0 0.0
  %501 = vmatpush1.msra.mxu0 0.0
  %502 = vmatprep.subr.mxu0 0.0
  %503 = vmatpush1.msra.mxu0 0.0
  %504 = vmatprep.subr.mxu0 0.0
  %505 = vmatpush1.msra.mxu0 0.0
  %506 = vmatprep.subr.mxu0 0.0
  %507 = vmatpush1.msra.mxu0 0.0
  %508 = vmatprep.subr.mxu0 0.0
  %509 = vmatpush1.msra.mxu0 0.0
  %510 = vmatprep.subr.mxu0 0.0
  %511 = vmatpush1.msra.mxu0 0.0
  %512 = vmatprep.subr.mxu0 0.0
  %513 = vmatpush1.msra.mxu0 0.0
  %514 = vmatprep.subr.mxu0 0.0
  %515 = vmatpush1.msra.mxu0 0.0
  %516 = vmatprep.subr.mxu0 0.0
  %517 = vmatpush1.msra.mxu0 0.0
  %518 = vmatprep.subr.mxu0 0.0
  %519 = vmatpush1.msra.mxu0 0.0
  %520 = vmatprep.subr.mxu0 0.0
  %521 = vmatpush1.msra.mxu0 0.0
  %522 = vmatprep.subr.mxu0 0.0
  %523 = vmatpush1.msra.mxu0 0.0
  %524 = vmatprep.subr.mxu0 0.0
  %525 = vmatpush1.msra.mxu0 0.0
  %526 = vmatprep.subr.mxu0 0.0
  %527 = vmatpush1.msra.mxu0 0.0
  %528 = vmatprep.subr.mxu0 0.0
  %529 = vmatpush1.msra.mxu0 0.0
  %530 = vmatprep.subr.mxu0 0.0
  %531 = vmatpush1.msra.mxu0 0.0
  %532 = vmatprep.subr.mxu0 0.0
  %533 = vmatpush1.msra.mxu0 0.0
  %534 = vmatprep.mubr.f32.mxu0 0.0
  %535 = vmatmul.mubr.f32.gmra.mrb[0].mxu0 %v468
  %v536 = vpop.f32.mrb[0].mxu0
  %v537 = vadd.f32 0.0, %v536
  %v538 = vpop.f32.mrb[0].mxu0
  %539 = vdwg.mxu0
  %v540 = vcombine.low %v344, %v346
  %v542 = vadd.f32 %v537, %v540
  %v543 = vcombine.low %v327, %v337
  %v545 = vadd.f32 %v537, %v543
  %v546 = vxor.u32 %v542, 2147483648
  %v547 = vmul.f32 %v546, 1.442695
  %v548 = vpow.pop %v547
  %v549 = vadd.f32 %v548, 1.0
  %v550 = vrcp.pop %v549
  %v551 = vmul.f32 1.0, %v550
  %v552 = vxor.u32 %v545, 2147483648
  %v553 = vmul.f32 %v552, 1.442695
  %v554 = vpow.pop %v553
  %v555 = vadd.f32 %v554, 1.0
  %v556 = vrcp.pop %v555
  %v557 = vmul.f32 1.0, %v556
  %v558 = vtanh.pop %v542
  %v559 = vtanh.pop %v545
  %v562 = vcombine.low %v405, %v406
  %v564 = vmul.f32 %v551, %v562
  %566 = vrot.lane.b32.xlu0 %v558, 104
  %v567 = vpop.permute.xlu0 %566
  %v569 = vmul.f32 %v551, %v567
  %571 = vrot.lane.b32.xlu0 %v569, 8
  %v572 = vpop.permute.xlu0 %571
  %v574 = vadd.f32 %v564, %v572
  %v577 = vcombine.low %v427, %v428
  %v579 = vmul.f32 %v557, %v577
  %581 = vrot.lane.b32.xlu0 %v559, 104
  %v582 = vpop.permute.xlu0 %581
  %v584 = vmul.f32 %v557, %v582
  %586 = vrot.lane.b32.xlu0 %v584, 8
  %v587 = vpop.permute.xlu0 %586
  %v589 = vadd.f32 %v579, %v587
  %v590 = vtanh.pop %v574
  %592 = vrot.lane.b32.xlu0 %v590, 8
  %v593 = vpop.permute.xlu0 %592
  %v595 = vmul.f32 %v551, %v593
  %v596 = vtanh.pop %v589
  %598 = vrot.lane.b32.xlu0 %v596, 8
  %v599 = vpop.permute.xlu0 %598
  %v601 = vmul.f32 %v557, %v599
  %603 = vrot.lane.b32.xlu0 %v595, 112
  %v604 = vpop.permute.xlu0 %603
  %607 = vrot.lane.b32.xlu0 %v601, 88
  %v608 = vpop.permute.xlu0 %607
  %v610 = vsel %vm465, %v604, %v608
  %v611 = vcombine.high %v595, %v595
  %v612 = vcombine.high %v601, %v601
  %v614 = vsel %vm164, %v610, 0
  %616 = vmatprep.subr.mxu0 0.0
  %617 = vmatpush1.msra.mxu0 %v352
  %618 = vmatprep.subr.mxu0 0.0
  %619 = vmatpush1.msra.mxu0 %v353
  %620 = vmatprep.subr.mxu0 0.0
  %621 = vmatpush1.msra.mxu0 0.0
  %622 = vmatprep.subr.mxu0 0.0
  %623 = vmatpush1.msra.mxu0 0.0
  %624 = vmatprep.subr.mxu0 0.0
  %625 = vmatpush1.msra.mxu0 0.0
  %626 = vmatprep.subr.mxu0 0.0
  %627 = vmatpush1.msra.mxu0 0.0
  %628 = vmatprep.subr.mxu0 0.0
  %629 = vmatpush1.msra.mxu0 0.0
  %630 = vmatprep.subr.mxu0 0.0
  %631 = vmatpush1.msra.mxu0 0.0
  %632 = vmatprep.subr.mxu0 0.0
  %633 = vmatpush1.msra.mxu0 0.0
  %634 = vmatprep.subr.mxu0 0.0
  %635 = vmatpush1.msra.mxu0 0.0
  %636 = vmatprep.subr.mxu0 0.0
  %637 = vmatpush1.msra.mxu0 0.0
  %638 = vmatprep.subr.mxu0 0.0
  %639 = vmatpush1.msra.mxu0 0.0
  %640 = vmatprep.subr.mxu0 0.0
  %641 = vmatpush1.msra.mxu0 0.0
  %642 = vmatprep.subr.mxu0 0.0
  %643 = vmatpush1.msra.mxu0 0.0
  %644 = vmatprep.subr.mxu0 0.0
  %645 = vmatpush1.msra.mxu0 0.0
  %646 = vmatprep.subr.mxu0 0.0
  %647 = vmatpush1.msra.mxu0 0.0
  %648 = vmatprep.subr.mxu0 0.0
  %649 = vmatpush1.msra.mxu0 0.0
  %650 = vmatprep.subr.mxu0 0.0
  %651 = vmatpush1.msra.mxu0 0.0
  %652 = vmatprep.subr.mxu0 0.0
  %653 = vmatpush1.msra.mxu0 0.0
  %654 = vmatprep.subr.mxu0 0.0
  %655 = vmatpush1.msra.mxu0 0.0
  %656 = vmatprep.subr.mxu0 0.0
  %657 = vmatpush1.msra.mxu0 0.0
  %658 = vmatprep.subr.mxu0 0.0
  %659 = vmatpush1.msra.mxu0 0.0
  %660 = vmatprep.subr.mxu0 0.0
  %661 = vmatpush1.msra.mxu0 0.0
  %662 = vmatprep.subr.mxu0 0.0
  %663 = vmatpush1.msra.mxu0 0.0
  %664 = vmatprep.subr.mxu0 0.0
  %665 = vmatpush1.msra.mxu0 0.0
  %666 = vmatprep.subr.mxu0 0.0
  %667 = vmatpush1.msra.mxu0 0.0
  %668 = vmatprep.subr.mxu0 0.0
  %669 = vmatpush1.msra.mxu0 0.0
  %670 = vmatprep.subr.mxu0 0.0
  %671 = vmatpush1.msra.mxu0 0.0
  %672 = vmatprep.subr.mxu0 0.0
  %673 = vmatpush1.msra.mxu0 0.0
  %674 = vmatprep.subr.mxu0 0.0
  %675 = vmatpush1.msra.mxu0 0.0
  %676 = vmatprep.subr.mxu0 0.0
  %677 = vmatpush1.msra.mxu0 0.0
  %678 = vmatprep.subr.mxu0 0.0
  %679 = vmatpush1.msra.mxu0 0.0
  %680 = vmatprep.mubr.f32.mxu0 0.0
  %681 = vmatmul.mubr.f32.gmra.mrb[0].mxu0 %v614
  %v682 = vpop.f32.mrb[0].mxu0
  %v683 = vadd.f32 0.0, %v682
  %v684 = vpop.f32.mrb[0].mxu0
  %685 = vdwg.mxu0
  %v686 = vadd.f32 %v683, %v543
  %v687 = vadd.f32 %v683, %v540
  %v688 = vxor.u32 %v686, 2147483648
  %v689 = vmul.f32 %v688, 1.442695
  %v690 = vpow.pop %v689
  %v691 = vadd.f32 %v690, 1.0
  %v692 = vrcp.pop %v691
  %v693 = vmul.f32 1.0, %v692
  %v694 = vxor.u32 %v687, 2147483648
  %v695 = vmul.f32 %v694, 1.442695
  %v696 = vpow.pop %v695
  %v697 = vadd.f32 %v696, 1.0
  %v698 = vrcp.pop %v697
  %v699 = vmul.f32 1.0, %v698
  %v700 = vtanh.pop %v686
  %v701 = vtanh.pop %v687
  %v702 = vmul.f32 %v693, %v574
  %704 = vrot.lane.b32.xlu0 %v700, 104
  %v705 = vpop.permute.xlu0 %704
  %v707 = vmul.f32 %v693, %v705
  %709 = vrot.lane.b32.xlu0 %v707, 8
  %v710 = vpop.permute.xlu0 %709
  %v712 = vadd.f32 %v702, %v710
  %v713 = vmul.f32 %v699, %v589
  %715 = vrot.lane.b32.xlu0 %v701, 104
  %v716 = vpop.permute.xlu0 %715
  %v718 = vmul.f32 %v699, %v716
  %720 = vrot.lane.b32.xlu0 %v718, 8
  %v721 = vpop.permute.xlu0 %720
  %v723 = vadd.f32 %v713, %v721
  %v724 = vtanh.pop %v712
  %726 = vrot.lane.b32.xlu0 %v724, 8
  %v727 = vpop.permute.xlu0 %726
  %v729 = vmul.f32 %v693, %v727
  %v730 = vtanh.pop %v723
  %732 = vrot.lane.b32.xlu0 %v730, 8
  %v733 = vpop.permute.xlu0 %732
  %v735 = vmul.f32 %v699, %v733
  %737 = vrot.lane.b32.xlu0 %v729, 112
  %v738 = vpop.permute.xlu0 %737
  %741 = vrot.lane.b32.xlu0 %v735, 88
  %v742 = vpop.permute.xlu0 %741
  %v744 = vsel %vm465, %v738, %v742
  %v745 = vcombine.high %v729, %v729
  %v746 = vcombine.high %v735, %v735
  %v748 = vsel %vm164, %v744, 0
  %750 = vmatprep.subr.mxu0 0.0
  %751 = vmatpush1.msra.mxu0 %v352
  %752 = vmatprep.subr.mxu0 0.0
  %753 = vmatpush1.msra.mxu0 %v353
  %754 = vmatprep.subr.mxu0 0.0
  %755 = vmatpush1.msra.mxu0 0.0
  %756 = vmatprep.subr.mxu0 0.0
  %757 = vmatpush1.msra.mxu0 0.0
  %758 = vmatprep.subr.mxu0 0.0
  %759 = vmatpush1.msra.mxu0 0.0
  %760 = vmatprep.subr.mxu0 0.0
  %761 = vmatpush1.msra.mxu0 0.0
  %762 = vmatprep.subr.mxu0 0.0
  %763 = vmatpush1.msra.mxu0 0.0
  %764 = vmatprep.subr.mxu0 0.0
  %765 = vmatpush1.msra.mxu0 0.0
  %766 = vmatprep.subr.mxu0 0.0
  %767 = vmatpush1.msra.mxu0 0.0
  %768 = vmatprep.subr.mxu0 0.0
  %769 = vmatpush1.msra.mxu0 0.0
  %770 = vmatprep.subr.mxu0 0.0
  %771 = vmatpush1.msra.mxu0 0.0
  %772 = vmatprep.subr.mxu0 0.0
  %773 = vmatpush1.msra.mxu0 0.0
  %774 = vmatprep.subr.mxu0 0.0
  %775 = vmatpush1.msra.mxu0 0.0
  %776 = vmatprep.subr.mxu0 0.0
  %777 = vmatpush1.msra.mxu0 0.0
  %778 = vmatprep.subr.mxu0 0.0
  %779 = vmatpush1.msra.mxu0 0.0
  %780 = vmatprep.subr.mxu0 0.0
  %781 = vmatpush1.msra.mxu0 0.0
  %782 = vmatprep.subr.mxu0 0.0
  %783 = vmatpush1.msra.mxu0 0.0
  %784 = vmatprep.subr.mxu0 0.0
  %785 = vmatpush1.msra.mxu0 0.0
  %786 = vmatprep.subr.mxu0 0.0
  %787 = vmatpush1.msra.mxu0 0.0
  %788 = vmatprep.subr.mxu0 0.0
  %789 = vmatpush1.msra.mxu0 0.0
  %790 = vmatprep.subr.mxu0 0.0
  %791 = vmatpush1.msra.mxu0 0.0
  %792 = vmatprep.subr.mxu0 0.0
  %793 = vmatpush1.msra.mxu0 0.0
  %794 = vmatprep.subr.mxu0 0.0
  %795 = vmatpush1.msra.mxu0 0.0
  %796 = vmatprep.subr.mxu0 0.0
  %797 = vmatpush1.msra.mxu0 0.0
  %798 = vmatprep.subr.mxu0 0.0
  %799 = vmatpush1.msra.mxu0 0.0
  %800 = vmatprep.subr.mxu0 0.0
  %801 = vmatpush1.msra.mxu0 0.0
  %802 = vmatprep.subr.mxu0 0.0
  %803 = vmatpush1.msra.mxu0 0.0
  %804 = vmatprep.subr.mxu0 0.0
  %805 = vmatpush1.msra.mxu0 0.0
  %806 = vmatprep.subr.mxu0 0.0
  %807 = vmatpush1.msra.mxu0 0.0
  %808 = vmatprep.subr.mxu0 0.0
  %809 = vmatpush1.msra.mxu0 0.0
  %810 = vmatprep.subr.mxu0 0.0
  %811 = vmatpush1.msra.mxu0 0.0
  %812 = vmatprep.subr.mxu0 0.0
  %813 = vmatpush1.msra.mxu0 0.0
  %814 = vmatprep.mubr.f32.mxu0 0.0
  %815 = vmatmul.mubr.f32.gmra.mrb[0].mxu0 %v748
  %v816 = vpop.f32.mrb[0].mxu0
  %v817 = vadd.f32 0.0, %v816
  %v818 = vpop.f32.mrb[0].mxu0
  %819 = vdwg.mxu0
  %v820 = vcombine.low %v345, %v347
  %v822 = vadd.f32 %v817, %v820
  %v823 = vcombine.low %v322, %v332
  %v825 = vadd.f32 %v817, %v823
  %v826 = vxor.u32 %v822, 2147483648
  %v827 = vmul.f32 %v826, 1.442695
  %v828 = vpow.pop %v827
  %v829 = vadd.f32 %v828, 1.0
  %v830 = vrcp.pop %v829
  %v831 = vmul.f32 1.0, %v830
  %v832 = vxor.u32 %v825, 2147483648
  %v833 = vmul.f32 %v832, 1.442695
  %v834 = vpow.pop %v833
  %v835 = vadd.f32 %v834, 1.0
  %v836 = vrcp.pop %v835
  %v837 = vmul.f32 1.0, %v836
  %v838 = vtanh.pop %v822
  %v839 = vtanh.pop %v825
  %v840 = vmul.f32 %v831, %v712
  %842 = vrot.lane.b32.xlu0 %v838, 104
  %v843 = vpop.permute.xlu0 %842
  %v845 = vmul.f32 %v831, %v843
  %847 = vrot.lane.b32.xlu0 %v845, 8
  %v848 = vpop.permute.xlu0 %847
  %v850 = vadd.f32 %v840, %v848
  %v851 = vmul.f32 %v837, %v723
  %853 = vrot.lane.b32.xlu0 %v839, 104
  %v854 = vpop.permute.xlu0 %853
  %v856 = vmul.f32 %v837, %v854
  %858 = vrot.lane.b32.xlu0 %v856, 8
  %v859 = vpop.permute.xlu0 %858
  %v861 = vadd.f32 %v851, %v859
  %v862 = vtanh.pop %v850
  %864 = vrot.lane.b32.xlu0 %v862, 8
  %v865 = vpop.permute.xlu0 %864
  %v867 = vmul.f32 %v831, %v865
  %v868 = vtanh.pop %v861
  %870 = vrot.lane.b32.xlu0 %v868, 8
  %v871 = vpop.permute.xlu0 %870
  %v873 = vmul.f32 %v837, %v871
  %v875 = vcombine.high %v867, %v867
  %v877 = vcombine.high %v873, %v873
  %v878 = vxor.u32 %v344, 2147483648
  %v879 = vxor.u32 %v327, 2147483648
  %v880 = vxor.u32 %v346, 2147483648
  %v881 = vxor.u32 %v337, 2147483648
  %v882 = vmul.f32 %v878, 1.442695
  %v883 = vpow.pop %v882
  %v884 = vmul.f32 %v879, 1.442695
  %v885 = vpow.pop %v884
  %v886 = vmul.f32 %v880, 1.442695
  %v887 = vpow.pop %v886
  %v888 = vmul.f32 %v881, 1.442695
  %v889 = vpow.pop %v888
  %v890 = vadd.f32 %v883, 1.0
  %v891 = vadd.f32 %v885, 1.0
  %v892 = vadd.f32 %v887, 1.0
  %v893 = vadd.f32 %v889, 1.0
  %v894 = vrcp.pop %v890
  %v895 = vmul.f32 1.0, %v894
  %v896 = vrcp.pop %v891
  %v897 = vmul.f32 1.0, %v896
  %v898 = vrcp.pop %v892
  %v899 = vmul.f32 1.0, %v898
  %v900 = vrcp.pop %v893
  %v901 = vmul.f32 1.0, %v900
  %v902 = vtanh.pop %v344
  %v903 = vtanh.pop %v327
  %v904 = vtanh.pop %v346
  %v905 = vtanh.pop %v337
  %v906 = vmul.f32 %v895, 0.0
  %v907 = vmul.f32 %v897, 0.0
  %v908 = vmul.f32 %v899, 0.0
  %v909 = vmul.f32 %v901, 0.0
  %914 = vrot.lane.b32.xlu0 %v902, 104
  %v915 = vpop.permute.xlu0 %914
  %916 = vrot.lane.b32.xlu0 %v903, 104
  %v917 = vpop.permute.xlu0 %916
  %918 = vrot.lane.b32.xlu0 %v904, 104
  %v919 = vpop.permute.xlu0 %918
  %920 = vrot.lane.b32.xlu0 %v905, 104
  %v921 = vpop.permute.xlu0 %920
  %v926 = vmul.f32 %v895, %v915
  %v927 = vmul.f32 %v897, %v917
  %v928 = vmul.f32 %v899, %v919
  %v929 = vmul.f32 %v901, %v921
  %934 = vrot.lane.b32.xlu0 %v926, 8
  %v935 = vpop.permute.xlu0 %934
  %936 = vrot.lane.b32.xlu0 %v927, 8
  %v937 = vpop.permute.xlu0 %936
  %938 = vrot.lane.b32.xlu0 %v928, 8
  %v939 = vpop.permute.xlu0 %938
  %940 = vrot.lane.b32.xlu0 %v929, 8
  %v941 = vpop.permute.xlu0 %940
  %v946 = vadd.f32 %v906, %v935
  %v947 = vadd.f32 %v907, %v937
  %v948 = vadd.f32 %v908, %v939
  %v949 = vadd.f32 %v909, %v941
  %v950 = vtanh.pop %v946
  %v951 = vtanh.pop %v947
  %v952 = vtanh.pop %v948
  %v953 = vtanh.pop %v949
  %958 = vrot.lane.b32.xlu0 %v950, 8
  %v959 = vpop.permute.xlu0 %958
  %960 = vrot.lane.b32.xlu0 %v951, 8
  %v961 = vpop.permute.xlu0 %960
  %962 = vrot.lane.b32.xlu0 %v952, 8
  %v963 = vpop.permute.xlu0 %962
  %964 = vrot.lane.b32.xlu0 %v953, 8
  %v965 = vpop.permute.xlu0 %964
  %v970 = vmul.f32 %v895, %v959
  %v971 = vmul.f32 %v897, %v961
  %v972 = vmul.f32 %v899, %v963
  %v973 = vmul.f32 %v901, %v965
  %v978 = vlaneseq
  %v979 = vshrl.u32 %v978, 7
  %v980 = vsub.s32 0, %v979
  %v981 = vrot.slane %v439, %v980
  %v982 = vlaneseq
  %v983 = vshrl.u32 %v982, 7
  %v984 = vsub.s32 0, %v983
  %v985 = vrot.slane %v970, %v984
  %v986 = vlaneseq
  %v987 = vshrl.u32 %v986, 7
  %v988 = vsub.s32 0, %v987
  %v989 = vrot.slane %v971, %v988
  %v990 = vlaneseq
  %v991 = vshrl.u32 %v990, 7
  %v992 = vsub.s32 0, %v991
  %v993 = vrot.slane %v451, %v992
  %v994 = vlaneseq
  %v995 = vshrl.u32 %v994, 7
  %v996 = vsub.s32 0, %v995
  %v997 = vrot.slane %v440, %v996
  %v998 = vlaneseq
  %v999 = vshrl.u32 %v998, 7
  %v1000 = vsub.s32 0, %v999
  %v1001 = vrot.slane %v972, %v1000
  %v1002 = vlaneseq
  %v1003 = vshrl.u32 %v1002, 7
  %v1004 = vsub.s32 0, %v1003
  %v1005 = vrot.slane %v973, %v1004
  %v1006 = vlaneseq
  %v1007 = vshrl.u32 %v1006, 7
  %v1008 = vsub.s32 0, %v1007
  %v1009 = vrot.slane %v452, %v1008
  %vm1010 = vcmask 1041409
  %v1011 = vsel %vm1010, %v985, %v981
  %vm1012 = vcmask 1042434
  %v1013 = vsel %vm1012, %v989, %v1011
  %vm1014 = vcmask 1043459
  %v1015 = vsel %vm1014, %v993, %v1013
  %vm1016 = vcmask 1044484
  %v1017 = vsel %vm1016, %v997, %v1015
  %vm1018 = vcmask 1045509
  %v1019 = vsel %vm1018, %v1001, %v1017
  %vm1020 = vcmask 1046534
  %v1021 = vsel %vm1020, %v1005, %v1019
  %vm1022 = vcmask 1047559
  %v1023 = vsel %vm1022, %v1009, %v1021
  %1024 = vrot.lane.b32.xlu0 %v1023, 48
  %v1025 = vpop.permute.xlu0 %1024
  %v1027 = vlaneseq
  %v1028 = vshrl.u32 %v1027, 7
  %v1029 = vsub.s32 3, %v1028
  %v1030 = vrot.slane %v439, %v1029
  %v1031 = vlaneseq
  %v1032 = vshrl.u32 %v1031, 7
  %v1033 = vsub.s32 3, %v1032
  %v1034 = vrot.slane %v970, %v1033
  %v1035 = vlaneseq
  %v1036 = vshrl.u32 %v1035, 7
  %v1037 = vsub.s32 3, %v1036
  %v1038 = vrot.slane %v971, %v1037
  %v1039 = vlaneseq
  %v1040 = vshrl.u32 %v1039, 7
  %v1041 = vsub.s32 3, %v1040
  %v1042 = vrot.slane %v451, %v1041
  %v1043 = vlaneseq
  %v1044 = vshrl.u32 %v1043, 7
  %v1045 = vsub.s32 3, %v1044
  %v1046 = vrot.slane %v440, %v1045
  %v1047 = vlaneseq
  %v1048 = vshrl.u32 %v1047, 7
  %v1049 = vsub.s32 3, %v1048
  %v1050 = vrot.slane %v972, %v1049
  %v1051 = vlaneseq
  %v1052 = vshrl.u32 %v1051, 7
  %v1053 = vsub.s32 3, %v1052
  %v1054 = vrot.slane %v973, %v1053
  %v1055 = vlaneseq
  %v1056 = vshrl.u32 %v1055, 7
  %v1057 = vsub.s32 3, %v1056
  %v1058 = vrot.slane %v452, %v1057
  %v1059 = vsel %vm1010, %v1034, %v1030
  %v1060 = vsel %vm1012, %v1038, %v1059
  %v1061 = vsel %vm1014, %v1042, %v1060
  %v1062 = vsel %vm1016, %v1046, %v1061
  %v1063 = vsel %vm1018, %v1050, %v1062
  %v1064 = vsel %vm1020, %v1054, %v1063
  %v1065 = vsel %vm1022, %v1058, %v1064
  %1066 = vrot.lane.b32.xlu0 %v1065, 24
  %v1067 = vpop.permute.xlu0 %1066
  %v1069 = vsel %vm465, %v1025, %v1067
  %v1071 = vsel %vm164, %v1069, 0
  %1073 = vmatprep.subr.mxu0 0.0
  %1074 = vmatpush1.msra.mxu0 %v355
  %1075 = vmatprep.subr.mxu0 0.0
  %1076 = vmatpush1.msra.mxu0 %v356
  %1077 = vmatprep.subr.mxu0 0.0
  %1078 = vmatpush1.msra.mxu0 0.0
  %1079 = vmatprep.subr.mxu0 0.0
  %1080 = vmatpush1.msra.mxu0 0.0
  %1081 = vmatprep.subr.mxu0 0.0
  %1082 = vmatpush1.msra.mxu0 0.0
  %1083 = vmatprep.subr.mxu0 0.0
  %1084 = vmatpush1.msra.mxu0 0.0
  %1085 = vmatprep.subr.mxu0 0.0
  %1086 = vmatpush1.msra.mxu0 0.0
  %1087 = vmatprep.subr.mxu0 0.0
  %1088 = vmatpush1.msra.mxu0 0.0
  %1089 = vmatprep.subr.mxu0 0.0
  %1090 = vmatpush1.msra.mxu0 0.0
  %1091 = vmatprep.subr.mxu0 0.0
  %1092 = vmatpush1.msra.mxu0 0.0
  %1093 = vmatprep.subr.mxu0 0.0
  %1094 = vmatpush1.msra.mxu0 0.0
  %1095 = vmatprep.subr.mxu0 0.0
  %1096 = vmatpush1.msra.mxu0 0.0
  %1097 = vmatprep.subr.mxu0 0.0
  %1098 = vmatpush1.msra.mxu0 0.0
  %1099 = vmatprep.subr.mxu0 0.0
  %1100 = vmatpush1.msra.mxu0 0.0
  %1101 = vmatprep.subr.mxu0 0.0
  %1102 = vmatpush1.msra.mxu0 0.0
  %1103 = vmatprep.subr.mxu0 0.0
  %1104 = vmatpush1.msra.mxu0 0.0
  %1105 = vmatprep.subr.mxu0 0.0
  %1106 = vmatpush1.msra.mxu0 0.0
  %1107 = vmatprep.subr.mxu0 0.0
  %1108 = vmatpush1.msra.mxu0 0.0
  %1109 = vmatprep.subr.mxu0 0.0
  %1110 = vmatpush1.msra.mxu0 0.0
  %1111 = vmatprep.subr.mxu0 0.0
  %1112 = vmatpush1.msra.mxu0 0.0
  %1113 = vmatprep.subr.mxu0 0.0
  %1114 = vmatpush1.msra.mxu0 0.0
  %1115 = vmatprep.subr.mxu0 0.0
  %1116 = vmatpush1.msra.mxu0 0.0
  %1117 = vmatprep.subr.mxu0 0.0
  %1118 = vmatpush1.msra.mxu0 0.0
  %1119 = vmatprep.subr.mxu0 0.0
  %1120 = vmatpush1.msra.mxu0 0.0
  %1121 = vmatprep.subr.mxu0 0.0
  %1122 = vmatpush1.msra.mxu0 0.0
  %1123 = vmatprep.subr.mxu0 0.0
  %1124 = vmatpush1.msra.mxu0 0.0
  %1125 = vmatprep.subr.mxu0 0.0
  %1126 = vmatpush1.msra.mxu0 0.0
  %1127 = vmatprep.subr.mxu0 0.0
  %1128 = vmatpush1.msra.mxu0 0.0
  %1129 = vmatprep.subr.mxu0 0.0
  %1130 = vmatpush1.msra.mxu0 0.0
  %1131 = vmatprep.subr.mxu0 0.0
  %1132 = vmatpush1.msra.mxu0 0.0
  %1133 = vmatprep.subr.mxu0 0.0
  %1134 = vmatpush1.msra.mxu0 0.0
  %1135 = vmatprep.subr.mxu0 0.0
  %1136 = vmatpush1.msra.mxu0 0.0
  %1137 = vmatprep.mubr.f32.mxu0 0.0
  %1138 = vmatmul.mubr.f32.gmra.mrb[0].mxu0 %v1071
  %v1139 = vpop.f32.mrb[0].mxu0
  %v1140 = vadd.f32 0.0, %v1139
  %v1141 = vpop.f32.mrb[0].mxu0
  %1142 = vdwg.mxu0
  %v1143 = vlaneseq
  %v1144 = vshrl.u32 %v1143, 7
  %v1145 = vsub.s32 1, %v1144
  %v1146 = vrot.slane %v322, %v1145
  %v1147 = vlaneseq
  %v1148 = vshrl.u32 %v1147, 7
  %v1149 = vsub.s32 1, %v1148
  %v1150 = vrot.slane %v344, %v1149
  %v1151 = vlaneseq
  %v1152 = vshrl.u32 %v1151, 7
  %v1153 = vsub.s32 1, %v1152
  %v1154 = vrot.slane %v327, %v1153
  %v1155 = vlaneseq
  %v1156 = vshrl.u32 %v1155, 7
  %v1157 = vsub.s32 1, %v1156
  %v1158 = vrot.slane %v345, %v1157
  %v1159 = vlaneseq
  %v1160 = vshrl.u32 %v1159, 7
  %v1161 = vsub.s32 1, %v1160
  %v1162 = vrot.slane %v332, %v1161
  %v1163 = vlaneseq
  %v1164 = vshrl.u32 %v1163, 7
  %v1165 = vsub.s32 1, %v1164
  %v1166 = vrot.slane %v346, %v1165
  %v1167 = vlaneseq
  %v1168 = vshrl.u32 %v1167, 7
  %v1169 = vsub.s32 1, %v1168
  %v1170 = vrot.slane %v337, %v1169
  %v1171 = vlaneseq
  %v1172 = vshrl.u32 %v1171, 7
  %v1173 = vsub.s32 1, %v1172
  %v1174 = vrot.slane %v347, %v1173
  %v1175 = vsel %vm1010, %v1150, %v1146
  %v1176 = vsel %vm1012, %v1154, %v1175
  %v1177 = vsel %vm1014, %v1158, %v1176
  %v1178 = vsel %vm1016, %v1162, %v1177
  %v1179 = vsel %vm1018, %v1166, %v1178
  %v1180 = vsel %vm1020, %v1170, %v1179
  %v1181 = vsel %vm1022, %v1174, %v1180
  %1182 = vrot.lane.b32.xlu0 %v1181, 64
  %v1183 = vpop.permute.xlu0 %1182
  %v1185 = vadd.f32 %v1140, %v1183
  %v1186 = vlaneseq
  %v1187 = vshrl.u32 %v1186, 7
  %v1188 = vsub.s32 2, %v1187
  %v1189 = vrot.slane %v322, %v1188
  %v1190 = vlaneseq
  %v1191 = vshrl.u32 %v1190, 7
  %v1192 = vsub.s32 2, %v1191
  %v1193 = vrot.slane %v344, %v1192
  %v1194 = vlaneseq
  %v1195 = vshrl.u32 %v1194, 7
  %v1196 = vsub.s32 2, %v1195
  %v1197 = vrot.slane %v327, %v1196
  %v1198 = vlaneseq
  %v1199 = vshrl.u32 %v1198, 7
  %v1200 = vsub.s32 2, %v1199
  %v1201 = vrot.slane %v345, %v1200
  %v1202 = vlaneseq
  %v1203 = vshrl.u32 %v1202, 7
  %v1204 = vsub.s32 2, %v1203
  %v1205 = vrot.slane %v332, %v1204
  %v1206 = vlaneseq
  %v1207 = vshrl.u32 %v1206, 7
  %v1208 = vsub.s32 2, %v1207
  %v1209 = vrot.slane %v346, %v1208
  %v1210 = vlaneseq
  %v1211 = vshrl.u32 %v1210, 7
  %v1212 = vsub.s32 2, %v1211
  %v1213 = vrot.slane %v337, %v1212
  %v1214 = vlaneseq
  %v1215 = vshrl.u32 %v1214, 7
  %v1216 = vsub.s32 2, %v1215
  %v1217 = vrot.slane %v347, %v1216
  %v1218 = vsel %vm1010, %v1193, %v1189
  %v1219 = vsel %vm1012, %v1197, %v1218
  %v1220 = vsel %vm1014, %v1201, %v1219
  %v1221 = vsel %vm1016, %v1205, %v1220
  %v1222 = vsel %vm1018, %v1209, %v1221
  %v1223 = vsel %vm1020, %v1213, %v1222
  %v1224 = vsel %vm1022, %v1217, %v1223
  %1225 = vrot.lane.b32.xlu0 %v1224, 64
  %v1226 = vpop.permute.xlu0 %1225
  %v1228 = vadd.f32 %v1140, %v1226
  %v1229 = vxor.u32 %v1185, 2147483648
  %v1230 = vmul.f32 %v1229, 1.442695
  %v1231 = vpow.pop %v1230
  %v1232 = vadd.f32 %v1231, 1.0
  %v1233 = vrcp.pop %v1232
  %v1234 = vmul.f32 1.0, %v1233
  %v1235 = vxor.u32 %v1228, 2147483648
  %v1236 = vmul.f32 %v1235, 1.442695
  %v1237 = vpow.pop %v1236
  %v1238 = vadd.f32 %v1237, 1.0
  %v1239 = vrcp.pop %v1238
  %v1240 = vmul.f32 1.0, %v1239
  %v1241 = vtanh.pop %v1185
  %v1242 = vtanh.pop %v1228
  %v1247 = vlaneseq
  %v1248 = vshrl.u32 %v1247, 7
  %v1249 = vsub.s32 0, %v1248
  %v1250 = vrot.slane %v405, %v1249
  %v1251 = vlaneseq
  %v1252 = vshrl.u32 %v1251, 7
  %v1253 = vsub.s32 0, %v1252
  %v1254 = vrot.slane %v946, %v1253
  %v1255 = vlaneseq
  %v1256 = vshrl.u32 %v1255, 7
  %v1257 = vsub.s32 0, %v1256
  %v1258 = vrot.slane %v947, %v1257
  %v1259 = vlaneseq
  %v1260 = vshrl.u32 %v1259, 7
  %v1261 = vsub.s32 0, %v1260
  %v1262 = vrot.slane %v427, %v1261
  %v1263 = vlaneseq
  %v1264 = vshrl.u32 %v1263, 7
  %v1265 = vsub.s32 0, %v1264
  %v1266 = vrot.slane %v406, %v1265
  %v1267 = vlaneseq
  %v1268 = vshrl.u32 %v1267, 7
  %v1269 = vsub.s32 0, %v1268
  %v1270 = vrot.slane %v948, %v1269
  %v1271 = vlaneseq
  %v1272 = vshrl.u32 %v1271, 7
  %v1273 = vsub.s32 0, %v1272
  %v1274 = vrot.slane %v949, %v1273
  %v1275 = vlaneseq
  %v1276 = vshrl.u32 %v1275, 7
  %v1277 = vsub.s32 0, %v1276
  %v1278 = vrot.slane %v428, %v1277
  %v1279 = vsel %vm1010, %v1254, %v1250
  %v1280 = vsel %vm1012, %v1258, %v1279
  %v1281 = vsel %vm1014, %v1262, %v1280
  %v1282 = vsel %vm1016, %v1266, %v1281
  %v1283 = vsel %vm1018, %v1270, %v1282
  %v1284 = vsel %vm1020, %v1274, %v1283
  %v1285 = vsel %vm1022, %v1278, %v1284
  %1286 = vrot.lane.b32.xlu0 %v1285, 64
  %v1287 = vpop.permute.xlu0 %1286
  %v1289 = vmul.f32 %v1234, %v1287
  %1291 = vrot.lane.b32.xlu0 %v1241, 104
  %v1292 = vpop.permute.xlu0 %1291
  %v1294 = vmul.f32 %v1234, %v1292
  %1296 = vrot.lane.b32.xlu0 %v1294, 8
  %v1297 = vpop.permute.xlu0 %1296
  %v1299 = vadd.f32 %v1289, %v1297
  %v1300 = vlaneseq
  %v1301 = vshrl.u32 %v1300, 7
  %v1302 = vsub.s32 3, %v1301
  %v1303 = vrot.slane %v405, %v1302
  %v1304 = vlaneseq
  %v1305 = vshrl.u32 %v1304, 7
  %v1306 = vsub.s32 3, %v1305
  %v1307 = vrot.slane %v946, %v1306
  %v1308 = vlaneseq
  %v1309 = vshrl.u32 %v1308, 7
  %v1310 = vsub.s32 3, %v1309
  %v1311 = vrot.slane %v947, %v1310
  %v1312 = vlaneseq
  %v1313 = vshrl.u32 %v1312, 7
  %v1314 = vsub.s32 3, %v1313
  %v1315 = vrot.slane %v427, %v1314
  %v1316 = vlaneseq
  %v1317 = vshrl.u32 %v1316, 7
  %v1318 = vsub.s32 3, %v1317
  %v1319 = vrot.slane %v406, %v1318
  %v1320 = vlaneseq
  %v1321 = vshrl.u32 %v1320, 7
  %v1322 = vsub.s32 3, %v1321
  %v1323 = vrot.slane %v948, %v1322
  %v1324 = vlaneseq
  %v1325 = vshrl.u32 %v1324, 7
  %v1326 = vsub.s32 3, %v1325
  %v1327 = vrot.slane %v949, %v1326
  %v1328 = vlaneseq
  %v1329 = vshrl.u32 %v1328, 7
  %v1330 = vsub.s32 3, %v1329
  %v1331 = vrot.slane %v428, %v1330
  %v1332 = vsel %vm1010, %v1307, %v1303
  %v1333 = vsel %vm1012, %v1311, %v1332
  %v1334 = vsel %vm1014, %v1315, %v1333
  %v1335 = vsel %vm1016, %v1319, %v1334
  %v1336 = vsel %vm1018, %v1323, %v1335
  %v1337 = vsel %vm1020, %v1327, %v1336
  %v1338 = vsel %vm1022, %v1331, %v1337
  %1339 = vrot.lane.b32.xlu0 %v1338, 64
  %v1340 = vpop.permute.xlu0 %1339
  %v1342 = vmul.f32 %v1240, %v1340
  %1344 = vrot.lane.b32.xlu0 %v1242, 104
  %v1345 = vpop.permute.xlu0 %1344
  %v1347 = vmul.f32 %v1240, %v1345
  %1349 = vrot.lane.b32.xlu0 %v1347, 8
  %v1350 = vpop.permute.xlu0 %1349
  %v1352 = vadd.f32 %v1342, %v1350
  %v1353 = vtanh.pop %v1299
  %1355 = vrot.lane.b32.xlu0 %v1353, 8
  %v1356 = vpop.permute.xlu0 %1355
  %v1358 = vmul.f32 %v1234, %v1356
  %v1359 = vtanh.pop %v1352
  %1361 = vrot.lane.b32.xlu0 %v1359, 8
  %v1362 = vpop.permute.xlu0 %1361
  %v1364 = vmul.f32 %v1240, %v1362
  %1366 = vrot.lane.b32.xlu0 %v1358, 112
  %v1367 = vpop.permute.xlu0 %1366
  %1370 = vrot.lane.b32.xlu0 %v1364, 88
  %v1371 = vpop.permute.xlu0 %1370
  %v1373 = vsel %vm465, %v1367, %v1371
  %v1374 = vcombine.high %v1358, %v1358
  %v1376 = vunpack.c.l.s4 1966171168
  %v1377 = vunpack.c.0.s8 %v1376
  %v1378 = vlaneseq
  %v1379 = vshrl.u32 %v1378, 7
  %v1380 = vsub.s32 %v1377, %v1379
  %v1381 = vrot.slane %v1358, %v1380
  %v1383 = vunpack.c.l.s4 1966171168
  %v1384 = vunpack.c.0.s8 %v1383
  %v1385 = vlaneseq
  %v1386 = vshrl.u32 %v1385, 7
  %v1387 = vsub.s32 %v1384, %v1386
  %v1388 = vrot.slane %v1374, %v1387
  %v1389 = vcombine.high %v1381, %v1381
  %v1390 = vcombine.high %v1388, %v1388
  %v1392 = vunpack.c.l.s4 1966171168
  %v1393 = vunpack.c.0.s8 %v1392
  %v1394 = vlaneseq
  %v1395 = vshrl.u32 %v1394, 7
  %v1396 = vsub.s32 %v1393, %v1395
  %v1397 = vrot.slane %v1381, %v1396
  %v1399 = vunpack.c.l.s4 1966171168
  %v1400 = vunpack.c.0.s8 %v1399
  %v1401 = vlaneseq
  %v1402 = vshrl.u32 %v1401, 7
  %v1403 = vsub.s32 %v1400, %v1402
  %v1404 = vrot.slane %v1388, %v1403
  %v1406 = vunpack.c.l.s4 1966171168
  %v1407 = vunpack.c.0.s8 %v1406
  %v1408 = vlaneseq
  %v1409 = vshrl.u32 %v1408, 7
  %v1410 = vsub.s32 %v1407, %v1409
  %v1411 = vrot.slane %v1389, %v1410
  %v1413 = vunpack.c.l.s4 1966171168
  %v1414 = vunpack.c.0.s8 %v1413
  %v1415 = vlaneseq
  %v1416 = vshrl.u32 %v1415, 7
  %v1417 = vsub.s32 %v1414, %v1416
  %v1418 = vrot.slane %v1390, %v1417
  %v1419 = vcombine.high %v1397, %v1397
  %v1420 = vcombine.high %v1404, %v1404
  %v1421 = vcombine.high %v1411, %v1411
  %v1422 = vcombine.high %v1418, %v1418
  %v1423 = vcombine.high %v1364, %v1364
  %v1425 = vunpack.c.l.s4 1966171168
  %v1426 = vunpack.c.0.s8 %v1425
  %v1427 = vlaneseq
  %v1428 = vshrl.u32 %v1427, 7
  %v1429 = vsub.s32 %v1426, %v1428
  %v1430 = vrot.slane %v1364, %v1429
  %v1432 = vunpack.c.l.s4 1966171168
  %v1433 = vunpack.c.0.s8 %v1432
  %v1434 = vlaneseq
  %v1435 = vshrl.u32 %v1434, 7
  %v1436 = vsub.s32 %v1433, %v1435
  %v1437 = vrot.slane %v1423, %v1436
  %v1438 = vcombine.high %v1430, %v1430
  %v1439 = vcombine.high %v1437, %v1437
  %v1441 = vunpack.c.l.s4 1966171168
  %v1442 = vunpack.c.0.s8 %v1441
  %v1443 = vlaneseq
  %v1444 = vshrl.u32 %v1443, 7
  %v1445 = vsub.s32 %v1442, %v1444
  %v1446 = vrot.slane %v1430, %v1445
  %v1448 = vunpack.c.l.s4 1966171168
  %v1449 = vunpack.c.0.s8 %v1448
  %v1450 = vlaneseq
  %v1451 = vshrl.u32 %v1450, 7
  %v1452 = vsub.s32 %v1449, %v1451
  %v1453 = vrot.slane %v1437, %v1452
  %v1455 = vunpack.c.l.s4 1966171168
  %v1456 = vunpack.c.0.s8 %v1455
  %v1457 = vlaneseq
  %v1458 = vshrl.u32 %v1457, 7
  %v1459 = vsub.s32 %v1456, %v1458
  %v1460 = vrot.slane %v1438, %v1459
  %v1462 = vunpack.c.l.s4 1966171168
  %v1463 = vunpack.c.0.s8 %v1462
  %v1464 = vlaneseq
  %v1465 = vshrl.u32 %v1464, 7
  %v1466 = vsub.s32 %v1463, %v1465
  %v1467 = vrot.slane %v1439, %v1466
  %v1468 = vcombine.high %v1446, %v1446
  %v1469 = vcombine.high %v1453, %v1453
  %v1470 = vcombine.high %v1460, %v1460
  %v1471 = vcombine.high %v1467, %v1467
  %v1473 = vsel %vm164, %v1373, 0
  %1475 = vmatprep.subr.mxu0 0.0
  %1476 = vmatpush1.msra.mxu0 %v355
  %1477 = vmatprep.subr.mxu0 0.0
  %1478 = vmatpush1.msra.mxu0 %v356
  %1479 = vmatprep.subr.mxu0 0.0
  %1480 = vmatpush1.msra.mxu0 0.0
  %1481 = vmatprep.subr.mxu0 0.0
  %1482 = vmatpush1.msra.mxu0 0.0
  %1483 = vmatprep.subr.mxu0 0.0
  %1484 = vmatpush1.msra.mxu0 0.0
  %1485 = vmatprep.subr.mxu0 0.0
  %1486 = vmatpush1.msra.mxu0 0.0
  %1487 = vmatprep.subr.mxu0 0.0
  %1488 = vmatpush1.msra.mxu0 0.0
  %1489 = vmatprep.subr.mxu0 0.0
  %1490 = vmatpush1.msra.mxu0 0.0
  %1491 = vmatprep.subr.mxu0 0.0
  %1492 = vmatpush1.msra.mxu0 0.0
  %1493 = vmatprep.subr.mxu0 0.0
  %1494 = vmatpush1.msra.mxu0 0.0
  %1495 = vmatprep.subr.mxu0 0.0
  %1496 = vmatpush1.msra.mxu0 0.0
  %1497 = vmatprep.subr.mxu0 0.0
  %1498 = vmatpush1.msra.mxu0 0.0
  %1499 = vmatprep.subr.mxu0 0.0
  %1500 = vmatpush1.msra.mxu0 0.0
  %1501 = vmatprep.subr.mxu0 0.0
  %1502 = vmatpush1.msra.mxu0 0.0
  %1503 = vmatprep.subr.mxu0 0.0
  %1504 = vmatpush1.msra.mxu0 0.0
  %1505 = vmatprep.subr.mxu0 0.0
  %1506 = vmatpush1.msra.mxu0 0.0
  %1507 = vmatprep.subr.mxu0 0.0
  %1508 = vmatpush1.msra.mxu0 0.0
  %1509 = vmatprep.subr.mxu0 0.0
  %1510 = vmatpush1.msra.mxu0 0.0
  %1511 = vmatprep.subr.mxu0 0.0
  %1512 = vmatpush1.msra.mxu0 0.0
  %1513 = vmatprep.subr.mxu0 0.0
  %1514 = vmatpush1.msra.mxu0 0.0
  %1515 = vmatprep.subr.mxu0 0.0
  %1516 = vmatpush1.msra.mxu0 0.0
  %1517 = vmatprep.subr.mxu0 0.0
  %1518 = vmatpush1.msra.mxu0 0.0
  %1519 = vmatprep.subr.mxu0 0.0
  %1520 = vmatpush1.msra.mxu0 0.0
  %1521 = vmatprep.subr.mxu0 0.0
  %1522 = vmatpush1.msra.mxu0 0.0
  %1523 = vmatprep.subr.mxu0 0.0
  %1524 = vmatpush1.msra.mxu0 0.0
  %1525 = vmatprep.subr.mxu0 0.0
  %1526 = vmatpush1.msra.mxu0 0.0
  %1527 = vmatprep.subr.mxu0 0.0
  %1528 = vmatpush1.msra.mxu0 0.0
  %1529 = vmatprep.subr.mxu0 0.0
  %1530 = vmatpush1.msra.mxu0 0.0
  %1531 = vmatprep.subr.mxu0 0.0
  %1532 = vmatpush1.msra.mxu0 0.0
  %1533 = vmatprep.subr.mxu0 0.0
  %1534 = vmatpush1.msra.mxu0 0.0
  %1535 = vmatprep.subr.mxu0 0.0
  %1536 = vmatpush1.msra.mxu0 0.0
  %1537 = vmatprep.subr.mxu0 0.0
  %1538 = vmatpush1.msra.mxu0 0.0
  %1539 = vmatprep.mubr.f32.mxu0 0.0
  %1540 = vmatmul.mubr.f32.gmra.mrb[0].mxu0 %v1473
  %v1541 = vpop.f32.mrb[0].mxu0
  %v1542 = vadd.f32 0.0, %v1541
  %v1543 = vpop.f32.mrb[0].mxu0
  %1544 = vdwg.mxu0
  %v1545 = vadd.f32 %v1542, %v1226
  %v1546 = vadd.f32 %v1542, %v1183
  %v1547 = vxor.u32 %v1545, 2147483648
  %v1548 = vmul.f32 %v1547, 1.442695
  %v1549 = vpow.pop %v1548
  %v1550 = vadd.f32 %v1549, 1.0
  %v1551 = vrcp.pop %v1550
  %v1552 = vmul.f32 1.0, %v1551
  %v1553 = vxor.u32 %v1546, 2147483648
  %v1554 = vmul.f32 %v1553, 1.442695
  %v1555 = vpow.pop %v1554
  %v1556 = vadd.f32 %v1555, 1.0
  %v1557 = vrcp.pop %v1556
  %v1558 = vmul.f32 1.0, %v1557
  %v1559 = vtanh.pop %v1545
  %v1560 = vtanh.pop %v1546
  %v1561 = vmul.f32 %v1552, %v1299
  %1563 = vrot.lane.b32.xlu0 %v1559, 104
  %v1564 = vpop.permute.xlu0 %1563
  %v1566 = vmul.f32 %v1552, %v1564
  %1568 = vrot.lane.b32.xlu0 %v1566, 8
  %v1569 = vpop.permute.xlu0 %1568
  %v1571 = vadd.f32 %v1561, %v1569
  %v1572 = vmul.f32 %v1558, %v1352
  %1574 = vrot.lane.b32.xlu0 %v1560, 104
  %v1575 = vpop.permute.xlu0 %1574
  %v1577 = vmul.f32 %v1558, %v1575
  %1579 = vrot.lane.b32.xlu0 %v1577, 8
  %v1580 = vpop.permute.xlu0 %1579
  %v1582 = vadd.f32 %v1572, %v1580
  %v1583 = vtanh.pop %v1571
  %1585 = vrot.lane.b32.xlu0 %v1583, 8
  %v1586 = vpop.permute.xlu0 %1585
  %v1588 = vmul.f32 %v1552, %v1586
  %v1589 = vtanh.pop %v1582
  %1591 = vrot.lane.b32.xlu0 %v1589, 8
  %v1592 = vpop.permute.xlu0 %1591
  %v1594 = vmul.f32 %v1558, %v1592
  %1596 = vrot.lane.b32.xlu0 %v1588, 112
  %v1597 = vpop.permute.xlu0 %1596
  %1600 = vrot.lane.b32.xlu0 %v1594, 88
  %v1601 = vpop.permute.xlu0 %1600
  %v1603 = vsel %vm465, %v1597, %v1601
  %v1604 = vcombine.high %v1588, %v1588
  %v1606 = vunpack.c.l.s4 1966171168
  %v1607 = vunpack.c.0.s8 %v1606
  %v1608 = vlaneseq
  %v1609 = vshrl.u32 %v1608, 7
  %v1610 = vsub.s32 %v1607, %v1609
  %v1611 = vrot.slane %v1588, %v1610
  %v1613 = vunpack.c.l.s4 1966171168
  %v1614 = vunpack.c.0.s8 %v1613
  %v1615 = vlaneseq
  %v1616 = vshrl.u32 %v1615, 7
  %v1617 = vsub.s32 %v1614, %v1616
  %v1618 = vrot.slane %v1604, %v1617
  %v1619 = vcombine.high %v1611, %v1611
  %v1620 = vcombine.high %v1618, %v1618
  %v1622 = vunpack.c.l.s4 1966171168
  %v1623 = vunpack.c.0.s8 %v1622
  %v1624 = vlaneseq
  %v1625 = vshrl.u32 %v1624, 7
  %v1626 = vsub.s32 %v1623, %v1625
  %v1627 = vrot.slane %v1611, %v1626
  %v1629 = vunpack.c.l.s4 1966171168
  %v1630 = vunpack.c.0.s8 %v1629
  %v1631 = vlaneseq
  %v1632 = vshrl.u32 %v1631, 7
  %v1633 = vsub.s32 %v1630, %v1632
  %v1634 = vrot.slane %v1618, %v1633
  %v1636 = vunpack.c.l.s4 1966171168
  %v1637 = vunpack.c.0.s8 %v1636
  %v1638 = vlaneseq
  %v1639 = vshrl.u32 %v1638, 7
  %v1640 = vsub.s32 %v1637, %v1639
  %v1641 = vrot.slane %v1619, %v1640
  %v1643 = vunpack.c.l.s4 1966171168
  %v1644 = vunpack.c.0.s8 %v1643
  %v1645 = vlaneseq
  %v1646 = vshrl.u32 %v1645, 7
  %v1647 = vsub.s32 %v1644, %v1646
  %v1648 = vrot.slane %v1620, %v1647
  %v1649 = vcombine.high %v1627, %v1627
  %v1650 = vcombine.high %v1634, %v1634
  %v1651 = vcombine.high %v1641, %v1641
  %v1652 = vcombine.high %v1648, %v1648
  %v1653 = vcombine.high %v1594, %v1594
  %v1655 = vunpack.c.l.s4 1966171168
  %v1656 = vunpack.c.0.s8 %v1655
  %v1657 = vlaneseq
  %v1658 = vshrl.u32 %v1657, 7
  %v1659 = vsub.s32 %v1656, %v1658
  %v1660 = vrot.slane %v1594, %v1659
  %v1662 = vunpack.c.l.s4 1966171168
  %v1663 = vunpack.c.0.s8 %v1662
  %v1664 = vlaneseq
  %v1665 = vshrl.u32 %v1664, 7
  %v1666 = vsub.s32 %v1663, %v1665
  %v1667 = vrot.slane %v1653, %v1666
  %v1668 = vcombine.high %v1660, %v1660
  %v1669 = vcombine.high %v1667, %v1667
  %v1671 = vunpack.c.l.s4 1966171168
  %v1672 = vunpack.c.0.s8 %v1671
  %v1673 = vlaneseq
  %v1674 = vshrl.u32 %v1673, 7
  %v1675 = vsub.s32 %v1672, %v1674
  %v1676 = vrot.slane %v1660, %v1675
  %v1678 = vunpack.c.l.s4 1966171168
  %v1679 = vunpack.c.0.s8 %v1678
  %v1680 = vlaneseq
  %v1681 = vshrl.u32 %v1680, 7
  %v1682 = vsub.s32 %v1679, %v1681
  %v1683 = vrot.slane %v1667, %v1682
  %v1685 = vunpack.c.l.s4 1966171168
  %v1686 = vunpack.c.0.s8 %v1685
  %v1687 = vlaneseq
  %v1688 = vshrl.u32 %v1687, 7
  %v1689 = vsub.s32 %v1686, %v1688
  %v1690 = vrot.slane %v1668, %v1689
  %v1692 = vunpack.c.l.s4 1966171168
  %v1693 = vunpack.c.0.s8 %v1692
  %v1694 = vlaneseq
  %v1695 = vshrl.u32 %v1694, 7
  %v1696 = vsub.s32 %v1693, %v1695
  %v1697 = vrot.slane %v1669, %v1696
  %v1698 = vcombine.high %v1676, %v1676
  %v1699 = vcombine.high %v1683, %v1683
  %v1700 = vcombine.high %v1690, %v1690
  %v1701 = vcombine.high %v1697, %v1697
  %v1703 = vsel %vm164, %v1603, 0
  %1705 = vmatprep.subr.mxu0 0.0
  %1706 = vmatpush1.msra.mxu0 %v355
  %1707 = vmatprep.subr.mxu0 0.0
  %1708 = vmatpush1.msra.mxu0 %v356
  %1709 = vmatprep.subr.mxu0 0.0
  %1710 = vmatpush1.msra.mxu0 0.0
  %1711 = vmatprep.subr.mxu0 0.0
  %1712 = vmatpush1.msra.mxu0 0.0
  %1713 = vmatprep.subr.mxu0 0.0
  %1714 = vmatpush1.msra.mxu0 0.0
  %1715 = vmatprep.subr.mxu0 0.0
  %1716 = vmatpush1.msra.mxu0 0.0
  %1717 = vmatprep.subr.mxu0 0.0
  %1718 = vmatpush1.msra.mxu0 0.0
  %1719 = vmatprep.subr.mxu0 0.0
  %1720 = vmatpush1.msra.mxu0 0.0
  %1721 = vmatprep.subr.mxu0 0.0
  %1722 = vmatpush1.msra.mxu0 0.0
  %1723 = vmatprep.subr.mxu0 0.0
  %1724 = vmatpush1.msra.mxu0 0.0
  %1725 = vmatprep.subr.mxu0 0.0
  %1726 = vmatpush1.msra.mxu0 0.0
  %1727 = vmatprep.subr.mxu0 0.0
  %1728 = vmatpush1.msra.mxu0 0.0
  %1729 = vmatprep.subr.mxu0 0.0
  %1730 = vmatpush1.msra.mxu0 0.0
  %1731 = vmatprep.subr.mxu0 0.0
  %1732 = vmatpush1.msra.mxu0 0.0
  %1733 = vmatprep.subr.mxu0 0.0
  %1734 = vmatpush1.msra.mxu0 0.0
  %1735 = vmatprep.subr.mxu0 0.0
  %1736 = vmatpush1.msra.mxu0 0.0
  %1737 = vmatprep.subr.mxu0 0.0
  %1738 = vmatpush1.msra.mxu0 0.0
  %1739 = vmatprep.subr.mxu0 0.0
  %1740 = vmatpush1.msra.mxu0 0.0
  %1741 = vmatprep.subr.mxu0 0.0
  %1742 = vmatpush1.msra.mxu0 0.0
  %1743 = vmatprep.subr.mxu0 0.0
  %1744 = vmatpush1.msra.mxu0 0.0
  %1745 = vmatprep.subr.mxu0 0.0
  %1746 = vmatpush1.msra.mxu0 0.0
  %1747 = vmatprep.subr.mxu0 0.0
  %1748 = vmatpush1.msra.mxu0 0.0
  %1749 = vmatprep.subr.mxu0 0.0
  %1750 = vmatpush1.msra.mxu0 0.0
  %1751 = vmatprep.subr.mxu0 0.0
  %1752 = vmatpush1.msra.mxu0 0.0
  %1753 = vmatprep.subr.mxu0 0.0
  %1754 = vmatpush1.msra.mxu0 0.0
  %1755 = vmatprep.subr.mxu0 0.0
  %1756 = vmatpush1.msra.mxu0 0.0
  %1757 = vmatprep.subr.mxu0 0.0
  %1758 = vmatpush1.msra.mxu0 0.0
  %1759 = vmatprep.subr.mxu0 0.0
  %1760 = vmatpush1.msra.mxu0 0.0
  %1761 = vmatprep.subr.mxu0 0.0
  %1762 = vmatpush1.msra.mxu0 0.0
  %1763 = vmatprep.subr.mxu0 0.0
  %1764 = vmatpush1.msra.mxu0 0.0
  %1765 = vmatprep.subr.mxu0 0.0
  %1766 = vmatpush1.msra.mxu0 0.0
  %1767 = vmatprep.subr.mxu0 0.0
  %1768 = vmatpush1.msra.mxu0 0.0
  %1769 = vmatprep.mubr.f32.mxu0 0.0
  %1770 = vmatmul.mubr.f32.gmra.mrb[0].mxu0 %v1703
  %v1771 = vpop.f32.mrb[0].mxu0
  %v1772 = vadd.f32 0.0, %v1771
  %v1773 = vpop.f32.mrb[0].mxu0
  %1774 = vdwg.mxu0
  %v1775 = vlaneseq
  %v1776 = vshrl.u32 %v1775, 7
  %v1777 = vsub.s32 3, %v1776
  %v1778 = vrot.slane %v322, %v1777
  %v1779 = vlaneseq
  %v1780 = vshrl.u32 %v1779, 7
  %v1781 = vsub.s32 3, %v1780
  %v1782 = vrot.slane %v344, %v1781
  %v1783 = vlaneseq
  %v1784 = vshrl.u32 %v1783, 7
  %v1785 = vsub.s32 3, %v1784
  %v1786 = vrot.slane %v327, %v1785
  %v1787 = vlaneseq
  %v1788 = vshrl.u32 %v1787, 7
  %v1789 = vsub.s32 3, %v1788
  %v1790 = vrot.slane %v345, %v1789
  %v1791 = vlaneseq
  %v1792 = vshrl.u32 %v1791, 7
  %v1793 = vsub.s32 3, %v1792
  %v1794 = vrot.slane %v332, %v1793
  %v1795 = vlaneseq
  %v1796 = vshrl.u32 %v1795, 7
  %v1797 = vsub.s32 3, %v1796
  %v1798 = vrot.slane %v346, %v1797
  %v1799 = vlaneseq
  %v1800 = vshrl.u32 %v1799, 7
  %v1801 = vsub.s32 3, %v1800
  %v1802 = vrot.slane %v337, %v1801
  %v1803 = vlaneseq
  %v1804 = vshrl.u32 %v1803, 7
  %v1805 = vsub.s32 3, %v1804
  %v1806 = vrot.slane %v347, %v1805
  %v1807 = vsel %vm1010, %v1782, %v1778
  %v1808 = vsel %vm1012, %v1786, %v1807
  %v1809 = vsel %vm1014, %v1790, %v1808
  %v1810 = vsel %vm1016, %v1794, %v1809
  %v1811 = vsel %vm1018, %v1798, %v1810
  %v1812 = vsel %vm1020, %v1802, %v1811
  %v1813 = vsel %vm1022, %v1806, %v1812
  %1814 = vrot.lane.b32.xlu0 %v1813, 64
  %v1815 = vpop.permute.xlu0 %1814
  %v1817 = vadd.f32 %v1772, %v1815
  %v1818 = vlaneseq
  %v1819 = vshrl.u32 %v1818, 7
  %v1820 = vsub.s32 0, %v1819
  %v1821 = vrot.slane %v322, %v1820
  %v1822 = vlaneseq
  %v1823 = vshrl.u32 %v1822, 7
  %v1824 = vsub.s32 0, %v1823
  %v1825 = vrot.slane %v344, %v1824
  %v1826 = vlaneseq
  %v1827 = vshrl.u32 %v1826, 7
  %v1828 = vsub.s32 0, %v1827
  %v1829 = vrot.slane %v327, %v1828
  %v1830 = vlaneseq
  %v1831 = vshrl.u32 %v1830, 7
  %v1832 = vsub.s32 0, %v1831
  %v1833 = vrot.slane %v345, %v1832
  %v1834 = vlaneseq
  %v1835 = vshrl.u32 %v1834, 7
  %v1836 = vsub.s32 0, %v1835
  %v1837 = vrot.slane %v332, %v1836
  %v1838 = vlaneseq
  %v1839 = vshrl.u32 %v1838, 7
  %v1840 = vsub.s32 0, %v1839
  %v1841 = vrot.slane %v346, %v1840
  %v1842 = vlaneseq
  %v1843 = vshrl.u32 %v1842, 7
  %v1844 = vsub.s32 0, %v1843
  %v1845 = vrot.slane %v337, %v1844
  %v1846 = vlaneseq
  %v1847 = vshrl.u32 %v1846, 7
  %v1848 = vsub.s32 0, %v1847
  %v1849 = vrot.slane %v347, %v1848
  %v1850 = vsel %vm1010, %v1825, %v1821
  %v1851 = vsel %vm1012, %v1829, %v1850
  %v1852 = vsel %vm1014, %v1833, %v1851
  %v1853 = vsel %vm1016, %v1837, %v1852
  %v1854 = vsel %vm1018, %v1841, %v1853
  %v1855 = vsel %vm1020, %v1845, %v1854
  %v1856 = vsel %vm1022, %v1849, %v1855
  %1857 = vrot.lane.b32.xlu0 %v1856, 64
  %v1858 = vpop.permute.xlu0 %1857
  %v1860 = vadd.f32 %v1772, %v1858
  %v1861 = vxor.u32 %v1817, 2147483648
  %v1862 = vmul.f32 %v1861, 1.442695
  %v1863 = vpow.pop %v1862
  %v1864 = vadd.f32 %v1863, 1.0
  %v1865 = vrcp.pop %v1864
  %v1866 = vmul.f32 1.0, %v1865
  %v1867 = vxor.u32 %v1860, 2147483648
  %v1868 = vmul.f32 %v1867, 1.442695
  %v1869 = vpow.pop %v1868
  %v1870 = vadd.f32 %v1869, 1.0
  %v1871 = vrcp.pop %v1870
  %v1872 = vmul.f32 1.0, %v1871
  %v1873 = vtanh.pop %v1817
  %v1874 = vtanh.pop %v1860
  %v1875 = vmul.f32 %v1866, %v1571
  %1877 = vrot.lane.b32.xlu0 %v1873, 104
  %v1878 = vpop.permute.xlu0 %1877
  %v1880 = vmul.f32 %v1866, %v1878
  %1882 = vrot.lane.b32.xlu0 %v1880, 8
  %v1883 = vpop.permute.xlu0 %1882
  %v1885 = vadd.f32 %v1875, %v1883
  %v1886 = vmul.f32 %v1872, %v1582
  %1888 = vrot.lane.b32.xlu0 %v1874, 104
  %v1889 = vpop.permute.xlu0 %1888
  %v1891 = vmul.f32 %v1872, %v1889
  %1893 = vrot.lane.b32.xlu0 %v1891, 8
  %v1894 = vpop.permute.xlu0 %1893
  %v1896 = vadd.f32 %v1886, %v1894
  %v1897 = vtanh.pop %v1885
  %1899 = vrot.lane.b32.xlu0 %v1897, 8
  %v1900 = vpop.permute.xlu0 %1899
  %v1902 = vmul.f32 %v1866, %v1900
  %v1903 = vtanh.pop %v1896
  %1905 = vrot.lane.b32.xlu0 %v1903, 8
  %v1906 = vpop.permute.xlu0 %1905
  %v1908 = vmul.f32 %v1872, %v1906
  %v1910 = vcombine.high %v1902, %v1902
  %v1912 = vunpack.c.l.s4 1966171168
  %v1913 = vunpack.c.0.s8 %v1912
  %v1914 = vlaneseq
  %v1915 = vshrl.u32 %v1914, 7
  %v1916 = vsub.s32 %v1913, %v1915
  %v1917 = vrot.slane %v1902, %v1916
  %v1919 = vunpack.c.l.s4 1966171168
  %v1920 = vunpack.c.0.s8 %v1919
  %v1921 = vlaneseq
  %v1922 = vshrl.u32 %v1921, 7
  %v1923 = vsub.s32 %v1920, %v1922
  %v1924 = vrot.slane %v1910, %v1923
  %v1925 = vcombine.high %v1917, %v1917
  %v1926 = vcombine.high %v1924, %v1924
  %v1928 = vunpack.c.l.s4 1966171168
  %v1929 = vunpack.c.0.s8 %v1928
  %v1930 = vlaneseq
  %v1931 = vshrl.u32 %v1930, 7
  %v1932 = vsub.s32 %v1929, %v1931
  %v1933 = vrot.slane %v1917, %v1932
  %v1935 = vunpack.c.l.s4 1966171168
  %v1936 = vunpack.c.0.s8 %v1935
  %v1937 = vlaneseq
  %v1938 = vshrl.u32 %v1937, 7
  %v1939 = vsub.s32 %v1936, %v1938
  %v1940 = vrot.slane %v1924, %v1939
  %v1942 = vunpack.c.l.s4 1966171168
  %v1943 = vunpack.c.0.s8 %v1942
  %v1944 = vlaneseq
  %v1945 = vshrl.u32 %v1944, 7
  %v1946 = vsub.s32 %v1943, %v1945
  %v1947 = vrot.slane %v1925, %v1946
  %v1949 = vunpack.c.l.s4 1966171168
  %v1950 = vunpack.c.0.s8 %v1949
  %v1951 = vlaneseq
  %v1952 = vshrl.u32 %v1951, 7
  %v1953 = vsub.s32 %v1950, %v1952
  %v1954 = vrot.slane %v1926, %v1953
  %v1955 = vcombine.high %v1933, %v1933
  %v1956 = vcombine.high %v1940, %v1940
  %v1957 = vcombine.high %v1947, %v1947
  %v1958 = vcombine.high %v1954, %v1954
  %v1960 = vcombine.high %v1908, %v1908
  %v1962 = vunpack.c.l.s4 1966171168
  %v1963 = vunpack.c.0.s8 %v1962
  %v1964 = vlaneseq
  %v1965 = vshrl.u32 %v1964, 7
  %v1966 = vsub.s32 %v1963, %v1965
  %v1967 = vrot.slane %v1908, %v1966
  %v1969 = vunpack.c.l.s4 1966171168
  %v1970 = vunpack.c.0.s8 %v1969
  %v1971 = vlaneseq
  %v1972 = vshrl.u32 %v1971, 7
  %v1973 = vsub.s32 %v1970, %v1972
  %v1974 = vrot.slane %v1960, %v1973
  %v1975 = vcombine.high %v1967, %v1967
  %v1976 = vcombine.high %v1974, %v1974
  %v1978 = vunpack.c.l.s4 1966171168
  %v1979 = vunpack.c.0.s8 %v1978
  %v1980 = vlaneseq
  %v1981 = vshrl.u32 %v1980, 7
  %v1982 = vsub.s32 %v1979, %v1981
  %v1983 = vrot.slane %v1967, %v1982
  %v1985 = vunpack.c.l.s4 1966171168
  %v1986 = vunpack.c.0.s8 %v1985
  %v1987 = vlaneseq
  %v1988 = vshrl.u32 %v1987, 7
  %v1989 = vsub.s32 %v1986, %v1988
  %v1990 = vrot.slane %v1974, %v1989
  %v1992 = vunpack.c.l.s4 1966171168
  %v1993 = vunpack.c.0.s8 %v1992
  %v1994 = vlaneseq
  %v1995 = vshrl.u32 %v1994, 7
  %v1996 = vsub.s32 %v1993, %v1995
  %v1997 = vrot.slane %v1975, %v1996
  %v1999 = vunpack.c.l.s4 1966171168
  %v2000 = vunpack.c.0.s8 %v1999
  %v2001 = vlaneseq
  %v2002 = vshrl.u32 %v2001, 7
  %v2003 = vsub.s32 %v2000, %v2002
  %v2004 = vrot.slane %v1976, %v2003
  %v2005 = vcombine.high %v1983, %v1983
  %v2006 = vcombine.high %v1990, %v1990
  %v2007 = vcombine.high %v1997, %v1997
  %v2008 = vcombine.high %v2004, %v2004
  %v2017 = vlaneseq
  %v2018 = vshrl.u32 %v2017, 7
  %v2019 = vsub.s32 0, %v2018
  %v2020 = vrot.slane %v1397, %v2019
  %v2021 = vlaneseq
  %v2022 = vshrl.u32 %v2021, 7
  %v2023 = vsub.s32 0, %v2022
  %v2024 = vrot.slane %v1411, %v2023
  %v2025 = vlaneseq
  %v2026 = vshrl.u32 %v2025, 7
  %v2027 = vsub.s32 0, %v2026
  %v2028 = vrot.slane %v1419, %v2027
  %v2029 = vlaneseq
  %v2030 = vshrl.u32 %v2029, 7
  %v2031 = vsub.s32 0, %v2030
  %v2032 = vrot.slane %v1421, %v2031
  %v2033 = vlaneseq
  %v2034 = vshrl.u32 %v2033, 7
  %v2035 = vsub.s32 0, %v2034
  %v2036 = vrot.slane %v1404, %v2035
  %v2037 = vlaneseq
  %v2038 = vshrl.u32 %v2037, 7
  %v2039 = vsub.s32 0, %v2038
  %v2040 = vrot.slane %v1418, %v2039
  %v2041 = vlaneseq
  %v2042 = vshrl.u32 %v2041, 7
  %v2043 = vsub.s32 0, %v2042
  %v2044 = vrot.slane %v1420, %v2043
  %v2045 = vlaneseq
  %v2046 = vshrl.u32 %v2045, 7
  %v2047 = vsub.s32 0, %v2046
  %v2048 = vrot.slane %v1422, %v2047
  %2049 = vrot.lane.b32.xlu0 %v2020, 64
  %v2050 = vpop.permute.xlu0 %2049
  %2051 = vrot.lane.b32.xlu0 %v2024, 64
  %v2052 = vpop.permute.xlu0 %2051
  %2053 = vrot.lane.b32.xlu0 %v2028, 64
  %v2054 = vpop.permute.xlu0 %2053
  %2055 = vrot.lane.b32.xlu0 %v2032, 64
  %v2056 = vpop.permute.xlu0 %2055
  %2057 = vrot.lane.b32.xlu0 %v2036, 64
  %v2058 = vpop.permute.xlu0 %2057
  %2059 = vrot.lane.b32.xlu0 %v2040, 64
  %v2060 = vpop.permute.xlu0 %2059
  %2061 = vrot.lane.b32.xlu0 %v2044, 64
  %v2062 = vpop.permute.xlu0 %2061
  %2063 = vrot.lane.b32.xlu0 %v2048, 64
  %v2064 = vpop.permute.xlu0 %2063
  %v2073 = vlaneseq
  %v2074 = vshrl.u32 %v2073, 7
  %v2075 = vsub.s32 0, %v2074
  %v2076 = vrot.slane %v1627, %v2075
  %v2077 = vlaneseq
  %v2078 = vshrl.u32 %v2077, 7
  %v2079 = vsub.s32 0, %v2078
  %v2080 = vrot.slane %v1641, %v2079
  %v2081 = vlaneseq
  %v2082 = vshrl.u32 %v2081, 7
  %v2083 = vsub.s32 0, %v2082
  %v2084 = vrot.slane %v1649, %v2083
  %v2085 = vlaneseq
  %v2086 = vshrl.u32 %v2085, 7
  %v2087 = vsub.s32 0, %v2086
  %v2088 = vrot.slane %v1651, %v2087
  %v2089 = vlaneseq
  %v2090 = vshrl.u32 %v2089, 7
  %v2091 = vsub.s32 0, %v2090
  %v2092 = vrot.slane %v1634, %v2091
  %v2093 = vlaneseq
  %v2094 = vshrl.u32 %v2093, 7
  %v2095 = vsub.s32 0, %v2094
  %v2096 = vrot.slane %v1648, %v2095
  %v2097 = vlaneseq
  %v2098 = vshrl.u32 %v2097, 7
  %v2099 = vsub.s32 0, %v2098
  %v2100 = vrot.slane %v1650, %v2099
  %v2101 = vlaneseq
  %v2102 = vshrl.u32 %v2101, 7
  %v2103 = vsub.s32 0, %v2102
  %v2104 = vrot.slane %v1652, %v2103
  %2105 = vrot.lane.b32.xlu0 %v2076, 64
  %v2106 = vpop.permute.xlu0 %2105
  %2107 = vrot.lane.b32.xlu0 %v2080, 64
  %v2108 = vpop.permute.xlu0 %2107
  %2109 = vrot.lane.b32.xlu0 %v2084, 64
  %v2110 = vpop.permute.xlu0 %2109
  %2111 = vrot.lane.b32.xlu0 %v2088, 64
  %v2112 = vpop.permute.xlu0 %2111
  %2113 = vrot.lane.b32.xlu0 %v2092, 64
  %v2114 = vpop.permute.xlu0 %2113
  %2115 = vrot.lane.b32.xlu0 %v2096, 64
  %v2116 = vpop.permute.xlu0 %2115
  %2117 = vrot.lane.b32.xlu0 %v2100, 64
  %v2118 = vpop.permute.xlu0 %2117
  %2119 = vrot.lane.b32.xlu0 %v2104, 64
  %v2120 = vpop.permute.xlu0 %2119
  %v2129 = vlaneseq
  %v2130 = vshrl.u32 %v2129, 7
  %v2131 = vsub.s32 0, %v2130
  %v2132 = vrot.slane %v1933, %v2131
  %v2133 = vlaneseq
  %v2134 = vshrl.u32 %v2133, 7
  %v2135 = vsub.s32 0, %v2134
  %v2136 = vrot.slane %v1947, %v2135
  %v2137 = vlaneseq
  %v2138 = vshrl.u32 %v2137, 7
  %v2139 = vsub.s32 0, %v2138
  %v2140 = vrot.slane %v1955, %v2139
  %v2141 = vlaneseq
  %v2142 = vshrl.u32 %v2141, 7
  %v2143 = vsub.s32 0, %v2142
  %v2144 = vrot.slane %v1957, %v2143
  %v2145 = vlaneseq
  %v2146 = vshrl.u32 %v2145, 7
  %v2147 = vsub.s32 0, %v2146
  %v2148 = vrot.slane %v1940, %v2147
  %v2149 = vlaneseq
  %v2150 = vshrl.u32 %v2149, 7
  %v2151 = vsub.s32 0, %v2150
  %v2152 = vrot.slane %v1954, %v2151
  %v2153 = vlaneseq
  %v2154 = vshrl.u32 %v2153, 7
  %v2155 = vsub.s32 0, %v2154
  %v2156 = vrot.slane %v1956, %v2155
  %v2157 = vlaneseq
  %v2158 = vshrl.u32 %v2157, 7
  %v2159 = vsub.s32 0, %v2158
  %v2160 = vrot.slane %v1958, %v2159
  %2161 = vrot.lane.b32.xlu0 %v2132, 64
  %v2162 = vpop.permute.xlu0 %2161
  %2163 = vrot.lane.b32.xlu0 %v2136, 64
  %v2164 = vpop.permute.xlu0 %2163
  %2165 = vrot.lane.b32.xlu0 %v2140, 64
  %v2166 = vpop.permute.xlu0 %2165
  %2167 = vrot.lane.b32.xlu0 %v2144, 64
  %v2168 = vpop.permute.xlu0 %2167
  %2169 = vrot.lane.b32.xlu0 %v2148, 64
  %v2170 = vpop.permute.xlu0 %2169
  %2171 = vrot.lane.b32.xlu0 %v2152, 64
  %v2172 = vpop.permute.xlu0 %2171
  %2173 = vrot.lane.b32.xlu0 %v2156, 64
  %v2174 = vpop.permute.xlu0 %2173
  %2175 = vrot.lane.b32.xlu0 %v2160, 64
  %v2176 = vpop.permute.xlu0 %2175
  %vm2185 = vcmask 1040384
  %v2186 = vsel %vm2185, %v439, %v2050
  %v2187 = vsel %vm2185, %v970, %v2052
  %v2188 = vsel %vm2185, %v971, %v2054
  %v2189 = vsel %vm2185, %v451, %v2056
  %v2190 = vsel %vm2185, %v440, %v2058
  %v2191 = vsel %vm2185, %v972, %v2060
  %v2192 = vsel %vm2185, %v973, %v2062
  %v2193 = vsel %vm2185, %v452, %v2064
  %vm2194 = vcmask 1041408
  %v2195 = vsel %vm2194, %v2186, %v2106
  %v2196 = vsel %vm2194, %v2187, %v2108
  %v2197 = vsel %vm2194, %v2188, %v2110
  %v2198 = vsel %vm2194, %v2189, %v2112
  %v2199 = vsel %vm2194, %v2190, %v2114
  %v2200 = vsel %vm2194, %v2191, %v2116
  %v2201 = vsel %vm2194, %v2192, %v2118
  %v2202 = vsel %vm2194, %v2193, %v2120
  %vm2203 = vcmask 1042432
  %v2204 = vsel %vm2203, %v2195, %v2162
  %v2205 = vsel %vm2203, %v2196, %v2164
  %v2206 = vsel %vm2203, %v2197, %v2166
  %v2207 = vsel %vm2203, %v2198, %v2168
  %v2208 = vsel %vm2203, %v2199, %v2170
  %v2209 = vsel %vm2203, %v2200, %v2172
  %v2210 = vsel %vm2203, %v2201, %v2174
  %v2211 = vsel %vm2203, %v2202, %v2176
  %v2212 = vlaneseq
  %v2213 = vshrl.u32 %v2212, 7
  %v2214 = vsub.s32 0, %v2213
  %v2215 = vrot.slane %v1676, %v2214
  %v2216 = vlaneseq
  %v2217 = vshrl.u32 %v2216, 7
  %v2218 = vsub.s32 0, %v2217
  %v2219 = vrot.slane %v1690, %v2218
  %v2220 = vlaneseq
  %v2221 = vshrl.u32 %v2220, 7
  %v2222 = vsub.s32 0, %v2221
  %v2223 = vrot.slane %v1698, %v2222
  %v2224 = vlaneseq
  %v2225 = vshrl.u32 %v2224, 7
  %v2226 = vsub.s32 0, %v2225
  %v2227 = vrot.slane %v1700, %v2226
  %v2228 = vlaneseq
  %v2229 = vshrl.u32 %v2228, 7
  %v2230 = vsub.s32 0, %v2229
  %v2231 = vrot.slane %v1683, %v2230
  %v2232 = vlaneseq
  %v2233 = vshrl.u32 %v2232, 7
  %v2234 = vsub.s32 0, %v2233
  %v2235 = vrot.slane %v1697, %v2234
  %v2236 = vlaneseq
  %v2237 = vshrl.u32 %v2236, 7
  %v2238 = vsub.s32 0, %v2237
  %v2239 = vrot.slane %v1699, %v2238
  %v2240 = vlaneseq
  %v2241 = vshrl.u32 %v2240, 7
  %v2242 = vsub.s32 0, %v2241
  %v2243 = vrot.slane %v1701, %v2242
  %v2252 = vlaneseq
  %v2253 = vshrl.u32 %v2252, 7
  %v2254 = vsub.s32 0, %v2253
  %v2255 = vrot.slane %v1446, %v2254
  %v2256 = vlaneseq
  %v2257 = vshrl.u32 %v2256, 7
  %v2258 = vsub.s32 0, %v2257
  %v2259 = vrot.slane %v1460, %v2258
  %v2260 = vlaneseq
  %v2261 = vshrl.u32 %v2260, 7
  %v2262 = vsub.s32 0, %v2261
  %v2263 = vrot.slane %v1468, %v2262
  %v2264 = vlaneseq
  %v2265 = vshrl.u32 %v2264, 7
  %v2266 = vsub.s32 0, %v2265
  %v2267 = vrot.slane %v1470, %v2266
  %v2268 = vlaneseq
  %v2269 = vshrl.u32 %v2268, 7
  %v2270 = vsub.s32 0, %v2269
  %v2271 = vrot.slane %v1453, %v2270
  %v2272 = vlaneseq
  %v2273 = vshrl.u32 %v2272, 7
  %v2274 = vsub.s32 0, %v2273
  %v2275 = vrot.slane %v1467, %v2274
  %v2276 = vlaneseq
  %v2277 = vshrl.u32 %v2276, 7
  %v2278 = vsub.s32 0, %v2277
  %v2279 = vrot.slane %v1469, %v2278
  %v2280 = vlaneseq
  %v2281 = vshrl.u32 %v2280, 7
  %v2282 = vsub.s32 0, %v2281
  %v2283 = vrot.slane %v1471, %v2282
  %2292 = vrot.lane.b32.xlu0 %v1030, 64
  %v2293 = vpop.permute.xlu0 %2292
  %2294 = vrot.lane.b32.xlu0 %v1034, 64
  %v2295 = vpop.permute.xlu0 %2294
  %2296 = vrot.lane.b32.xlu0 %v1038, 64
  %v2297 = vpop.permute.xlu0 %2296
  %2298 = vrot.lane.b32.xlu0 %v1042, 64
  %v2299 = vpop.permute.xlu0 %2298
  %2300 = vrot.lane.b32.xlu0 %v1046, 64
  %v2301 = vpop.permute.xlu0 %2300
  %2302 = vrot.lane.b32.xlu0 %v1050, 64
  %v2303 = vpop.permute.xlu0 %2302
  %2304 = vrot.lane.b32.xlu0 %v1054, 64
  %v2305 = vpop.permute.xlu0 %2304
  %2306 = vrot.lane.b32.xlu0 %v1058, 64
  %v2307 = vpop.permute.xlu0 %2306
  %v2316 = vsel %vm2185, %v1983, %v2215
  %v2317 = vsel %vm2185, %v1997, %v2219
  %v2318 = vsel %vm2185, %v2005, %v2223
  %v2319 = vsel %vm2185, %v2007, %v2227
  %v2320 = vsel %vm2185, %v1990, %v2231
  %v2321 = vsel %vm2185, %v2004, %v2235
  %v2322 = vsel %vm2185, %v2006, %v2239
  %v2323 = vsel %vm2185, %v2008, %v2243
  %v2324 = vsel %vm2194, %v2316, %v2255
  %v2325 = vsel %vm2194, %v2317, %v2259
  %v2326 = vsel %vm2194, %v2318, %v2263
  %v2327 = vsel %vm2194, %v2319, %v2267
  %v2328 = vsel %vm2194, %v2320, %v2271
  %v2329 = vsel %vm2194, %v2321, %v2275
  %v2330 = vsel %vm2194, %v2322, %v2279
  %v2331 = vsel %vm2194, %v2323, %v2283
  %v2332 = vsel %vm2203, %v2324, %v2293
  %v2333 = vsel %vm2203, %v2325, %v2295
  %v2334 = vsel %vm2203, %v2326, %v2297
  %v2335 = vsel %vm2203, %v2327, %v2299
  %v2336 = vsel %vm2203, %v2328, %v2301
  %v2337 = vsel %vm2203, %v2329, %v2303
  %v2338 = vsel %vm2203, %v2330, %v2305
  %v2339 = vsel %vm2203, %v2331, %v2307
  %2340 = vrot.lane.b32.xlu0 %v439, 112
  %v2341 = vpop.permute.xlu0 %2340
  %2342 = vrot.lane.b32.xlu0 %v867, 112
  %v2343 = vpop.permute.xlu0 %2342
  %2344 = vrot.lane.b32.xlu0 %v440, 112
  %v2345 = vpop.permute.xlu0 %2344
  %2346 = vrot.lane.b32.xlu0 %v611, 112
  %v2347 = vpop.permute.xlu0 %2346
  %2348 = vrot.lane.b32.xlu0 %v745, 112
  %v2349 = vpop.permute.xlu0 %2348
  %2350 = vrot.lane.b32.xlu0 %v875, 112
  %v2351 = vpop.permute.xlu0 %2350
  %2358 = vrot.lane.b32.xlu0 %v873, 88
  %v2359 = vpop.permute.xlu0 %2358
  %2360 = vrot.lane.b32.xlu0 %v451, 88
  %v2361 = vpop.permute.xlu0 %2360
  %2362 = vrot.lane.b32.xlu0 %v877, 88
  %v2363 = vpop.permute.xlu0 %2362
  %2364 = vrot.lane.b32.xlu0 %v746, 88
  %v2365 = vpop.permute.xlu0 %2364
  %2366 = vrot.lane.b32.xlu0 %v612, 88
  %v2367 = vpop.permute.xlu0 %2366
  %2368 = vrot.lane.b32.xlu0 %v452, 88
  %v2369 = vpop.permute.xlu0 %2368
  %2384 = vrot.lane.b32.xlu0 %v2204, 64
  %v2385 = vpop.permute.xlu0 %2384
  %2386 = vrot.lane.b32.xlu0 %v2205, 64
  %v2387 = vpop.permute.xlu0 %2386
  %2388 = vrot.lane.b32.xlu0 %v2206, 64
  %v2389 = vpop.permute.xlu0 %2388
  %2390 = vrot.lane.b32.xlu0 %v2207, 64
  %v2391 = vpop.permute.xlu0 %2390
  %2392 = vrot.lane.b32.xlu0 %v2208, 64
  %v2393 = vpop.permute.xlu0 %2392
  %2394 = vrot.lane.b32.xlu0 %v2209, 64
  %v2395 = vpop.permute.xlu0 %2394
  %2396 = vrot.lane.b32.xlu0 %v2210, 64
  %v2397 = vpop.permute.xlu0 %2396
  %2398 = vrot.lane.b32.xlu0 %v2211, 64
  %v2399 = vpop.permute.xlu0 %2398
  %2416 = vrot.lane.b32.xlu0 %v2332, 104
  %v2417 = vpop.permute.xlu0 %2416
  %2418 = vrot.lane.b32.xlu0 %v2333, 104
  %v2419 = vpop.permute.xlu0 %2418
  %2420 = vrot.lane.b32.xlu0 %v2334, 104
  %v2421 = vpop.permute.xlu0 %2420
  %2422 = vrot.lane.b32.xlu0 %v2335, 104
  %v2423 = vpop.permute.xlu0 %2422
  %2424 = vrot.lane.b32.xlu0 %v2336, 104
  %v2425 = vpop.permute.xlu0 %2424
  %2426 = vrot.lane.b32.xlu0 %v2337, 104
  %v2427 = vpop.permute.xlu0 %2426
  %2428 = vrot.lane.b32.xlu0 %v2338, 104
  %v2429 = vpop.permute.xlu0 %2428
  %2430 = vrot.lane.b32.xlu0 %v2339, 104
  %v2431 = vpop.permute.xlu0 %2430
  %v2440 = vsel %vm465, %v2341, %v2359
  %v2441 = vsel %vm465, %v604, %v742
  %v2442 = vsel %vm465, %v738, %v608
  %v2443 = vsel %vm465, %v2343, %v2361
  %v2444 = vsel %vm465, %v2345, %v2363
  %v2445 = vsel %vm465, %v2347, %v2365
  %v2446 = vsel %vm465, %v2349, %v2367
  %v2447 = vsel %vm465, %v2351, %v2369
  %v2448 = vsel %vm164, %v2440, %v2385
  %v2449 = vsel %vm164, %v2441, %v2387
  %v2450 = vsel %vm164, %v2442, %v2389
  %v2451 = vsel %vm164, %v2443, %v2391
  %v2452 = vsel %vm164, %v2444, %v2393
  %v2453 = vsel %vm164, %v2445, %v2395
  %v2454 = vsel %vm164, %v2446, %v2397
  %v2455 = vsel %vm164, %v2447, %v2399
  %vm2456 = vcmask 195584
  %v2457 = vsel %vm2456, %v2448, %v2417
  %v2458 = vsel %vm2456, %v2449, %v2419
  %v2459 = vsel %vm2456, %v2450, %v2421
  %v2460 = vsel %vm2456, %v2451, %v2423
  %v2461 = vsel %vm2456, %v2452, %v2425
  %v2462 = vsel %vm2456, %v2453, %v2427
  %v2463 = vsel %vm2456, %v2454, %v2429
  %v2464 = vsel %vm2456, %v2455, %v2431
  %v2465 = vld [vmem:[%s7] sm:$0xff]
  %v2466 = vld [vmem:[%s7 + $0x8] sm:$0xff]
  %v2467 = vld [vmem:[%s7 + $0x10] sm:$0xff]
  %v2468 = vld [vmem:[%s7 + $0x18] sm:$0xff]
  %v2469 = vld [vmem:[%s8] sm:$0x1]
  %v2471 = vlaneseq
  %v2472 = vshrl.u32 %v2471, 7
  %v2473 = vsub.s32 0, %v2472
  %v2474 = vrot.slane %v2469, %v2473
  %v2484 = vcombine.low %v2457, %v2458
  %v2485 = vcombine.low %v2459, %v2460
  %v2486 = vcombine.low %v2461, %v2462
  %v2487 = vcombine.low %v2463, %v2464
  %vm2488 = vcmask 261120
  %v2489 = vsel %vm2488, %v2484, 0
  %v2491 = vsel %vm2488, %v2485, 0
  %v2493 = vsel %vm2488, %v2486, 0
  %v2495 = vsel %vm2488, %v2487, 0
  %2497 = vmatprep.subr.mxu0 0.0
  %2498 = vmatpush1.msra.mxu0 %v2465
  %2499 = vmatprep.subr.mxu0 0.0
  %2500 = vmatpush1.msra.mxu0 %v2466
  %2501 = vmatprep.subr.mxu0 0.0
  %2502 = vmatpush1.msra.mxu0 %v2467
  %2503 = vmatprep.subr.mxu0 0.0
  %2504 = vmatpush1.msra.mxu0 %v2468
  %2505 = vmatprep.subr.mxu0 0.0
  %2506 = vmatpush1.msra.mxu0 0.0
  %2507 = vmatprep.subr.mxu0 0.0
  %2508 = vmatpush1.msra.mxu0 0.0
  %2509 = vmatprep.subr.mxu0 0.0
  %2510 = vmatpush1.msra.mxu0 0.0
  %2511 = vmatprep.subr.mxu0 0.0
  %2512 = vmatpush1.msra.mxu0 0.0
  %2513 = vmatprep.subr.mxu0 0.0
  %2514 = vmatpush1.msra.mxu0 0.0
  %2515 = vmatprep.subr.mxu0 0.0
  %2516 = vmatpush1.msra.mxu0 0.0
  %2517 = vmatprep.subr.mxu0 0.0
  %2518 = vmatpush1.msra.mxu0 0.0
  %2519 = vmatprep.subr.mxu0 0.0
  %2520 = vmatpush1.msra.mxu0 0.0
  %2521 = vmatprep.subr.mxu0 0.0
  %2522 = vmatpush1.msra.mxu0 0.0
  %2523 = vmatprep.subr.mxu0 0.0
  %2524 = vmatpush1.msra.mxu0 0.0
  %2525 = vmatprep.subr.mxu0 0.0
  %2526 = vmatpush1.msra.mxu0 0.0
  %2527 = vmatprep.subr.mxu0 0.0
  %2528 = vmatpush1.msra.mxu0 0.0
  %2529 = vmatprep.subr.mxu0 0.0
  %2530 = vmatpush1.msra.mxu0 0.0
  %2531 = vmatprep.subr.mxu0 0.0
  %2532 = vmatpush1.msra.mxu0 0.0
  %2533 = vmatprep.subr.mxu0 0.0
  %2534 = vmatpush1.msra.mxu0 0.0
  %2535 = vmatprep.subr.mxu0 0.0
  %2536 = vmatpush1.msra.mxu0 0.0
  %2537 = vmatprep.subr.mxu0 0.0
  %2538 = vmatpush1.msra.mxu0 0.0
  %2539 = vmatprep.subr.mxu0 0.0
  %2540 = vmatpush1.msra.mxu0 0.0
  %2541 = vmatprep.subr.mxu0 0.0
  %2542 = vmatpush1.msra.mxu0 0.0
  %2543 = vmatprep.subr.mxu0 0.0
  %2544 = vmatpush1.msra.mxu0 0.0
  %2545 = vmatprep.subr.mxu0 0.0
  %2546 = vmatpush1.msra.mxu0 0.0
  %2547 = vmatprep.subr.mxu0 0.0
  %2548 = vmatpush1.msra.mxu0 0.0
  %2549 = vmatprep.subr.mxu0 0.0
  %2550 = vmatpush1.msra.mxu0 0.0
  %2551 = vmatprep.subr.mxu0 0.0
  %2552 = vmatpush1.msra.mxu0 0.0
  %2553 = vmatprep.subr.mxu0 0.0
  %2554 = vmatpush1.msra.mxu0 0.0
  %2555 = vmatprep.subr.mxu0 0.0
  %2556 = vmatpush1.msra.mxu0 0.0
  %2557 = vmatprep.subr.mxu0 0.0
  %2558 = vmatpush1.msra.mxu0 0.0
  %2559 = vmatprep.subr.mxu0 0.0
  %2560 = vmatpush1.msra.mxu0 0.0
  %2561 = vmatprep.mubr.f32.mxu0 0.0
  %2562 = vmatmul.mubr.f32.gmra.mrb[0].mxu0 %v2489
  %v2563 = vpop.f32.mrb[0].mxu0
  %v2564 = vadd.f32 %v2474, %v2563
  %v2565 = vpop.f32.mrb[0].mxu0
  %2566 = vmatprep.mubr.f32.mxu0 0.0
  %2567 = vmatmul.mubr.f32.gmra.mrb[0].mxu0 %v2491
  %v2568 = vpop.f32.mrb[0].mxu0
  %v2569 = vadd.f32 %v2474, %v2568
  %v2570 = vpop.f32.mrb[0].mxu0
  %2571 = vmatprep.mubr.f32.mxu0 0.0
  %2572 = vmatmul.mubr.f32.gmra.mrb[0].mxu0 %v2493
  %v2573 = vpop.f32.mrb[0].mxu0
  %v2574 = vadd.f32 %v2474, %v2573
  %v2575 = vpop.f32.mrb[0].mxu0
  %2576 = vmatprep.mubr.f32.mxu0 0.0
  %2577 = vmatmul.mubr.f32.gmra.mrb[0].mxu0 %v2495
  %v2578 = vpop.f32.mrb[0].mxu0
  %v2579 = vadd.f32 %v2474, %v2578
  %v2580 = vpop.f32.mrb[0].mxu0
  %2581 = vdwg.mxu0
  %v2582 = vadd.f32 %v144, %v2564
  %v2583 = vadd.f32 %v149, %v2569
  %v2584 = vadd.f32 %v154, %v2574
  %v2585 = vadd.f32 %v159, %v2579
  %v2586 = vld [vmem:[%s9] sm:$0x1]
  %v2587 = vld [vmem:[%s9 + $0x1] sm:$0x1]
  %v2588 = vsel %vm164, %v2582, 0.0
  %2589 = vadd.xlane.f32.xlu0 %v2588
  %v2590 = vpop.xlane.xlu0 %2589
  %v2591 = vsel %vm164, %v2583, 0.0
  %2592 = vadd.xlane.f32.xlu0 %v2591
  %v2593 = vpop.xlane.xlu0 %2592
  %v2594 = vsel %vm164, %v2584, 0.0
  %2595 = vadd.xlane.f32.xlu0 %v2594
  %v2596 = vpop.xlane.xlu0 %2595
  %v2597 = vsel %vm164, %v2585, 0.0
  %2598 = vadd.xlane.f32.xlu0 %v2597
  %v2599 = vpop.xlane.xlu0 %2598
  %v2600 = vmul.f32 %v2590, %v177
  %v2601 = vmul.f32 %v2593, %v177
  %v2602 = vmul.f32 %v2596, %v177
  %v2603 = vmul.f32 %v2599, %v177
  %v2604 = vsub.f32 %v2582, %v2600
  %v2605 = vsub.f32 %v2583, %v2601
  %v2606 = vsub.f32 %v2584, %v2602
  %v2607 = vsub.f32 %v2585, %v2603
  %v2608 = vmul.f32 %v2604, %v2604
  %v2609 = vmul.f32 %v2605, %v2605
  %v2610 = vmul.f32 %v2606, %v2606
  %v2611 = vmul.f32 %v2607, %v2607
  %v2612 = vsel %vm164, %v2608, 0.0
  %2613 = vadd.xlane.f32.xlu0 %v2612
  %v2614 = vpop.xlane.xlu0 %2613
  %v2615 = vsel %vm164, %v2609, 0.0
  %2616 = vadd.xlane.f32.xlu0 %v2615
  %v2617 = vpop.xlane.xlu0 %2616
  %v2618 = vsel %vm164, %v2610, 0.0
  %2619 = vadd.xlane.f32.xlu0 %v2618
  %v2620 = vpop.xlane.xlu0 %2619
  %v2621 = vsel %vm164, %v2611, 0.0
  %2622 = vadd.xlane.f32.xlu0 %v2621
  %v2623 = vpop.xlane.xlu0 %2622
  %v2624 = vmul.f32 %v2614, %v177
  %v2625 = vmul.f32 %v2617, %v177
  %v2626 = vmul.f32 %v2620, %v177
  %v2627 = vmul.f32 %v2623, %v177
  %v2628 = vadd.f32 %v2624, 1e-06
  %v2629 = vadd.f32 %v2625, 1e-06
  %v2630 = vadd.f32 %v2626, 1e-06
  %v2631 = vadd.f32 %v2627, 1e-06
  %v2632 = vrsqrt.pop %v2628
  %v2633 = vrsqrt.pop %v2629
  %v2634 = vrsqrt.pop %v2630
  %v2635 = vrsqrt.pop %v2631
  %v2636 = vmul.f32 %v2604, %v2632
  %v2637 = vmul.f32 %v2605, %v2633
  %v2638 = vmul.f32 %v2606, %v2634
  %v2639 = vmul.f32 %v2607, %v2635
  %v2640 = vlaneseq
  %v2641 = vshrl.u32 %v2640, 7
  %v2642 = vsub.s32 0, %v2641
  %v2643 = vrot.slane %v2586, %v2642
  %v2644 = vmul.f32 %v2636, %v2643
  %v2645 = vmul.f32 %v2637, %v2643
  %v2646 = vmul.f32 %v2638, %v2643
  %v2647 = vmul.f32 %v2639, %v2643
  %v2648 = vlaneseq
  %v2649 = vshrl.u32 %v2648, 7
  %v2650 = vsub.s32 0, %v2649
  %v2651 = vrot.slane %v2587, %v2650
  %v2652 = vadd.f32 %v2644, %v2651
  %v2653 = vadd.f32 %v2645, %v2651
  %v2654 = vadd.f32 %v2646, %v2651
  %v2655 = vadd.f32 %v2647, %v2651
  %v2656 = vld [vmem:[%s10] sm:$0xff]
  %v2657 = vld [vmem:[%s10 + $0x8] sm:$0xff]
  %v2658 = vld [vmem:[%s11] sm:$0x1]
  %v2660 = vlaneseq
  %v2661 = vshrl.u32 %v2660, 7
  %v2662 = vsub.s32 0, %v2661
  %v2663 = vrot.slane %v2658, %v2662
  %v2666 = vsel %vm164, %v2652, 0
  %v2669 = vsel %vm164, %v2653, 0
  %v2672 = vsel %vm164, %v2654, 0
  %v2675 = vsel %vm164, %v2655, 0
  %2677 = vmatprep.subr.mxu0 0.0
  %2678 = vmatpush1.msra.mxu0 %v2656
  %2679 = vmatprep.subr.mxu0 0.0
  %2680 = vmatpush1.msra.mxu0 %v2657
  %2681 = vmatprep.subr.mxu0 0.0
  %2682 = vmatpush1.msra.mxu0 0.0
  %2683 = vmatprep.subr.mxu0 0.0
  %2684 = vmatpush1.msra.mxu0 0.0
  %2685 = vmatprep.subr.mxu0 0.0
  %2686 = vmatpush1.msra.mxu0 0.0
  %2687 = vmatprep.subr.mxu0 0.0
  %2688 = vmatpush1.msra.mxu0 0.0
  %2689 = vmatprep.subr.mxu0 0.0
  %2690 = vmatpush1.msra.mxu0 0.0
  %2691 = vmatprep.subr.mxu0 0.0
  %2692 = vmatpush1.msra.mxu0 0.0
  %2693 = vmatprep.subr.mxu0 0.0
  %2694 = vmatpush1.msra.mxu0 0.0
  %2695 = vmatprep.subr.mxu0 0.0
  %2696 = vmatpush1.msra.mxu0 0.0
  %2697 = vmatprep.subr.mxu0 0.0
  %2698 = vmatpush1.msra.mxu0 0.0
  %2699 = vmatprep.subr.mxu0 0.0
  %2700 = vmatpush1.msra.mxu0 0.0
  %2701 = vmatprep.subr.mxu0 0.0
  %2702 = vmatpush1.msra.mxu0 0.0
  %2703 = vmatprep.subr.mxu0 0.0
  %2704 = vmatpush1.msra.mxu0 0.0
  %2705 = vmatprep.subr.mxu0 0.0
  %2706 = vmatpush1.msra.mxu0 0.0
  %2707 = vmatprep.subr.mxu0 0.0
  %2708 = vmatpush1.msra.mxu0 0.0
  %2709 = vmatprep.subr.mxu0 0.0
  %2710 = vmatpush1.msra.mxu0 0.0
  %2711 = vmatprep.subr.mxu0 0.0
  %2712 = vmatpush1.msra.mxu0 0.0
  %2713 = vmatprep.subr.mxu0 0.0
  %2714 = vmatpush1.msra.mxu0 0.0
  %2715 = vmatprep.subr.mxu0 0.0
  %2716 = vmatpush1.msra.mxu0 0.0
  %2717 = vmatprep.subr.mxu0 0.0
  %2718 = vmatpush1.msra.mxu0 0.0
  %2719 = vmatprep.subr.mxu0 0.0
  %2720 = vmatpush1.msra.mxu0 0.0
  %2721 = vmatprep.subr.mxu0 0.0
  %2722 = vmatpush1.msra.mxu0 0.0
  %2723 = vmatprep.subr.mxu0 0.0
  %2724 = vmatpush1.msra.mxu0 0.0
  %2725 = vmatprep.subr.mxu0 0.0
  %2726 = vmatpush1.msra.mxu0 0.0
  %2727 = vmatprep.subr.mxu0 0.0
  %2728 = vmatpush1.msra.mxu0 0.0
  %2729 = vmatprep.subr.mxu0 0.0
  %2730 = vmatpush1.msra.mxu0 0.0
  %2731 = vmatprep.subr.mxu0 0.0
  %2732 = vmatpush1.msra.mxu0 0.0
  %2733 = vmatprep.subr.mxu0 0.0
  %2734 = vmatpush1.msra.mxu0 0.0
  %2735 = vmatprep.subr.mxu0 0.0
  %2736 = vmatpush1.msra.mxu0 0.0
  %2737 = vmatprep.subr.mxu0 0.0
  %2738 = vmatpush1.msra.mxu0 0.0
  %2739 = vmatprep.subr.mxu0 0.0
  %2740 = vmatpush1.msra.mxu0 0.0
  %2741 = vmatprep.mubr.f32.mxu0 0.0
  %2742 = vmatmul.mubr.f32.gmra.mrb[0].mxu0 %v2666
  %v2743 = vpop.f32.mrb[0].mxu0
  %v2744 = vadd.f32 %v2663, %v2743
  %v2745 = vpop.f32.mrb[0].mxu0
  %2746 = vmatprep.mubr.f32.mxu0 0.0
  %2747 = vmatmul.mubr.f32.gmra.mrb[0].mxu0 %v2669
  %v2748 = vpop.f32.mrb[0].mxu0
  %v2749 = vadd.f32 %v2663, %v2748
  %v2750 = vpop.f32.mrb[0].mxu0
  %2751 = vmatprep.mubr.f32.mxu0 0.0
  %2752 = vmatmul.mubr.f32.gmra.mrb[0].mxu0 %v2672
  %v2753 = vpop.f32.mrb[0].mxu0
  %v2754 = vadd.f32 %v2663, %v2753
  %v2755 = vpop.f32.mrb[0].mxu0
  %2756 = vmatprep.mubr.f32.mxu0 0.0
  %2757 = vmatmul.mubr.f32.gmra.mrb[0].mxu0 %v2675
  %v2758 = vpop.f32.mrb[0].mxu0
  %v2759 = vadd.f32 %v2663, %v2758
  %v2760 = vpop.f32.mrb[0].mxu0
  %2761 = vdwg.mxu0
  %v2762 = vmul.f32 %v2744, %v2744
  %v2763 = vmul.f32 %v2749, %v2749
  %v2764 = vmul.f32 %v2754, %v2754
  %v2765 = vmul.f32 %v2759, %v2759
  %v2766 = vmul.f32 %v2744, %v2762
  %v2767 = vmul.f32 %v2749, %v2763
  %v2768 = vmul.f32 %v2754, %v2764
  %v2769 = vmul.f32 %v2759, %v2765
  %v2770 = vmul.f32 %v2766, 0.044715
  %v2771 = vmul.f32 %v2767, 0.044715
  %v2772 = vmul.f32 %v2768, 0.044715
  %v2773 = vmul.f32 %v2769, 0.044715
  %v2774 = vadd.f32 %v2744, %v2770
  %v2775 = vadd.f32 %v2749, %v2771
  %v2776 = vadd.f32 %v2754, %v2772
  %v2777 = vadd.f32 %v2759, %v2773
  %v2778 = vmul.f32 %v2774, 0.7978846
  %v2779 = vmul.f32 %v2775, 0.7978846
  %v2780 = vmul.f32 %v2776, 0.7978846
  %v2781 = vmul.f32 %v2777, 0.7978846
  %v2782 = vtanh.pop %v2778
  %v2783 = vtanh.pop %v2779
  %v2784 = vtanh.pop %v2780
  %v2785 = vtanh.pop %v2781
  %v2786 = vadd.f32 %v2782, 1.0
  %v2787 = vadd.f32 %v2783, 1.0
  %v2788 = vadd.f32 %v2784, 1.0
  %v2789 = vadd.f32 %v2785, 1.0
  %v2790 = vmul.f32 %v2786, 0.5
  %v2791 = vmul.f32 %v2787, 0.5
  %v2792 = vmul.f32 %v2788, 0.5
  %v2793 = vmul.f32 %v2789, 0.5
  %v2794 = vmul.f32 %v2744, %v2790
  %v2795 = vmul.f32 %v2749, %v2791
  %v2796 = vmul.f32 %v2754, %v2792
  %v2797 = vmul.f32 %v2759, %v2793
  %v2798 = vld [vmem:[%s12] sm:$0xff]
  %v2799 = vld [vmem:[%s12 + $0x8] sm:$0xff]
  %v2800 = vld [vmem:[%s12 + $0x10] sm:$0xff]
  %v2801 = vld [vmem:[%s12 + $0x18] sm:$0xff]
  %v2802 = vld [vmem:[%s12 + $0x20] sm:$0xff]
  %v2803 = vld [vmem:[%s12 + $0x28] sm:$0xff]
  %v2804 = vld [vmem:[%s13] sm:$0x1]
  %v2806 = vlaneseq
  %v2807 = vshrl.u32 %v2806, 7
  %v2808 = vsub.s32 0, %v2807
  %v2809 = vrot.slane %v2804, %v2808
  %v2812 = vsel %vm64, %v2794, 0
  %v2815 = vsel %vm64, %v2795, 0
  %v2818 = vsel %vm64, %v2796, 0
  %v2821 = vsel %vm64, %v2797, 0
  %2823 = vmatprep.subr.mxu0 0.0
  %2824 = vmatpush1.msra.mxu0 %v2798
  %2825 = vmatprep.subr.mxu0 0.0
  %2826 = vmatpush1.msra.mxu0 %v2799
  %2827 = vmatprep.subr.mxu0 0.0
  %2828 = vmatpush1.msra.mxu0 %v2800
  %2829 = vmatprep.subr.mxu0 0.0
  %2830 = vmatpush1.msra.mxu0 %v2801
  %2831 = vmatprep.subr.mxu0 0.0
  %2832 = vmatpush1.msra.mxu0 %v2802
  %2833 = vmatprep.subr.mxu0 0.0
  %2834 = vmatpush1.msra.mxu0 %v2803
  %2835 = vmatprep.subr.mxu0 0.0
  %2836 = vmatpush1.msra.mxu0 0.0
  %2837 = vmatprep.subr.mxu0 0.0
  %2838 = vmatpush1.msra.mxu0 0.0
  %2839 = vmatprep.subr.mxu0 0.0
  %2840 = vmatpush1.msra.mxu0 0.0
  %2841 = vmatprep.subr.mxu0 0.0
  %2842 = vmatpush1.msra.mxu0 0.0
  %2843 = vmatprep.subr.mxu0 0.0
  %2844 = vmatpush1.msra.mxu0 0.0
  %2845 = vmatprep.subr.mxu0 0.0
  %2846 = vmatpush1.msra.mxu0 0.0
  %2847 = vmatprep.subr.mxu0 0.0
  %2848 = vmatpush1.msra.mxu0 0.0
  %2849 = vmatprep.subr.mxu0 0.0
  %2850 = vmatpush1.msra.mxu0 0.0
  %2851 = vmatprep.subr.mxu0 0.0
  %2852 = vmatpush1.msra.mxu0 0.0
  %2853 = vmatprep.subr.mxu0 0.0
  %2854 = vmatpush1.msra.mxu0 0.0
  %2855 = vmatprep.subr.mxu0 0.0
  %2856 = vmatpush1.msra.mxu0 0.0
  %2857 = vmatprep.subr.mxu0 0.0
  %2858 = vmatpush1.msra.mxu0 0.0
  %2859 = vmatprep.subr.mxu0 0.0
  %2860 = vmatpush1.msra.mxu0 0.0
  %2861 = vmatprep.subr.mxu0 0.0
  %2862 = vmatpush1.msra.mxu0 0.0
  %2863 = vmatprep.subr.mxu0 0.0
  %2864 = vmatpush1.msra.mxu0 0.0
  %2865 = vmatprep.subr.mxu0 0.0
  %2866 = vmatpush1.msra.mxu0 0.0
  %2867 = vmatprep.subr.mxu0 0.0
  %2868 = vmatpush1.msra.mxu0 0.0
  %2869 = vmatprep.subr.mxu0 0.0
  %2870 = vmatpush1.msra.mxu0 0.0
  %2871 = vmatprep.subr.mxu0 0.0
  %2872 = vmatpush1.msra.mxu0 0.0
  %2873 = vmatprep.subr.mxu0 0.0
  %2874 = vmatpush1.msra.mxu0 0.0
  %2875 = vmatprep.subr.mxu0 0.0
  %2876 = vmatpush1.msra.mxu0 0.0
  %2877 = vmatprep.subr.mxu0 0.0
  %2878 = vmatpush1.msra.mxu0 0.0
  %2879 = vmatprep.subr.mxu0 0.0
  %2880 = vmatpush1.msra.mxu0 0.0
  %2881 = vmatprep.subr.mxu0 0.0
  %2882 = vmatpush1.msra.mxu0 0.0
  %2883 = vmatprep.subr.mxu0 0.0
  %2884 = vmatpush1.msra.mxu0 0.0
  %2885 = vmatprep.subr.mxu0 0.0
  %2886 = vmatpush1.msra.mxu0 0.0
  %2887 = vmatprep.mubr.f32.mxu0 0.0
  %2888 = vmatmul.mubr.f32.gmra.mrb[0].mxu0 %v2812
  %v2889 = vpop.f32.mrb[0].mxu0
  %v2890 = vadd.f32 %v2809, %v2889
  %v2891 = vpop.f32.mrb[0].mxu0
  %2892 = vmatprep.mubr.f32.mxu0 0.0
  %2893 = vmatmul.mubr.f32.gmra.mrb[0].mxu0 %v2815
  %v2894 = vpop.f32.mrb[0].mxu0
  %v2895 = vadd.f32 %v2809, %v2894
  %v2896 = vpop.f32.mrb[0].mxu0
  %2897 = vmatprep.mubr.f32.mxu0 0.0
  %2898 = vmatmul.mubr.f32.gmra.mrb[0].mxu0 %v2818
  %v2899 = vpop.f32.mrb[0].mxu0
  %v2900 = vadd.f32 %v2809, %v2899
  %v2901 = vpop.f32.mrb[0].mxu0
  %2902 = vmatprep.mubr.f32.mxu0 0.0
  %2903 = vmatmul.mubr.f32.gmra.mrb[0].mxu0 %v2821
  %v2904 = vpop.f32.mrb[0].mxu0
  %v2905 = vadd.f32 %v2809, %v2904
  %v2906 = vpop.f32.mrb[0].mxu0
  %2907 = vdwg.mxu0
  %v2908 = vadd.f32 %v2582, %v2890
  %v2909 = vadd.f32 %v2583, %v2895
  %v2910 = vadd.f32 %v2584, %v2900
  %v2911 = vadd.f32 %v2585, %v2905
  %2912 = vst.msk [vmem:[%s14] sm:$0xff] %vm164, %v2908
  %2913 = vst.msk [vmem:[%s14 + $0x8] sm:$0xff] %vm164, %v2909
  %2914 = vst.msk [vmem:[%s14 + $0x10] sm:$0xff] %vm164, %v2910
  %2915 = vst.msk [vmem:[%s14 + $0x18] sm:$0xff] %vm164, %v2911
  // Predicated region
  $region58: #{_lambda_.2} parent=0 // pred_check
    _
  $region59: #{_lambda_.2} parent=0 // pred_check_branch
    %2917 = sbr.rel (0) target = $region61
  $region60: #{_lambda_.2} parent=0 // pred_region
    _
  $region61: #{_lambda_.2} parent=0 // pred_fallthru
    _
  // Predicated region
  $region62: #{_lambda_.2} parent=0 // pred_check
    _
  $region63: #{_lambda_.2} parent=0 // pred_check_branch
    %2919 = sbr.rel (0) target = $region65
  $region64: #{_lambda_.2} parent=0 // pred_region
    _
  $region65: #{_lambda_.2} parent=0 // pred_fallthru
    _

</llo_original>
